<compile_context>
chip_gen: v7x
topology: tpu7x:2x2x1
jax: 0.10.0
libtpu: 0.0.40
codegen_flags: <defaults>
</compile_context>

<pallas_src>
import functools
import math

import jax
import jax.numpy as jnp
from jax import lax
from jax.experimental import pallas as pl
from jax.experimental.pallas import tpu as pltpu


# ----------------------------- fused kernel ---------------------------------


def _model_kernel(x_ref, pw_ref, pb_ref,
                  wqkv_ref, bqkv_ref, wo_ref, bo_ref,
                  w1_ref, b1_ref, w2_ref, b2_ref,
                  ln1g_ref, ln1b_ref, ln2g_ref, ln2b_ref,
                  o_ref, *, num_layers, num_heads, batch, slope, eps):
    """Whole model: projection + LeakyReLU + num_layers post-norm encoder layers.

    x_ref: (B*S, in_dim) f32.  Matmul weights bf16; biases / LN params f32.
    Stacked per-layer weights carry a leading (L, ...) axis and are sliced at
    static layer indices (resident in VMEM for the whole call).
    """
    M = x_ref.shape[0]
    D = pw_ref.shape[1]
    S = M // batch
    dh = D // num_heads
    scale = 1.0 / math.sqrt(dh)

    # ---- input projection + LeakyReLU(0.1) ---------------------------------
    y = jnp.dot(x_ref[...].astype(jnp.bfloat16), pw_ref[...],
                preferred_element_type=jnp.float32) + pb_ref[...]
    y = jnp.where(y >= 0.0, y, slope * y)                          # (M, D) f32

    # ---- encoder layers (statically unrolled; weights stay in VMEM) --------
    for l in range(num_layers):
        wqkv = wqkv_ref[l]
        bqkv = bqkv_ref[l]
        wo = wo_ref[l]
        bo = bo_ref[l]
        w1 = w1_ref[l]
        b1 = b1_ref[l]
        w2 = w2_ref[l]
        b2 = b2_ref[l]
        g1 = ln1g_ref[l]
        be1 = ln1b_ref[l]
        g2 = ln2g_ref[l]
        be2 = ln2b_ref[l]

        # fused qkv projection (single MXU matmul, bf16 in / f32 acc)
        qkv = jnp.dot(y.astype(jnp.bfloat16), wqkv,
                      preferred_element_type=jnp.float32) + bqkv   # (M, 3D)
        q = qkv[:, :D] * scale          # fold 1/sqrt(dh) into q once
        k = qkv[:, D:2 * D]
        v = qkv[:, 2 * D:]

        # multi-head self-attention; batch folded into a batched dot per head
        head_outs = []
        for h in range(num_heads):
            sl = slice(h * dh, (h + 1) * dh)
            qh = q[:, sl].reshape(batch, S, dh).astype(jnp.bfloat16)
            kh = k[:, sl].reshape(batch, S, dh).astype(jnp.bfloat16)
            vh = v[:, sl].reshape(batch, S, dh).astype(jnp.bfloat16)
            s = jnp.einsum('bqd,bkd->bqk', qh, kh,
                           preferred_element_type=jnp.float32)     # (B, S, S)
            s = s - jnp.max(s, axis=-1, keepdims=True)
            p = jnp.exp(s)
            p = p / jnp.sum(p, axis=-1, keepdims=True)             # exact softmax
            oh = jnp.einsum('bqk,bkd->bqd', p.astype(jnp.bfloat16), vh,
                            preferred_element_type=jnp.float32)    # (B, S, dh)
            head_outs.append(oh.reshape(M, dh))
        attn = jnp.concatenate(head_outs, axis=-1)                 # (M, D)
        attn = jnp.dot(attn.astype(jnp.bfloat16), wo,
                       preferred_element_type=jnp.float32) + bo

        # residual + LayerNorm1 (post-norm)
        x1 = y + attn
        mu = jnp.mean(x1, axis=-1, keepdims=True)
        var = jnp.mean((x1 - mu) * (x1 - mu), axis=-1, keepdims=True)
        x1 = (x1 - mu) * lax.rsqrt(var + eps) * g1 + be1

        # FFN: relu(x1 @ w1 + b1) @ w2 + b2
        hdn = jnp.dot(x1.astype(jnp.bfloat16), w1,
                      preferred_element_type=jnp.float32) + b1     # (M, FF)
        hdn = jnp.maximum(hdn, 0.0)
        ff = jnp.dot(hdn.astype(jnp.bfloat16), w2,
                     preferred_element_type=jnp.float32) + b2      # (M, D)

        # residual + LayerNorm2
        x2 = x1 + ff
        mu = jnp.mean(x2, axis=-1, keepdims=True)
        var = jnp.mean((x2 - mu) * (x2 - mu), axis=-1, keepdims=True)
        y = (x2 - mu) * lax.rsqrt(var + eps) * g2 + be2

    o_ref[...] = y


# ------------------------------ wrapper --------------------------------------


def my_transformer_encoder(src, params, num_heads):
    """src: (S, B, input_dim) f32 -> (S, B, output_dim) f32 (PyTorch layout)."""
    S, B, in_dim = src.shape
    D = params["proj_w"].shape[1]
    L = params["wqkv"].shape[0]
    M = B * S

    # single layout change to batch-major; the kernel works on (B*S, *) blocks
    x = jnp.transpose(src, (1, 0, 2)).reshape(M, in_dim)

    kernel = functools.partial(_model_kernel, num_layers=L, num_heads=num_heads,
                               batch=B, slope=0.1, eps=1e-5)

    out = pl.pallas_call(
        kernel,
        out_shape=jax.ShapeDtypeStruct((M, D), jnp.float32),
        compiler_params=pltpu.CompilerParams(
            vmem_limit_bytes=32 * 1024 * 1024),
    )(x,
      params["proj_w"], params["proj_b"],
      params["wqkv"], params["bqkv"],
      params["wo"], params["bo"],
      params["w1"], params["b1"],
      params["w2"], params["b2"],
      params["ln1_g"], params["ln1_b"],
      params["ln2_g"], params["ln2_b"])

    return jnp.transpose(out.reshape(B, S, D), (1, 0, 2))  # back to (S, B, D)


# ------------------------------ params ---------------------------------------


def init_params(key, input_dim, output_dim, num_heads, num_layers,
                feedforward_dim):
    """Matmul weights in bf16 (MXU-native); biases / LN params in f32.

    Per-layer tensors are stacked with a leading (L, ...) axis so the whole
    model fits a single pallas_call.
    """
    D, FF, L = output_dim, feedforward_dim, num_layers

    def w_init(k, shape, scale=0.02):
        return (scale * jax.random.normal(k, shape)).astype(jnp.bfloat16)

    def b_init(k, shape, scale=0.02):
        return (scale * jax.random.normal(k, shape)).astype(jnp.float32)

    keys = jax.random.split(key, 8)
    return {
        "proj_w": w_init(keys[0], (input_dim, D)),
        "proj_b": b_init(keys[1], (1, D)),
        "wqkv":   w_init(keys[2], (L, D, 3 * D)),
        "bqkv":   b_init(keys[3], (L, 1, 3 * D)),
        "wo":     w_init(keys[4], (L, D, D)),
        "bo":     b_init(keys[5], (L, 1, D)),
        "w1":     w_init(keys[6], (L, D, FF)),
        "b1":     jnp.zeros((L, 1, FF), jnp.float32),
        "w2":     w_init(keys[7], (L, FF, D)),
        "b2":     jnp.zeros((L, 1, D), jnp.float32),
        "ln1_g":  jnp.ones((L, 1, D), jnp.float32),
        "ln1_b":  jnp.zeros((L, 1, D), jnp.float32),
        "ln2_g":  jnp.ones((L, 1, D), jnp.float32),
        "ln2_b":  jnp.zeros((L, 1, D), jnp.float32),
    }


# ------------------------------- main -----------------------------------------

if __name__ == "__main__":
    S, B = 8, 2
    input_dim, output_dim = 16, 32
    num_heads, num_layers, feedforward_dim = 4, 2, 64

    key = jax.random.PRNGKey(0)
    pkey, xkey = jax.random.split(key)
    params = init_params(pkey, input_dim, output_dim, num_heads, num_layers,
                         feedforward_dim)
    src = jax.random.normal(xkey, (S, B, input_dim), dtype=jnp.float32)

    out = my_transformer_encoder(src, params, num_heads)
    out = jax.block_until_ready(out)
    assert out.shape == (S, B, output_dim), out.shape
    assert bool(jnp.all(jnp.isfinite(out)))
    print("KERNEL_OK")
</pallas_src>

<mosaic_0001>
module attributes {stable_mosaic.version = 11 : i64} {
  func.func @_model_kernel(%arg0: memref<16x16xf32, #tpu.memory_space<vmem>>, %arg1: memref<16x32xbf16, #tpu.memory_space<vmem>>, %arg2: memref<1x32xf32, #tpu.memory_space<vmem>>, %arg3: memref<2x32x96xbf16, #tpu.memory_space<vmem>>, %arg4: memref<2x1x96xf32, #tpu.memory_space<vmem>>, %arg5: memref<2x32x32xbf16, #tpu.memory_space<vmem>>, %arg6: memref<2x1x32xf32, #tpu.memory_space<vmem>>, %arg7: memref<2x32x64xbf16, #tpu.memory_space<vmem>>, %arg8: memref<2x1x64xf32, #tpu.memory_space<vmem>>, %arg9: memref<2x64x32xbf16, #tpu.memory_space<vmem>>, %arg10: memref<2x1x32xf32, #tpu.memory_space<vmem>>, %arg11: memref<2x1x32xf32, #tpu.memory_space<vmem>>, %arg12: memref<2x1x32xf32, #tpu.memory_space<vmem>>, %arg13: memref<2x1x32xf32, #tpu.memory_space<vmem>>, %arg14: memref<2x1x32xf32, #tpu.memory_space<vmem>>, %arg15: memref<16x32xf32, #tpu.memory_space<vmem>>) attributes {dimension_semantics = [], scalar_prefetch = 0 : i64, scratch_operands = 0 : i64, tpu.core_type = #tpu.core_type<tc>} {
    %c0 = arith.constant 0 : index
    %c0_0 = arith.constant 0 : index
    %0 = vector.load %arg0[%c0, %c0_0] : memref<16x16xf32, #tpu.memory_space<vmem>>, vector<16x16xf32>
    %1 = arith.truncf %0 : vector<16x16xf32> to vector<16x16xbf16>
    %c0_1 = arith.constant 0 : index
    %c0_2 = arith.constant 0 : index
    %2 = vector.load %arg1[%c0_1, %c0_2] : memref<16x32xbf16, #tpu.memory_space<vmem>>, vector<16x32xbf16>
    %cst = arith.constant dense<0.000000e+00> : vector<16x32xf32>
    %3 = tpu.matmul %1, %2, %cst {dimension_numbers = #tpu.dot_dimension_numbers<[1], [0], [0], [1], [0, 0, 1, 1], [], []>} : vector<16x16xbf16>, vector<16x32xbf16>, vector<16x32xf32> -> vector<16x32xf32>
    %c0_3 = arith.constant 0 : index
    %c0_4 = arith.constant 0 : index
    %4 = vector.load %arg2[%c0_3, %c0_4] : memref<1x32xf32, #tpu.memory_space<vmem>>, vector<1x32xf32>
    %5 = vector.broadcast %4 : vector<1x32xf32> to vector<16x32xf32>
    %6 = arith.addf %3, %5 : vector<16x32xf32>
    %cst_5 = arith.constant 0.000000e+00 : f32
    %7 = vector.broadcast %cst_5 : f32 to vector<16x32xf32>
    %8 = arith.cmpf oge, %6, %7 : vector<16x32xf32>
    %cst_6 = arith.constant 1.000000e-01 : f32
    %9 = vector.broadcast %cst_6 : f32 to vector<16x32xf32>
    %10 = arith.mulf %9, %6 : vector<16x32xf32>
    %11 = arith.select %8, %6, %10 : vector<16x32xi1>, vector<16x32xf32>
    %c0_7 = arith.constant 0 : index
    %c0_8 = arith.constant 0 : index
    %c0_9 = arith.constant 0 : index
    %12 = vector.load %arg3[%c0_7, %c0_8, %c0_9] : memref<2x32x96xbf16, #tpu.memory_space<vmem>>, vector<1x32x96xbf16>
    %13 = vector.shape_cast %12 : vector<1x32x96xbf16> to vector<32x96xbf16>
    %c0_10 = arith.constant 0 : index
    %c0_11 = arith.constant 0 : index
    %c0_12 = arith.constant 0 : index
    %14 = vector.load %arg4[%c0_10, %c0_11, %c0_12] : memref<2x1x96xf32, #tpu.memory_space<vmem>>, vector<1x1x96xf32>
    %15 = vector.shape_cast %14 : vector<1x1x96xf32> to vector<1x96xf32>
    %c0_13 = arith.constant 0 : index
    %c0_14 = arith.constant 0 : index
    %c0_15 = arith.constant 0 : index
    %16 = vector.load %arg5[%c0_13, %c0_14, %c0_15] : memref<2x32x32xbf16, #tpu.memory_space<vmem>>, vector<1x32x32xbf16>
    %17 = vector.shape_cast %16 : vector<1x32x32xbf16> to vector<32x32xbf16>
    %c0_16 = arith.constant 0 : index
    %c0_17 = arith.constant 0 : index
    %c0_18 = arith.constant 0 : index
    %18 = vector.load %arg6[%c0_16, %c0_17, %c0_18] : memref<2x1x32xf32, #tpu.memory_space<vmem>>, vector<1x1x32xf32>
    %19 = vector.shape_cast %18 : vector<1x1x32xf32> to vector<1x32xf32>
    %c0_19 = arith.constant 0 : index
    %c0_20 = arith.constant 0 : index
    %c0_21 = arith.constant 0 : index
    %20 = vector.load %arg7[%c0_19, %c0_20, %c0_21] : memref<2x32x64xbf16, #tpu.memory_space<vmem>>, vector<1x32x64xbf16>
    %21 = vector.shape_cast %20 : vector<1x32x64xbf16> to vector<32x64xbf16>
    %c0_22 = arith.constant 0 : index
    %c0_23 = arith.constant 0 : index
    %c0_24 = arith.constant 0 : index
    %22 = vector.load %arg8[%c0_22, %c0_23, %c0_24] : memref<2x1x64xf32, #tpu.memory_space<vmem>>, vector<1x1x64xf32>
    %23 = vector.shape_cast %22 : vector<1x1x64xf32> to vector<1x64xf32>
    %c0_25 = arith.constant 0 : index
    %c0_26 = arith.constant 0 : index
    %c0_27 = arith.constant 0 : index
    %24 = vector.load %arg9[%c0_25, %c0_26, %c0_27] : memref<2x64x32xbf16, #tpu.memory_space<vmem>>, vector<1x64x32xbf16>
    %25 = vector.shape_cast %24 : vector<1x64x32xbf16> to vector<64x32xbf16>
    %c0_28 = arith.constant 0 : index
    %c0_29 = arith.constant 0 : index
    %c0_30 = arith.constant 0 : index
    %26 = vector.load %arg10[%c0_28, %c0_29, %c0_30] : memref<2x1x32xf32, #tpu.memory_space<vmem>>, vector<1x1x32xf32>
    %27 = vector.shape_cast %26 : vector<1x1x32xf32> to vector<1x32xf32>
    %c0_31 = arith.constant 0 : index
    %c0_32 = arith.constant 0 : index
    %c0_33 = arith.constant 0 : index
    %28 = vector.load %arg11[%c0_31, %c0_32, %c0_33] : memref<2x1x32xf32, #tpu.memory_space<vmem>>, vector<1x1x32xf32>
    %29 = vector.shape_cast %28 : vector<1x1x32xf32> to vector<1x32xf32>
    %c0_34 = arith.constant 0 : index
    %c0_35 = arith.constant 0 : index
    %c0_36 = arith.constant 0 : index
    %30 = vector.load %arg12[%c0_34, %c0_35, %c0_36] : memref<2x1x32xf32, #tpu.memory_space<vmem>>, vector<1x1x32xf32>
    %31 = vector.shape_cast %30 : vector<1x1x32xf32> to vector<1x32xf32>
    %c0_37 = arith.constant 0 : index
    %c0_38 = arith.constant 0 : index
    %c0_39 = arith.constant 0 : index
    %32 = vector.load %arg13[%c0_37, %c0_38, %c0_39] : memref<2x1x32xf32, #tpu.memory_space<vmem>>, vector<1x1x32xf32>
    %33 = vector.shape_cast %32 : vector<1x1x32xf32> to vector<1x32xf32>
    %c0_40 = arith.constant 0 : index
    %c0_41 = arith.constant 0 : index
    %c0_42 = arith.constant 0 : index
    %34 = vector.load %arg14[%c0_40, %c0_41, %c0_42] : memref<2x1x32xf32, #tpu.memory_space<vmem>>, vector<1x1x32xf32>
    %35 = vector.shape_cast %34 : vector<1x1x32xf32> to vector<1x32xf32>
    %36 = arith.truncf %11 : vector<16x32xf32> to vector<16x32xbf16>
    %cst_43 = arith.constant dense<0.000000e+00> : vector<16x96xf32>
    %37 = tpu.matmul %36, %13, %cst_43 {dimension_numbers = #tpu.dot_dimension_numbers<[1], [0], [0], [1], [0, 0, 1, 1], [], []>} : vector<16x32xbf16>, vector<32x96xbf16>, vector<16x96xf32> -> vector<16x96xf32>
    %38 = vector.broadcast %15 : vector<1x96xf32> to vector<16x96xf32>
    %39 = arith.addf %37, %38 : vector<16x96xf32>
    %40 = vector.extract_strided_slice %39 {offsets = [0, 0], sizes = [16, 32], strides = [1, 1]} : vector<16x96xf32> to vector<16x32xf32>
    %cst_44 = arith.constant 0.353553385 : f32
    %41 = vector.broadcast %cst_44 : f32 to vector<16x32xf32>
    %42 = arith.mulf %40, %41 : vector<16x32xf32>
    %43 = vector.extract_strided_slice %39 {offsets = [0, 32], sizes = [16, 32], strides = [1, 1]} : vector<16x96xf32> to vector<16x32xf32>
    %44 = vector.extract_strided_slice %39 {offsets = [0, 64], sizes = [16, 32], strides = [1, 1]} : vector<16x96xf32> to vector<16x32xf32>
    %45 = vector.extract_strided_slice %42 {offsets = [0, 0], sizes = [16, 8], strides = [1, 1]} : vector<16x32xf32> to vector<16x8xf32>
    %46 = vector.shape_cast %45 : vector<16x8xf32> to vector<2x8x8xf32>
    %47 = arith.truncf %46 : vector<2x8x8xf32> to vector<2x8x8xbf16>
    %48 = vector.extract_strided_slice %43 {offsets = [0, 0], sizes = [16, 8], strides = [1, 1]} : vector<16x32xf32> to vector<16x8xf32>
    %49 = vector.shape_cast %48 : vector<16x8xf32> to vector<2x8x8xf32>
    %50 = arith.truncf %49 : vector<2x8x8xf32> to vector<2x8x8xbf16>
    %51 = vector.extract_strided_slice %44 {offsets = [0, 0], sizes = [16, 8], strides = [1, 1]} : vector<16x32xf32> to vector<16x8xf32>
    %52 = vector.shape_cast %51 : vector<16x8xf32> to vector<2x8x8xf32>
    %53 = arith.truncf %52 : vector<2x8x8xf32> to vector<2x8x8xbf16>
    "tpu.trace_start"() <{level = 10 : i32, message = "bqd,bkd->bqk"}> : () -> ()
    %cst_45 = arith.constant dense<0.000000e+00> : vector<2x8x8xf32>
    %54 = tpu.matmul %47, %50, %cst_45 {dimension_numbers = #tpu.dot_dimension_numbers<[2], [2], [1], [1], [0, 0, 0, 1, 1, 1], [0], [0]>} : vector<2x8x8xbf16>, vector<2x8x8xbf16>, vector<2x8x8xf32> -> vector<2x8x8xf32>
    "tpu.trace_stop"() : () -> ()
    %cst_46 = arith.constant dense<0xFF800000> : vector<2x8xf32>
    %55 = vector.multi_reduction <maximumf>, %54, %cst_46 [2] : vector<2x8x8xf32> to vector<2x8xf32>
    %56 = vector.shape_cast %55 : vector<2x8xf32> to vector<2x8x1xf32>
    %57 = vector.broadcast %56 : vector<2x8x1xf32> to vector<2x8x8xf32>
    %58 = arith.subf %54, %57 : vector<2x8x8xf32>
    %59 = math.exp %58 : vector<2x8x8xf32>
    %cst_47 = arith.constant dense<0.000000e+00> : vector<2x8xf32>
    %60 = vector.multi_reduction <add>, %59, %cst_47 [2] : vector<2x8x8xf32> to vector<2x8xf32>
    %61 = vector.shape_cast %60 : vector<2x8xf32> to vector<2x8x1xf32>
    %62 = vector.broadcast %61 : vector<2x8x1xf32> to vector<2x8x8xf32>
    %63 = arith.divf %59, %62 : vector<2x8x8xf32>
    %64 = arith.truncf %63 : vector<2x8x8xf32> to vector<2x8x8xbf16>
    "tpu.trace_start"() <{level = 10 : i32, message = "bqk,bkd->bqd"}> : () -> ()
    %cst_48 = arith.constant dense<0.000000e+00> : vector<2x8x8xf32>
    %65 = tpu.matmul %64, %53, %cst_48 {dimension_numbers = #tpu.dot_dimension_numbers<[2], [1], [1], [2], [0, 0, 0, 1, 1, 2], [0], [0]>} : vector<2x8x8xbf16>, vector<2x8x8xbf16>, vector<2x8x8xf32> -> vector<2x8x8xf32>
    "tpu.trace_stop"() : () -> ()
    %66 = vector.shape_cast %65 : vector<2x8x8xf32> to vector<16x8xf32>
    %67 = vector.extract_strided_slice %42 {offsets = [0, 8], sizes = [16, 8], strides = [1, 1]} : vector<16x32xf32> to vector<16x8xf32>
    %68 = vector.shape_cast %67 : vector<16x8xf32> to vector<2x8x8xf32>
    %69 = arith.truncf %68 : vector<2x8x8xf32> to vector<2x8x8xbf16>
    %70 = vector.extract_strided_slice %43 {offsets = [0, 8], sizes = [16, 8], strides = [1, 1]} : vector<16x32xf32> to vector<16x8xf32>
    %71 = vector.shape_cast %70 : vector<16x8xf32> to vector<2x8x8xf32>
    %72 = arith.truncf %71 : vector<2x8x8xf32> to vector<2x8x8xbf16>
    %73 = vector.extract_strided_slice %44 {offsets = [0, 8], sizes = [16, 8], strides = [1, 1]} : vector<16x32xf32> to vector<16x8xf32>
    %74 = vector.shape_cast %73 : vector<16x8xf32> to vector<2x8x8xf32>
    %75 = arith.truncf %74 : vector<2x8x8xf32> to vector<2x8x8xbf16>
    "tpu.trace_start"() <{level = 10 : i32, message = "bqd,bkd->bqk"}> : () -> ()
    %cst_49 = arith.constant dense<0.000000e+00> : vector<2x8x8xf32>
    %76 = tpu.matmul %69, %72, %cst_49 {dimension_numbers = #tpu.dot_dimension_numbers<[2], [2], [1], [1], [0, 0, 0, 1, 1, 1], [0], [0]>} : vector<2x8x8xbf16>, vector<2x8x8xbf16>, vector<2x8x8xf32> -> vector<2x8x8xf32>
    "tpu.trace_stop"() : () -> ()
    %cst_50 = arith.constant dense<0xFF800000> : vector<2x8xf32>
    %77 = vector.multi_reduction <maximumf>, %76, %cst_50 [2] : vector<2x8x8xf32> to vector<2x8xf32>
    %78 = vector.shape_cast %77 : vector<2x8xf32> to vector<2x8x1xf32>
    %79 = vector.broadcast %78 : vector<2x8x1xf32> to vector<2x8x8xf32>
    %80 = arith.subf %76, %79 : vector<2x8x8xf32>
    %81 = math.exp %80 : vector<2x8x8xf32>
    %cst_51 = arith.constant dense<0.000000e+00> : vector<2x8xf32>
    %82 = vector.multi_reduction <add>, %81, %cst_51 [2] : vector<2x8x8xf32> to vector<2x8xf32>
    %83 = vector.shape_cast %82 : vector<2x8xf32> to vector<2x8x1xf32>
    %84 = vector.broadcast %83 : vector<2x8x1xf32> to vector<2x8x8xf32>
    %85 = arith.divf %81, %84 : vector<2x8x8xf32>
    %86 = arith.truncf %85 : vector<2x8x8xf32> to vector<2x8x8xbf16>
    "tpu.trace_start"() <{level = 10 : i32, message = "bqk,bkd->bqd"}> : () -> ()
    %cst_52 = arith.constant dense<0.000000e+00> : vector<2x8x8xf32>
    %87 = tpu.matmul %86, %75, %cst_52 {dimension_numbers = #tpu.dot_dimension_numbers<[2], [1], [1], [2], [0, 0, 0, 1, 1, 2], [0], [0]>} : vector<2x8x8xbf16>, vector<2x8x8xbf16>, vector<2x8x8xf32> -> vector<2x8x8xf32>
    "tpu.trace_stop"() : () -> ()
    %88 = vector.shape_cast %87 : vector<2x8x8xf32> to vector<16x8xf32>
    %89 = vector.extract_strided_slice %42 {offsets = [0, 16], sizes = [16, 8], strides = [1, 1]} : vector<16x32xf32> to vector<16x8xf32>
    %90 = vector.shape_cast %89 : vector<16x8xf32> to vector<2x8x8xf32>
    %91 = arith.truncf %90 : vector<2x8x8xf32> to vector<2x8x8xbf16>
    %92 = vector.extract_strided_slice %43 {offsets = [0, 16], sizes = [16, 8], strides = [1, 1]} : vector<16x32xf32> to vector<16x8xf32>
    %93 = vector.shape_cast %92 : vector<16x8xf32> to vector<2x8x8xf32>
    %94 = arith.truncf %93 : vector<2x8x8xf32> to vector<2x8x8xbf16>
    %95 = vector.extract_strided_slice %44 {offsets = [0, 16], sizes = [16, 8], strides = [1, 1]} : vector<16x32xf32> to vector<16x8xf32>
    %96 = vector.shape_cast %95 : vector<16x8xf32> to vector<2x8x8xf32>
    %97 = arith.truncf %96 : vector<2x8x8xf32> to vector<2x8x8xbf16>
    "tpu.trace_start"() <{level = 10 : i32, message = "bqd,bkd->bqk"}> : () -> ()
    %cst_53 = arith.constant dense<0.000000e+00> : vector<2x8x8xf32>
    %98 = tpu.matmul %91, %94, %cst_53 {dimension_numbers = #tpu.dot_dimension_numbers<[2], [2], [1], [1], [0, 0, 0, 1, 1, 1], [0], [0]>} : vector<2x8x8xbf16>, vector<2x8x8xbf16>, vector<2x8x8xf32> -> vector<2x8x8xf32>
    "tpu.trace_stop"() : () -> ()
    %cst_54 = arith.constant dense<0xFF800000> : vector<2x8xf32>
    %99 = vector.multi_reduction <maximumf>, %98, %cst_54 [2] : vector<2x8x8xf32> to vector<2x8xf32>
    %100 = vector.shape_cast %99 : vector<2x8xf32> to vector<2x8x1xf32>
    %101 = vector.broadcast %100 : vector<2x8x1xf32> to vector<2x8x8xf32>
    %102 = arith.subf %98, %101 : vector<2x8x8xf32>
    %103 = math.exp %102 : vector<2x8x8xf32>
    %cst_55 = arith.constant dense<0.000000e+00> : vector<2x8xf32>
    %104 = vector.multi_reduction <add>, %103, %cst_55 [2] : vector<2x8x8xf32> to vector<2x8xf32>
    %105 = vector.shape_cast %104 : vector<2x8xf32> to vector<2x8x1xf32>
    %106 = vector.broadcast %105 : vector<2x8x1xf32> to vector<2x8x8xf32>
    %107 = arith.divf %103, %106 : vector<2x8x8xf32>
    %108 = arith.truncf %107 : vector<2x8x8xf32> to vector<2x8x8xbf16>
    "tpu.trace_start"() <{level = 10 : i32, message = "bqk,bkd->bqd"}> : () -> ()
    %cst_56 = arith.constant dense<0.000000e+00> : vector<2x8x8xf32>
    %109 = tpu.matmul %108, %97, %cst_56 {dimension_numbers = #tpu.dot_dimension_numbers<[2], [1], [1], [2], [0, 0, 0, 1, 1, 2], [0], [0]>} : vector<2x8x8xbf16>, vector<2x8x8xbf16>, vector<2x8x8xf32> -> vector<2x8x8xf32>
    "tpu.trace_stop"() : () -> ()
    %110 = vector.shape_cast %109 : vector<2x8x8xf32> to vector<16x8xf32>
    %111 = vector.extract_strided_slice %42 {offsets = [0, 24], sizes = [16, 8], strides = [1, 1]} : vector<16x32xf32> to vector<16x8xf32>
    %112 = vector.shape_cast %111 : vector<16x8xf32> to vector<2x8x8xf32>
    %113 = arith.truncf %112 : vector<2x8x8xf32> to vector<2x8x8xbf16>
    %114 = vector.extract_strided_slice %43 {offsets = [0, 24], sizes = [16, 8], strides = [1, 1]} : vector<16x32xf32> to vector<16x8xf32>
    %115 = vector.shape_cast %114 : vector<16x8xf32> to vector<2x8x8xf32>
    %116 = arith.truncf %115 : vector<2x8x8xf32> to vector<2x8x8xbf16>
    %117 = vector.extract_strided_slice %44 {offsets = [0, 24], sizes = [16, 8], strides = [1, 1]} : vector<16x32xf32> to vector<16x8xf32>
    %118 = vector.shape_cast %117 : vector<16x8xf32> to vector<2x8x8xf32>
    %119 = arith.truncf %118 : vector<2x8x8xf32> to vector<2x8x8xbf16>
    "tpu.trace_start"() <{level = 10 : i32, message = "bqd,bkd->bqk"}> : () -> ()
    %cst_57 = arith.constant dense<0.000000e+00> : vector<2x8x8xf32>
    %120 = tpu.matmul %113, %116, %cst_57 {dimension_numbers = #tpu.dot_dimension_numbers<[2], [2], [1], [1], [0, 0, 0, 1, 1, 1], [0], [0]>} : vector<2x8x8xbf16>, vector<2x8x8xbf16>, vector<2x8x8xf32> -> vector<2x8x8xf32>
    "tpu.trace_stop"() : () -> ()
    %cst_58 = arith.constant dense<0xFF800000> : vector<2x8xf32>
    %121 = vector.multi_reduction <maximumf>, %120, %cst_58 [2] : vector<2x8x8xf32> to vector<2x8xf32>
    %122 = vector.shape_cast %121 : vector<2x8xf32> to vector<2x8x1xf32>
    %123 = vector.broadcast %122 : vector<2x8x1xf32> to vector<2x8x8xf32>
    %124 = arith.subf %120, %123 : vector<2x8x8xf32>
    %125 = math.exp %124 : vector<2x8x8xf32>
    %cst_59 = arith.constant dense<0.000000e+00> : vector<2x8xf32>
    %126 = vector.multi_reduction <add>, %125, %cst_59 [2] : vector<2x8x8xf32> to vector<2x8xf32>
    %127 = vector.shape_cast %126 : vector<2x8xf32> to vector<2x8x1xf32>
    %128 = vector.broadcast %127 : vector<2x8x1xf32> to vector<2x8x8xf32>
    %129 = arith.divf %125, %128 : vector<2x8x8xf32>
    %130 = arith.truncf %129 : vector<2x8x8xf32> to vector<2x8x8xbf16>
    "tpu.trace_start"() <{level = 10 : i32, message = "bqk,bkd->bqd"}> : () -> ()
    %cst_60 = arith.constant dense<0.000000e+00> : vector<2x8x8xf32>
    %131 = tpu.matmul %130, %119, %cst_60 {dimension_numbers = #tpu.dot_dimension_numbers<[2], [1], [1], [2], [0, 0, 0, 1, 1, 2], [0], [0]>} : vector<2x8x8xbf16>, vector<2x8x8xbf16>, vector<2x8x8xf32> -> vector<2x8x8xf32>
    "tpu.trace_stop"() : () -> ()
    %132 = vector.shape_cast %131 : vector<2x8x8xf32> to vector<16x8xf32>
    %133 = tpu.concatenate %66, %88, %110, %132 in 1 : vector<16x8xf32>, vector<16x8xf32>, vector<16x8xf32>, vector<16x8xf32> -> vector<16x32xf32>
    %134 = arith.truncf %133 : vector<16x32xf32> to vector<16x32xbf16>
    %cst_61 = arith.constant dense<0.000000e+00> : vector<16x32xf32>
    %135 = tpu.matmul %134, %17, %cst_61 {dimension_numbers = #tpu.dot_dimension_numbers<[1], [0], [0], [1], [0, 0, 1, 1], [], []>} : vector<16x32xbf16>, vector<32x32xbf16>, vector<16x32xf32> -> vector<16x32xf32>
    %136 = vector.broadcast %19 : vector<1x32xf32> to vector<16x32xf32>
    %137 = arith.addf %135, %136 : vector<16x32xf32>
    %138 = arith.addf %11, %137 : vector<16x32xf32>
    %cst_62 = arith.constant dense<0.000000e+00> : vector<16xf32>
    %139 = vector.multi_reduction <add>, %138, %cst_62 [1] : vector<16x32xf32> to vector<16xf32>
    %140 = vector.shape_cast %139 : vector<16xf32> to vector<16x1xf32>
    %cst_63 = arith.constant 3.200000e+01 : f32
    %141 = vector.broadcast %cst_63 : f32 to vector<16x1xf32>
    %142 = arith.divf %140, %141 : vector<16x1xf32>
    %143 = vector.broadcast %142 : vector<16x1xf32> to vector<16x32xf32>
    %144 = arith.subf %138, %143 : vector<16x32xf32>
    %145 = vector.broadcast %142 : vector<16x1xf32> to vector<16x32xf32>
    %146 = arith.subf %138, %145 : vector<16x32xf32>
    %147 = arith.mulf %144, %146 : vector<16x32xf32>
    %cst_64 = arith.constant dense<0.000000e+00> : vector<16xf32>
    %148 = vector.multi_reduction <add>, %147, %cst_64 [1] : vector<16x32xf32> to vector<16xf32>
    %149 = vector.shape_cast %148 : vector<16xf32> to vector<16x1xf32>
    %cst_65 = arith.constant 3.200000e+01 : f32
    %150 = vector.broadcast %cst_65 : f32 to vector<16x1xf32>
    %151 = arith.divf %149, %150 : vector<16x1xf32>
    %152 = vector.broadcast %142 : vector<16x1xf32> to vector<16x32xf32>
    %153 = arith.subf %138, %152 : vector<16x32xf32>
    %cst_66 = arith.constant 9.99999974E-6 : f32
    %154 = vector.broadcast %cst_66 : f32 to vector<16x1xf32>
    %155 = arith.addf %151, %154 : vector<16x1xf32>
    %156 = math.rsqrt %155 : vector<16x1xf32>
    %157 = vector.broadcast %156 : vector<16x1xf32> to vector<16x32xf32>
    %158 = arith.mulf %153, %157 : vector<16x32xf32>
    %159 = vector.broadcast %29 : vector<1x32xf32> to vector<16x32xf32>
    %160 = arith.mulf %158, %159 : vector<16x32xf32>
    %161 = vector.broadcast %31 : vector<1x32xf32> to vector<16x32xf32>
    %162 = arith.addf %160, %161 : vector<16x32xf32>
    %163 = arith.truncf %162 : vector<16x32xf32> to vector<16x32xbf16>
    %cst_67 = arith.constant dense<0.000000e+00> : vector<16x64xf32>
    %164 = tpu.matmul %163, %21, %cst_67 {dimension_numbers = #tpu.dot_dimension_numbers<[1], [0], [0], [1], [0, 0, 1, 1], [], []>} : vector<16x32xbf16>, vector<32x64xbf16>, vector<16x64xf32> -> vector<16x64xf32>
    %165 = vector.broadcast %23 : vector<1x64xf32> to vector<16x64xf32>
    %166 = arith.addf %164, %165 : vector<16x64xf32>
    %cst_68 = arith.constant 0.000000e+00 : f32
    %167 = vector.broadcast %cst_68 : f32 to vector<16x64xf32>
    %168 = arith.maximumf %166, %167 : vector<16x64xf32>
    %169 = arith.truncf %168 : vector<16x64xf32> to vector<16x64xbf16>
    %cst_69 = arith.constant dense<0.000000e+00> : vector<16x32xf32>
    %170 = tpu.matmul %169, %25, %cst_69 {dimension_numbers = #tpu.dot_dimension_numbers<[1], [0], [0], [1], [0, 0, 1, 1], [], []>} : vector<16x64xbf16>, vector<64x32xbf16>, vector<16x32xf32> -> vector<16x32xf32>
    %171 = vector.broadcast %27 : vector<1x32xf32> to vector<16x32xf32>
    %172 = arith.addf %170, %171 : vector<16x32xf32>
    %173 = arith.addf %162, %172 : vector<16x32xf32>
    %cst_70 = arith.constant dense<0.000000e+00> : vector<16xf32>
    %174 = vector.multi_reduction <add>, %173, %cst_70 [1] : vector<16x32xf32> to vector<16xf32>
    %175 = vector.shape_cast %174 : vector<16xf32> to vector<16x1xf32>
    %cst_71 = arith.constant 3.200000e+01 : f32
    %176 = vector.broadcast %cst_71 : f32 to vector<16x1xf32>
    %177 = arith.divf %175, %176 : vector<16x1xf32>
    %178 = vector.broadcast %177 : vector<16x1xf32> to vector<16x32xf32>
    %179 = arith.subf %173, %178 : vector<16x32xf32>
    %180 = vector.broadcast %177 : vector<16x1xf32> to vector<16x32xf32>
    %181 = arith.subf %173, %180 : vector<16x32xf32>
    %182 = arith.mulf %179, %181 : vector<16x32xf32>
    %cst_72 = arith.constant dense<0.000000e+00> : vector<16xf32>
    %183 = vector.multi_reduction <add>, %182, %cst_72 [1] : vector<16x32xf32> to vector<16xf32>
    %184 = vector.shape_cast %183 : vector<16xf32> to vector<16x1xf32>
    %cst_73 = arith.constant 3.200000e+01 : f32
    %185 = vector.broadcast %cst_73 : f32 to vector<16x1xf32>
    %186 = arith.divf %184, %185 : vector<16x1xf32>
    %187 = vector.broadcast %177 : vector<16x1xf32> to vector<16x32xf32>
    %188 = arith.subf %173, %187 : vector<16x32xf32>
    %cst_74 = arith.constant 9.99999974E-6 : f32
    %189 = vector.broadcast %cst_74 : f32 to vector<16x1xf32>
    %190 = arith.addf %186, %189 : vector<16x1xf32>
    %191 = math.rsqrt %190 : vector<16x1xf32>
    %192 = vector.broadcast %191 : vector<16x1xf32> to vector<16x32xf32>
    %193 = arith.mulf %188, %192 : vector<16x32xf32>
    %194 = vector.broadcast %33 : vector<1x32xf32> to vector<16x32xf32>
    %195 = arith.mulf %193, %194 : vector<16x32xf32>
    %196 = vector.broadcast %35 : vector<1x32xf32> to vector<16x32xf32>
    %197 = arith.addf %195, %196 : vector<16x32xf32>
    %c1 = arith.constant 1 : index
    %c0_75 = arith.constant 0 : index
    %c0_76 = arith.constant 0 : index
    %198 = vector.load %arg3[%c1, %c0_75, %c0_76] : memref<2x32x96xbf16, #tpu.memory_space<vmem>>, vector<1x32x96xbf16>
    %199 = vector.shape_cast %198 : vector<1x32x96xbf16> to vector<32x96xbf16>
    %c1_77 = arith.constant 1 : index
    %c0_78 = arith.constant 0 : index
    %c0_79 = arith.constant 0 : index
    %200 = vector.load %arg4[%c1_77, %c0_78, %c0_79] : memref<2x1x96xf32, #tpu.memory_space<vmem>>, vector<1x1x96xf32>
    %201 = vector.shape_cast %200 : vector<1x1x96xf32> to vector<1x96xf32>
    %c1_80 = arith.constant 1 : index
    %c0_81 = arith.constant 0 : index
    %c0_82 = arith.constant 0 : index
    %202 = vector.load %arg5[%c1_80, %c0_81, %c0_82] : memref<2x32x32xbf16, #tpu.memory_space<vmem>>, vector<1x32x32xbf16>
    %203 = vector.shape_cast %202 : vector<1x32x32xbf16> to vector<32x32xbf16>
    %c1_83 = arith.constant 1 : index
    %c0_84 = arith.constant 0 : index
    %c0_85 = arith.constant 0 : index
    %204 = vector.load %arg6[%c1_83, %c0_84, %c0_85] : memref<2x1x32xf32, #tpu.memory_space<vmem>>, vector<1x1x32xf32>
    %205 = vector.shape_cast %204 : vector<1x1x32xf32> to vector<1x32xf32>
    %c1_86 = arith.constant 1 : index
    %c0_87 = arith.constant 0 : index
    %c0_88 = arith.constant 0 : index
    %206 = vector.load %arg7[%c1_86, %c0_87, %c0_88] : memref<2x32x64xbf16, #tpu.memory_space<vmem>>, vector<1x32x64xbf16>
    %207 = vector.shape_cast %206 : vector<1x32x64xbf16> to vector<32x64xbf16>
    %c1_89 = arith.constant 1 : index
    %c0_90 = arith.constant 0 : index
    %c0_91 = arith.constant 0 : index
    %208 = vector.load %arg8[%c1_89, %c0_90, %c0_91] : memref<2x1x64xf32, #tpu.memory_space<vmem>>, vector<1x1x64xf32>
    %209 = vector.shape_cast %208 : vector<1x1x64xf32> to vector<1x64xf32>
    %c1_92 = arith.constant 1 : index
    %c0_93 = arith.constant 0 : index
    %c0_94 = arith.constant 0 : index
    %210 = vector.load %arg9[%c1_92, %c0_93, %c0_94] : memref<2x64x32xbf16, #tpu.memory_space<vmem>>, vector<1x64x32xbf16>
    %211 = vector.shape_cast %210 : vector<1x64x32xbf16> to vector<64x32xbf16>
    %c1_95 = arith.constant 1 : index
    %c0_96 = arith.constant 0 : index
    %c0_97 = arith.constant 0 : index
    %212 = vector.load %arg10[%c1_95, %c0_96, %c0_97] : memref<2x1x32xf32, #tpu.memory_space<vmem>>, vector<1x1x32xf32>
    %213 = vector.shape_cast %212 : vector<1x1x32xf32> to vector<1x32xf32>
    %c1_98 = arith.constant 1 : index
    %c0_99 = arith.constant 0 : index
    %c0_100 = arith.constant 0 : index
    %214 = vector.load %arg11[%c1_98, %c0_99, %c0_100] : memref<2x1x32xf32, #tpu.memory_space<vmem>>, vector<1x1x32xf32>
    %215 = vector.shape_cast %214 : vector<1x1x32xf32> to vector<1x32xf32>
    %c1_101 = arith.constant 1 : index
    %c0_102 = arith.constant 0 : index
    %c0_103 = arith.constant 0 : index
    %216 = vector.load %arg12[%c1_101, %c0_102, %c0_103] : memref<2x1x32xf32, #tpu.memory_space<vmem>>, vector<1x1x32xf32>
    %217 = vector.shape_cast %216 : vector<1x1x32xf32> to vector<1x32xf32>
    %c1_104 = arith.constant 1 : index
    %c0_105 = arith.constant 0 : index
    %c0_106 = arith.constant 0 : index
    %218 = vector.load %arg13[%c1_104, %c0_105, %c0_106] : memref<2x1x32xf32, #tpu.memory_space<vmem>>, vector<1x1x32xf32>
    %219 = vector.shape_cast %218 : vector<1x1x32xf32> to vector<1x32xf32>
    %c1_107 = arith.constant 1 : index
    %c0_108 = arith.constant 0 : index
    %c0_109 = arith.constant 0 : index
    %220 = vector.load %arg14[%c1_107, %c0_108, %c0_109] : memref<2x1x32xf32, #tpu.memory_space<vmem>>, vector<1x1x32xf32>
    %221 = vector.shape_cast %220 : vector<1x1x32xf32> to vector<1x32xf32>
    %222 = arith.truncf %197 : vector<16x32xf32> to vector<16x32xbf16>
    %cst_110 = arith.constant dense<0.000000e+00> : vector<16x96xf32>
    %223 = tpu.matmul %222, %199, %cst_110 {dimension_numbers = #tpu.dot_dimension_numbers<[1], [0], [0], [1], [0, 0, 1, 1], [], []>} : vector<16x32xbf16>, vector<32x96xbf16>, vector<16x96xf32> -> vector<16x96xf32>
    %224 = vector.broadcast %201 : vector<1x96xf32> to vector<16x96xf32>
    %225 = arith.addf %223, %224 : vector<16x96xf32>
    %226 = vector.extract_strided_slice %225 {offsets = [0, 0], sizes = [16, 32], strides = [1, 1]} : vector<16x96xf32> to vector<16x32xf32>
    %cst_111 = arith.constant 0.353553385 : f32
    %227 = vector.broadcast %cst_111 : f32 to vector<16x32xf32>
    %228 = arith.mulf %226, %227 : vector<16x32xf32>
    %229 = vector.extract_strided_slice %225 {offsets = [0, 32], sizes = [16, 32], strides = [1, 1]} : vector<16x96xf32> to vector<16x32xf32>
    %230 = vector.extract_strided_slice %225 {offsets = [0, 64], sizes = [16, 32], strides = [1, 1]} : vector<16x96xf32> to vector<16x32xf32>
    %231 = vector.extract_strided_slice %228 {offsets = [0, 0], sizes = [16, 8], strides = [1, 1]} : vector<16x32xf32> to vector<16x8xf32>
    %232 = vector.shape_cast %231 : vector<16x8xf32> to vector<2x8x8xf32>
    %233 = arith.truncf %232 : vector<2x8x8xf32> to vector<2x8x8xbf16>
    %234 = vector.extract_strided_slice %229 {offsets = [0, 0], sizes = [16, 8], strides = [1, 1]} : vector<16x32xf32> to vector<16x8xf32>
    %235 = vector.shape_cast %234 : vector<16x8xf32> to vector<2x8x8xf32>
    %236 = arith.truncf %235 : vector<2x8x8xf32> to vector<2x8x8xbf16>
    %237 = vector.extract_strided_slice %230 {offsets = [0, 0], sizes = [16, 8], strides = [1, 1]} : vector<16x32xf32> to vector<16x8xf32>
    %238 = vector.shape_cast %237 : vector<16x8xf32> to vector<2x8x8xf32>
    %239 = arith.truncf %238 : vector<2x8x8xf32> to vector<2x8x8xbf16>
    "tpu.trace_start"() <{level = 10 : i32, message = "bqd,bkd->bqk"}> : () -> ()
    %cst_112 = arith.constant dense<0.000000e+00> : vector<2x8x8xf32>
    %240 = tpu.matmul %233, %236, %cst_112 {dimension_numbers = #tpu.dot_dimension_numbers<[2], [2], [1], [1], [0, 0, 0, 1, 1, 1], [0], [0]>} : vector<2x8x8xbf16>, vector<2x8x8xbf16>, vector<2x8x8xf32> -> vector<2x8x8xf32>
    "tpu.trace_stop"() : () -> ()
    %cst_113 = arith.constant dense<0xFF800000> : vector<2x8xf32>
    %241 = vector.multi_reduction <maximumf>, %240, %cst_113 [2] : vector<2x8x8xf32> to vector<2x8xf32>
    %242 = vector.shape_cast %241 : vector<2x8xf32> to vector<2x8x1xf32>
    %243 = vector.broadcast %242 : vector<2x8x1xf32> to vector<2x8x8xf32>
    %244 = arith.subf %240, %243 : vector<2x8x8xf32>
    %245 = math.exp %244 : vector<2x8x8xf32>
    %cst_114 = arith.constant dense<0.000000e+00> : vector<2x8xf32>
    %246 = vector.multi_reduction <add>, %245, %cst_114 [2] : vector<2x8x8xf32> to vector<2x8xf32>
    %247 = vector.shape_cast %246 : vector<2x8xf32> to vector<2x8x1xf32>
    %248 = vector.broadcast %247 : vector<2x8x1xf32> to vector<2x8x8xf32>
    %249 = arith.divf %245, %248 : vector<2x8x8xf32>
    %250 = arith.truncf %249 : vector<2x8x8xf32> to vector<2x8x8xbf16>
    "tpu.trace_start"() <{level = 10 : i32, message = "bqk,bkd->bqd"}> : () -> ()
    %cst_115 = arith.constant dense<0.000000e+00> : vector<2x8x8xf32>
    %251 = tpu.matmul %250, %239, %cst_115 {dimension_numbers = #tpu.dot_dimension_numbers<[2], [1], [1], [2], [0, 0, 0, 1, 1, 2], [0], [0]>} : vector<2x8x8xbf16>, vector<2x8x8xbf16>, vector<2x8x8xf32> -> vector<2x8x8xf32>
    "tpu.trace_stop"() : () -> ()
    %252 = vector.shape_cast %251 : vector<2x8x8xf32> to vector<16x8xf32>
    %253 = vector.extract_strided_slice %228 {offsets = [0, 8], sizes = [16, 8], strides = [1, 1]} : vector<16x32xf32> to vector<16x8xf32>
    %254 = vector.shape_cast %253 : vector<16x8xf32> to vector<2x8x8xf32>
    %255 = arith.truncf %254 : vector<2x8x8xf32> to vector<2x8x8xbf16>
    %256 = vector.extract_strided_slice %229 {offsets = [0, 8], sizes = [16, 8], strides = [1, 1]} : vector<16x32xf32> to vector<16x8xf32>
    %257 = vector.shape_cast %256 : vector<16x8xf32> to vector<2x8x8xf32>
    %258 = arith.truncf %257 : vector<2x8x8xf32> to vector<2x8x8xbf16>
    %259 = vector.extract_strided_slice %230 {offsets = [0, 8], sizes = [16, 8], strides = [1, 1]} : vector<16x32xf32> to vector<16x8xf32>
    %260 = vector.shape_cast %259 : vector<16x8xf32> to vector<2x8x8xf32>
    %261 = arith.truncf %260 : vector<2x8x8xf32> to vector<2x8x8xbf16>
    "tpu.trace_start"() <{level = 10 : i32, message = "bqd,bkd->bqk"}> : () -> ()
    %cst_116 = arith.constant dense<0.000000e+00> : vector<2x8x8xf32>
    %262 = tpu.matmul %255, %258, %cst_116 {dimension_numbers = #tpu.dot_dimension_numbers<[2], [2], [1], [1], [0, 0, 0, 1, 1, 1], [0], [0]>} : vector<2x8x8xbf16>, vector<2x8x8xbf16>, vector<2x8x8xf32> -> vector<2x8x8xf32>
    "tpu.trace_stop"() : () -> ()
    %cst_117 = arith.constant dense<0xFF800000> : vector<2x8xf32>
    %263 = vector.multi_reduction <maximumf>, %262, %cst_117 [2] : vector<2x8x8xf32> to vector<2x8xf32>
    %264 = vector.shape_cast %263 : vector<2x8xf32> to vector<2x8x1xf32>
    %265 = vector.broadcast %264 : vector<2x8x1xf32> to vector<2x8x8xf32>
    %266 = arith.subf %262, %265 : vector<2x8x8xf32>
    %267 = math.exp %266 : vector<2x8x8xf32>
    %cst_118 = arith.constant dense<0.000000e+00> : vector<2x8xf32>
    %268 = vector.multi_reduction <add>, %267, %cst_118 [2] : vector<2x8x8xf32> to vector<2x8xf32>
    %269 = vector.shape_cast %268 : vector<2x8xf32> to vector<2x8x1xf32>
    %270 = vector.broadcast %269 : vector<2x8x1xf32> to vector<2x8x8xf32>
    %271 = arith.divf %267, %270 : vector<2x8x8xf32>
    %272 = arith.truncf %271 : vector<2x8x8xf32> to vector<2x8x8xbf16>
    "tpu.trace_start"() <{level = 10 : i32, message = "bqk,bkd->bqd"}> : () -> ()
    %cst_119 = arith.constant dense<0.000000e+00> : vector<2x8x8xf32>
    %273 = tpu.matmul %272, %261, %cst_119 {dimension_numbers = #tpu.dot_dimension_numbers<[2], [1], [1], [2], [0, 0, 0, 1, 1, 2], [0], [0]>} : vector<2x8x8xbf16>, vector<2x8x8xbf16>, vector<2x8x8xf32> -> vector<2x8x8xf32>
    "tpu.trace_stop"() : () -> ()
    %274 = vector.shape_cast %273 : vector<2x8x8xf32> to vector<16x8xf32>
    %275 = vector.extract_strided_slice %228 {offsets = [0, 16], sizes = [16, 8], strides = [1, 1]} : vector<16x32xf32> to vector<16x8xf32>
    %276 = vector.shape_cast %275 : vector<16x8xf32> to vector<2x8x8xf32>
    %277 = arith.truncf %276 : vector<2x8x8xf32> to vector<2x8x8xbf16>
    %278 = vector.extract_strided_slice %229 {offsets = [0, 16], sizes = [16, 8], strides = [1, 1]} : vector<16x32xf32> to vector<16x8xf32>
    %279 = vector.shape_cast %278 : vector<16x8xf32> to vector<2x8x8xf32>
    %280 = arith.truncf %279 : vector<2x8x8xf32> to vector<2x8x8xbf16>
    %281 = vector.extract_strided_slice %230 {offsets = [0, 16], sizes = [16, 8], strides = [1, 1]} : vector<16x32xf32> to vector<16x8xf32>
    %282 = vector.shape_cast %281 : vector<16x8xf32> to vector<2x8x8xf32>
    %283 = arith.truncf %282 : vector<2x8x8xf32> to vector<2x8x8xbf16>
    "tpu.trace_start"() <{level = 10 : i32, message = "bqd,bkd->bqk"}> : () -> ()
    %cst_120 = arith.constant dense<0.000000e+00> : vector<2x8x8xf32>
    %284 = tpu.matmul %277, %280, %cst_120 {dimension_numbers = #tpu.dot_dimension_numbers<[2], [2], [1], [1], [0, 0, 0, 1, 1, 1], [0], [0]>} : vector<2x8x8xbf16>, vector<2x8x8xbf16>, vector<2x8x8xf32> -> vector<2x8x8xf32>
    "tpu.trace_stop"() : () -> ()
    %cst_121 = arith.constant dense<0xFF800000> : vector<2x8xf32>
    %285 = vector.multi_reduction <maximumf>, %284, %cst_121 [2] : vector<2x8x8xf32> to vector<2x8xf32>
    %286 = vector.shape_cast %285 : vector<2x8xf32> to vector<2x8x1xf32>
    %287 = vector.broadcast %286 : vector<2x8x1xf32> to vector<2x8x8xf32>
    %288 = arith.subf %284, %287 : vector<2x8x8xf32>
    %289 = math.exp %288 : vector<2x8x8xf32>
    %cst_122 = arith.constant dense<0.000000e+00> : vector<2x8xf32>
    %290 = vector.multi_reduction <add>, %289, %cst_122 [2] : vector<2x8x8xf32> to vector<2x8xf32>
    %291 = vector.shape_cast %290 : vector<2x8xf32> to vector<2x8x1xf32>
    %292 = vector.broadcast %291 : vector<2x8x1xf32> to vector<2x8x8xf32>
    %293 = arith.divf %289, %292 : vector<2x8x8xf32>
    %294 = arith.truncf %293 : vector<2x8x8xf32> to vector<2x8x8xbf16>
    "tpu.trace_start"() <{level = 10 : i32, message = "bqk,bkd->bqd"}> : () -> ()
    %cst_123 = arith.constant dense<0.000000e+00> : vector<2x8x8xf32>
    %295 = tpu.matmul %294, %283, %cst_123 {dimension_numbers = #tpu.dot_dimension_numbers<[2], [1], [1], [2], [0, 0, 0, 1, 1, 2], [0], [0]>} : vector<2x8x8xbf16>, vector<2x8x8xbf16>, vector<2x8x8xf32> -> vector<2x8x8xf32>
    "tpu.trace_stop"() : () -> ()
    %296 = vector.shape_cast %295 : vector<2x8x8xf32> to vector<16x8xf32>
    %297 = vector.extract_strided_slice %228 {offsets = [0, 24], sizes = [16, 8], strides = [1, 1]} : vector<16x32xf32> to vector<16x8xf32>
    %298 = vector.shape_cast %297 : vector<16x8xf32> to vector<2x8x8xf32>
    %299 = arith.truncf %298 : vector<2x8x8xf32> to vector<2x8x8xbf16>
    %300 = vector.extract_strided_slice %229 {offsets = [0, 24], sizes = [16, 8], strides = [1, 1]} : vector<16x32xf32> to vector<16x8xf32>
    %301 = vector.shape_cast %300 : vector<16x8xf32> to vector<2x8x8xf32>
    %302 = arith.truncf %301 : vector<2x8x8xf32> to vector<2x8x8xbf16>
    %303 = vector.extract_strided_slice %230 {offsets = [0, 24], sizes = [16, 8], strides = [1, 1]} : vector<16x32xf32> to vector<16x8xf32>
    %304 = vector.shape_cast %303 : vector<16x8xf32> to vector<2x8x8xf32>
    %305 = arith.truncf %304 : vector<2x8x8xf32> to vector<2x8x8xbf16>
    "tpu.trace_start"() <{level = 10 : i32, message = "bqd,bkd->bqk"}> : () -> ()
    %cst_124 = arith.constant dense<0.000000e+00> : vector<2x8x8xf32>
    %306 = tpu.matmul %299, %302, %cst_124 {dimension_numbers = #tpu.dot_dimension_numbers<[2], [2], [1], [1], [0, 0, 0, 1, 1, 1], [0], [0]>} : vector<2x8x8xbf16>, vector<2x8x8xbf16>, vector<2x8x8xf32> -> vector<2x8x8xf32>
    "tpu.trace_stop"() : () -> ()
    %cst_125 = arith.constant dense<0xFF800000> : vector<2x8xf32>
    %307 = vector.multi_reduction <maximumf>, %306, %cst_125 [2] : vector<2x8x8xf32> to vector<2x8xf32>
    %308 = vector.shape_cast %307 : vector<2x8xf32> to vector<2x8x1xf32>
    %309 = vector.broadcast %308 : vector<2x8x1xf32> to vector<2x8x8xf32>
    %310 = arith.subf %306, %309 : vector<2x8x8xf32>
    %311 = math.exp %310 : vector<2x8x8xf32>
    %cst_126 = arith.constant dense<0.000000e+00> : vector<2x8xf32>
    %312 = vector.multi_reduction <add>, %311, %cst_126 [2] : vector<2x8x8xf32> to vector<2x8xf32>
    %313 = vector.shape_cast %312 : vector<2x8xf32> to vector<2x8x1xf32>
    %314 = vector.broadcast %313 : vector<2x8x1xf32> to vector<2x8x8xf32>
    %315 = arith.divf %311, %314 : vector<2x8x8xf32>
    %316 = arith.truncf %315 : vector<2x8x8xf32> to vector<2x8x8xbf16>
    "tpu.trace_start"() <{level = 10 : i32, message = "bqk,bkd->bqd"}> : () -> ()
    %cst_127 = arith.constant dense<0.000000e+00> : vector<2x8x8xf32>
    %317 = tpu.matmul %316, %305, %cst_127 {dimension_numbers = #tpu.dot_dimension_numbers<[2], [1], [1], [2], [0, 0, 0, 1, 1, 2], [0], [0]>} : vector<2x8x8xbf16>, vector<2x8x8xbf16>, vector<2x8x8xf32> -> vector<2x8x8xf32>
    "tpu.trace_stop"() : () -> ()
    %318 = vector.shape_cast %317 : vector<2x8x8xf32> to vector<16x8xf32>
    %319 = tpu.concatenate %252, %274, %296, %318 in 1 : vector<16x8xf32>, vector<16x8xf32>, vector<16x8xf32>, vector<16x8xf32> -> vector<16x32xf32>
    %320 = arith.truncf %319 : vector<16x32xf32> to vector<16x32xbf16>
    %cst_128 = arith.constant dense<0.000000e+00> : vector<16x32xf32>
    %321 = tpu.matmul %320, %203, %cst_128 {dimension_numbers = #tpu.dot_dimension_numbers<[1], [0], [0], [1], [0, 0, 1, 1], [], []>} : vector<16x32xbf16>, vector<32x32xbf16>, vector<16x32xf32> -> vector<16x32xf32>
    %322 = vector.broadcast %205 : vector<1x32xf32> to vector<16x32xf32>
    %323 = arith.addf %321, %322 : vector<16x32xf32>
    %324 = arith.addf %197, %323 : vector<16x32xf32>
    %cst_129 = arith.constant dense<0.000000e+00> : vector<16xf32>
    %325 = vector.multi_reduction <add>, %324, %cst_129 [1] : vector<16x32xf32> to vector<16xf32>
    %326 = vector.shape_cast %325 : vector<16xf32> to vector<16x1xf32>
    %cst_130 = arith.constant 3.200000e+01 : f32
    %327 = vector.broadcast %cst_130 : f32 to vector<16x1xf32>
    %328 = arith.divf %326, %327 : vector<16x1xf32>
    %329 = vector.broadcast %328 : vector<16x1xf32> to vector<16x32xf32>
    %330 = arith.subf %324, %329 : vector<16x32xf32>
    %331 = vector.broadcast %328 : vector<16x1xf32> to vector<16x32xf32>
    %332 = arith.subf %324, %331 : vector<16x32xf32>
    %333 = arith.mulf %330, %332 : vector<16x32xf32>
    %cst_131 = arith.constant dense<0.000000e+00> : vector<16xf32>
    %334 = vector.multi_reduction <add>, %333, %cst_131 [1] : vector<16x32xf32> to vector<16xf32>
    %335 = vector.shape_cast %334 : vector<16xf32> to vector<16x1xf32>
    %cst_132 = arith.constant 3.200000e+01 : f32
    %336 = vector.broadcast %cst_132 : f32 to vector<16x1xf32>
    %337 = arith.divf %335, %336 : vector<16x1xf32>
    %338 = vector.broadcast %328 : vector<16x1xf32> to vector<16x32xf32>
    %339 = arith.subf %324, %338 : vector<16x32xf32>
    %cst_133 = arith.constant 9.99999974E-6 : f32
    %340 = vector.broadcast %cst_133 : f32 to vector<16x1xf32>
    %341 = arith.addf %337, %340 : vector<16x1xf32>
    %342 = math.rsqrt %341 : vector<16x1xf32>
    %343 = vector.broadcast %342 : vector<16x1xf32> to vector<16x32xf32>
    %344 = arith.mulf %339, %343 : vector<16x32xf32>
    %345 = vector.broadcast %215 : vector<1x32xf32> to vector<16x32xf32>
    %346 = arith.mulf %344, %345 : vector<16x32xf32>
    %347 = vector.broadcast %217 : vector<1x32xf32> to vector<16x32xf32>
    %348 = arith.addf %346, %347 : vector<16x32xf32>
    %349 = arith.truncf %348 : vector<16x32xf32> to vector<16x32xbf16>
    %cst_134 = arith.constant dense<0.000000e+00> : vector<16x64xf32>
    %350 = tpu.matmul %349, %207, %cst_134 {dimension_numbers = #tpu.dot_dimension_numbers<[1], [0], [0], [1], [0, 0, 1, 1], [], []>} : vector<16x32xbf16>, vector<32x64xbf16>, vector<16x64xf32> -> vector<16x64xf32>
    %351 = vector.broadcast %209 : vector<1x64xf32> to vector<16x64xf32>
    %352 = arith.addf %350, %351 : vector<16x64xf32>
    %cst_135 = arith.constant 0.000000e+00 : f32
    %353 = vector.broadcast %cst_135 : f32 to vector<16x64xf32>
    %354 = arith.maximumf %352, %353 : vector<16x64xf32>
    %355 = arith.truncf %354 : vector<16x64xf32> to vector<16x64xbf16>
    %cst_136 = arith.constant dense<0.000000e+00> : vector<16x32xf32>
    %356 = tpu.matmul %355, %211, %cst_136 {dimension_numbers = #tpu.dot_dimension_numbers<[1], [0], [0], [1], [0, 0, 1, 1], [], []>} : vector<16x64xbf16>, vector<64x32xbf16>, vector<16x32xf32> -> vector<16x32xf32>
    %357 = vector.broadcast %213 : vector<1x32xf32> to vector<16x32xf32>
    %358 = arith.addf %356, %357 : vector<16x32xf32>
    %359 = arith.addf %348, %358 : vector<16x32xf32>
    %cst_137 = arith.constant dense<0.000000e+00> : vector<16xf32>
    %360 = vector.multi_reduction <add>, %359, %cst_137 [1] : vector<16x32xf32> to vector<16xf32>
    %361 = vector.shape_cast %360 : vector<16xf32> to vector<16x1xf32>
    %cst_138 = arith.constant 3.200000e+01 : f32
    %362 = vector.broadcast %cst_138 : f32 to vector<16x1xf32>
    %363 = arith.divf %361, %362 : vector<16x1xf32>
    %364 = vector.broadcast %363 : vector<16x1xf32> to vector<16x32xf32>
    %365 = arith.subf %359, %364 : vector<16x32xf32>
    %366 = vector.broadcast %363 : vector<16x1xf32> to vector<16x32xf32>
    %367 = arith.subf %359, %366 : vector<16x32xf32>
    %368 = arith.mulf %365, %367 : vector<16x32xf32>
    %cst_139 = arith.constant dense<0.000000e+00> : vector<16xf32>
    %369 = vector.multi_reduction <add>, %368, %cst_139 [1] : vector<16x32xf32> to vector<16xf32>
    %370 = vector.shape_cast %369 : vector<16xf32> to vector<16x1xf32>
    %cst_140 = arith.constant 3.200000e+01 : f32
    %371 = vector.broadcast %cst_140 : f32 to vector<16x1xf32>
    %372 = arith.divf %370, %371 : vector<16x1xf32>
    %373 = vector.broadcast %363 : vector<16x1xf32> to vector<16x32xf32>
    %374 = arith.subf %359, %373 : vector<16x32xf32>
    %cst_141 = arith.constant 9.99999974E-6 : f32
    %375 = vector.broadcast %cst_141 : f32 to vector<16x1xf32>
    %376 = arith.addf %372, %375 : vector<16x1xf32>
    %377 = math.rsqrt %376 : vector<16x1xf32>
    %378 = vector.broadcast %377 : vector<16x1xf32> to vector<16x32xf32>
    %379 = arith.mulf %374, %378 : vector<16x32xf32>
    %380 = vector.broadcast %219 : vector<1x32xf32> to vector<16x32xf32>
    %381 = arith.mulf %379, %380 : vector<16x32xf32>
    %382 = vector.broadcast %221 : vector<1x32xf32> to vector<16x32xf32>
    %383 = arith.addf %381, %382 : vector<16x32xf32>
    %c0_142 = arith.constant 0 : index
    %c0_143 = arith.constant 0 : index
    %384 = vector.load %arg15[%c0_142, %c0_143] : memref<16x32xf32, #tpu.memory_space<vmem>>, vector<16x32xf32>
    tpu.vector_store %arg15[%c0_142, %c0_143], %383 {strides = array<i32>} : memref<16x32xf32, #tpu.memory_space<vmem>>, vector<16x32xf32>,
    return
  }
}

</mosaic_0001>

<llo_original>
// kernel: tpu_custom_call.1
$region0: #{tpu_custom_call.1}
  #allocation0 [shape = 'u32[]', space=smem, size = 0x4, offset = 0x4, fixed_abs, tag = 'smem constant byte address 0x4 - core index']
  #allocation1 [shape = 'u32[144,128]{1,0:T(1,128)}', space=vmem, size = 0x12000, scoped, tag = 'internal scratch']
  %s0 = inlined_call_operand.hbm [shape: f32[16,16], index: 0, kind: input, shape index: {}]
  %s1 = inlined_call_operand.hbm [shape: bf16[16,32], index: 1, kind: input, shape index: {}]
  %s2 = inlined_call_operand.hbm [shape: f32[1,32], index: 2, kind: input, shape index: {}]
  %s3 = inlined_call_operand.vmem [shape: bf16[2,32,96], index: 3, kind: input, shape index: {}]
  %s4 = inlined_call_operand.vmem [shape: f32[2,1,96], index: 4, kind: input, shape index: {}]
  %s5 = inlined_call_operand.vmem [shape: bf16[2,32,32], index: 5, kind: input, shape index: {}]
  %s6 = inlined_call_operand.hbm [shape: f32[2,1,32], index: 6, kind: input, shape index: {}]
  %s7 = inlined_call_operand.vmem [shape: bf16[2,32,64], index: 7, kind: input, shape index: {}]
  %s8 = inlined_call_operand.hbm [shape: f32[2,1,64], index: 8, kind: input, shape index: {}]
  %s9 = inlined_call_operand.vmem [shape: bf16[2,64,32], index: 9, kind: input, shape index: {}]
  %s10 = inlined_call_operand.vmem [shape: f32[2,1,32], index: 10, kind: input, shape index: {}]
  %s11 = inlined_call_operand.vmem [shape: f32[2,1,32], index: 11, kind: input, shape index: {}]
  %s12 = inlined_call_operand.vmem [shape: f32[2,1,32], index: 12, kind: input, shape index: {}]
  %s13 = inlined_call_operand.vmem [shape: f32[2,1,32], index: 13, kind: input, shape index: {}]
  %s14 = inlined_call_operand.vmem [shape: f32[2,1,32], index: 14, kind: input, shape index: {}]
  %s15 = inlined_call_operand.hbm [shape: f32[16,32], index: 15, kind: output, shape index: {}]
  %s16 = sld [smem:[#allocation0]]
  $region90: #{tpu_custom_call.1} parent=0
    _
  %s18 = ssub.s32 1, %s16
  %s19 = scalar_select 0, %s18, %s16
  $region1: #{tpu_custom_call.1} parent=0
    #allocation2 [shape = 'u8[8192]{0}', space=vmem, size = 0x2000, scoped, tag = 'input window, operand 0, single buffered']
    #allocation3 [shape = 's32[1]{0}', space=sflag, size = 0x4, scoped, tag = 'scoped memory for tpu_custom_call.1']
    #allocation4 [shape = 's32[1]{0}', space=sflag, size = 0x4, scoped, tag = 'scoped memory for tpu_custom_call.1']
    #allocation5 [shape = 'u8[4096]{0}', space=vmem, size = 0x1000, scoped, tag = 'input window, operand 1, single buffered']
    #allocation6 [shape = 's32[1]{0}', space=sflag, size = 0x4, scoped, tag = 'scoped memory for tpu_custom_call.1']
    #allocation7 [shape = 'u8[512]{0}', space=vmem, size = 0x400, scoped, tag = 'input window, operand 2, single buffered']
    #allocation8 [shape = 'u8[1024]{0}', space=vmem, size = 0x400, scoped, tag = 'input window, operand 6, single buffered']
    #allocation9 [shape = 's32[1]{0}', space=sflag, size = 0x4, scoped, tag = 'scoped memory for tpu_custom_call.1']
    #allocation10 [shape = 'u8[1024]{0}', space=vmem, size = 0x400, scoped, tag = 'input window, operand 8, single buffered']
    #allocation11 [shape = 'u8[8192]{0}', space=vmem, size = 0x2000, scoped, tag = 'output window, operand 0, single buffered']
    %20 = vsyncpa [#allocation3], 0
    %21 = vsyncpa [#allocation6], 0
    %22 = vsyncpa [#allocation9], 0
    %23 = vsyncpa [#allocation4], 0
    // Predicated region
    $region2: #{tpu_custom_call.1} parent=1 // pred_check
      _
    $region3: #{tpu_custom_call.1} parent=1 // pred_check_branch
      %25 = sbr.rel (0) target = $region5
    $region4: #{tpu_custom_call.1} parent=1 // pred_region
      %s27 = ssub.s32 256, 256
      %28 = vsyncadd [#allocation3], %s27
      %s29 = sshll.u32 [#allocation2], 4
      %s30 = int_to_ptr.vmem [resolvable:$true] %s29
      %35 = dma.hbm_to_vmem [thread:$0]  %s0, 256, %s30, [#allocation3], 128, 128, 8
    $region5: #{tpu_custom_call.1} parent=1 // pred_fallthru
      _
    // Predicated region
    $region6: #{tpu_custom_call.1} parent=1 // pred_check
      _
    $region7: #{tpu_custom_call.1} parent=1 // pred_check_branch
      %37 = sbr.rel (0) target = $region9
    $region8: #{tpu_custom_call.1} parent=1 // pred_region
      %s39 = ssub.s32 128, 128
      %40 = vsyncadd [#allocation6], %s39
      %s41 = sshll.u32 [#allocation5], 4
      %s42 = int_to_ptr.vmem [resolvable:$true] %s41
      %47 = dma.hbm_to_vmem [thread:$0]  %s1, 128, %s42, [#allocation6], 64, 64, 4
    $region9: #{tpu_custom_call.1} parent=1 // pred_fallthru
      _
    // Predicated region
    $region10: #{tpu_custom_call.1} parent=1 // pred_check
      _
    $region11: #{tpu_custom_call.1} parent=1 // pred_check_branch
      %49 = sbr.rel (0) target = $region13
    $region12: #{tpu_custom_call.1} parent=1 // pred_region
      %s51 = ssub.s32 16, 16
      %52 = vsyncadd [#allocation6], %s51
      %s54 = sshll.u32 [#allocation7], 4
      %s55 = int_to_ptr.vmem [resolvable:$true] %s54
      %57 = dma.hbm_to_vmem [thread:$0]  %s2, 16, %s55, [#allocation6]
    $region13: #{tpu_custom_call.1} parent=1 // pred_fallthru
      _
    // Predicated region
    $region14: #{tpu_custom_call.1} parent=1 // pred_check
      _
    $region15: #{tpu_custom_call.1} parent=1 // pred_check_branch
      %59 = sbr.rel (0) target = $region17
    $region16: #{tpu_custom_call.1} parent=1 // pred_region
      _
    $region17: #{tpu_custom_call.1} parent=1 // pred_fallthru
      _
    // Predicated region
    $region18: #{tpu_custom_call.1} parent=1 // pred_check
      _
    $region19: #{tpu_custom_call.1} parent=1 // pred_check_branch
      %61 = sbr.rel (0) target = $region21
    $region20: #{tpu_custom_call.1} parent=1 // pred_region
      _
    $region21: #{tpu_custom_call.1} parent=1 // pred_fallthru
      _
    // Predicated region
    $region22: #{tpu_custom_call.1} parent=1 // pred_check
      _
    $region23: #{tpu_custom_call.1} parent=1 // pred_check_branch
      %63 = sbr.rel (0) target = $region25
    $region24: #{tpu_custom_call.1} parent=1 // pred_region
      _
    $region25: #{tpu_custom_call.1} parent=1 // pred_fallthru
      _
    // Predicated region
    $region26: #{tpu_custom_call.1} parent=1 // pred_check
      _
    $region27: #{tpu_custom_call.1} parent=1 // pred_check_branch
      %65 = sbr.rel (0) target = $region29
    $region28: #{tpu_custom_call.1} parent=1 // pred_region
      %s67 = ssub.s32 32, 32
      %68 = vsyncadd [#allocation9], %s67
      %s69 = sshll.u32 [#allocation8], 4
      %s70 = int_to_ptr.vmem [resolvable:$true] %s69
      %75 = dma.hbm_to_vmem [thread:$0]  %s6, 32, %s70, [#allocation9], 16, 16, 1
    $region29: #{tpu_custom_call.1} parent=1 // pred_fallthru
      _
    // Predicated region
    $region30: #{tpu_custom_call.1} parent=1 // pred_check
      _
    $region31: #{tpu_custom_call.1} parent=1 // pred_check_branch
      %77 = sbr.rel (0) target = $region33
    $region32: #{tpu_custom_call.1} parent=1 // pred_region
      _
    $region33: #{tpu_custom_call.1} parent=1 // pred_fallthru
      _
    // Predicated region
    $region34: #{tpu_custom_call.1} parent=1 // pred_check
      _
    $region35: #{tpu_custom_call.1} parent=1 // pred_check_branch
      %79 = sbr.rel (0) target = $region37
    $region36: #{tpu_custom_call.1} parent=1 // pred_region
      %s81 = ssub.s32 32, 32
      %82 = vsyncadd [#allocation9], %s81
      %s83 = sshll.u32 [#allocation10], 4
      %s84 = int_to_ptr.vmem [resolvable:$true] %s83
      %89 = dma.hbm_to_vmem [thread:$0]  %s8, 32, %s84, [#allocation9], 16, 16, 1
    $region37: #{tpu_custom_call.1} parent=1 // pred_fallthru
      _
    // Predicated region
    $region38: #{tpu_custom_call.1} parent=1 // pred_check
      _
    $region39: #{tpu_custom_call.1} parent=1 // pred_check_branch
      %91 = sbr.rel (0) target = $region41
    $region40: #{tpu_custom_call.1} parent=1 // pred_region
      _
    $region41: #{tpu_custom_call.1} parent=1 // pred_fallthru
      _
    // Predicated region
    $region42: #{tpu_custom_call.1} parent=1 // pred_check
      _
    $region43: #{tpu_custom_call.1} parent=1 // pred_check_branch
      %93 = sbr.rel (0) target = $region45
    $region44: #{tpu_custom_call.1} parent=1 // pred_region
      _
    $region45: #{tpu_custom_call.1} parent=1 // pred_fallthru
      _
    // Predicated region
    $region46: #{tpu_custom_call.1} parent=1 // pred_check
      _
    $region47: #{tpu_custom_call.1} parent=1 // pred_check_branch
      %95 = sbr.rel (0) target = $region49
    $region48: #{tpu_custom_call.1} parent=1 // pred_region
      _
    $region49: #{tpu_custom_call.1} parent=1 // pred_fallthru
      _
    // Predicated region
    $region50: #{tpu_custom_call.1} parent=1 // pred_check
      _
    $region51: #{tpu_custom_call.1} parent=1 // pred_check_branch
      %97 = sbr.rel (0) target = $region53
    $region52: #{tpu_custom_call.1} parent=1 // pred_region
      _
    $region53: #{tpu_custom_call.1} parent=1 // pred_fallthru
      _
    // Predicated region
    $region54: #{tpu_custom_call.1} parent=1 // pred_check
      _
    $region55: #{tpu_custom_call.1} parent=1 // pred_check_branch
      %99 = sbr.rel (0) target = $region57
    $region56: #{tpu_custom_call.1} parent=1 // pred_region
      _
    $region57: #{tpu_custom_call.1} parent=1 // pred_fallthru
      _
    // Predicated region
    $region58: #{tpu_custom_call.1} parent=1 // pred_check
      _
    $region59: #{tpu_custom_call.1} parent=1 // pred_check_branch
      %101 = sbr.rel (0) target = $region61
    $region60: #{tpu_custom_call.1} parent=1 // pred_region
      _
    $region61: #{tpu_custom_call.1} parent=1 // pred_fallthru
      _
    // Predicated region
    $region62: #{tpu_custom_call.1} parent=1 // pred_check
      _
    $region63: #{tpu_custom_call.1} parent=1 // pred_check_branch
      %103 = sbr.rel (0) target = $region65
    $region64: #{tpu_custom_call.1} parent=1 // pred_region
      %104 = dma.done [#allocation3], 256
    $region65: #{tpu_custom_call.1} parent=1 // pred_fallthru
      _
    // Predicated region
    $region66: #{tpu_custom_call.1} parent=1 // pred_check
      _
    $region67: #{tpu_custom_call.1} parent=1 // pred_check_branch
      %106 = sbr.rel (0) target = $region69
    $region68: #{tpu_custom_call.1} parent=1 // pred_region
      %107 = dma.done [#allocation6], 128
    $region69: #{tpu_custom_call.1} parent=1 // pred_fallthru
      _
    // Predicated region
    $region70: #{tpu_custom_call.1} parent=1 // pred_check
      _
    $region71: #{tpu_custom_call.1} parent=1 // pred_check_branch
      %109 = sbr.rel (0) target = $region73
    $region72: #{tpu_custom_call.1} parent=1 // pred_region
      %110 = dma.done [#allocation6], 16
    $region73: #{tpu_custom_call.1} parent=1 // pred_fallthru
      _
    // Predicated region
    $region74: #{tpu_custom_call.1} parent=1 // pred_check
      _
    $region75: #{tpu_custom_call.1} parent=1 // pred_check_branch
      %112 = sbr.rel (0) target = $region77
    $region76: #{tpu_custom_call.1} parent=1 // pred_region
      %113 = dma.done [#allocation9], 32
    $region77: #{tpu_custom_call.1} parent=1 // pred_fallthru
      _
    // Predicated region
    $region78: #{tpu_custom_call.1} parent=1 // pred_check
      _
    $region79: #{tpu_custom_call.1} parent=1 // pred_check_branch
      %115 = sbr.rel (0) target = $region81
    $region80: #{tpu_custom_call.1} parent=1 // pred_region
      %116 = dma.done [#allocation9], 32
    $region81: #{tpu_custom_call.1} parent=1 // pred_fallthru
      _
    %v118 = vld [vmem:[#allocation2] sm:$0xff]
    %v119 = vld [vmem:[#allocation2 + $0x8] sm:$0xff]
    %v120 = vpack.c.bf16 %v119, %v118
    %v121 = vld [vmem:[#allocation5] sm:$0xf]
    %v122 = vld [vmem:[#allocation5 + $0x4] sm:$0xf]
    %v123 = vld [vmem:[#allocation7] sm:$0x1]
    %v125 = vlaneseq
    %v126 = vshrl.u32 %v125, 7
    %v127 = vsub.s32 0, %v126
    %v128 = vrot.slane %v123, %v127
    %v132 = vunpack.c.l.b16 %v121
    %v133 = vunpack.c.l.b16 %v122
    %v134 = vpack.c.b16 %v133, %v132
    %vm136 = vcmask 130048
    %v138 = vsel %vm136, %v120, 0
    %140 = vmatprep.subr.bf16.mxu0 0
    %141 = vmatpush1.bf16.msra.mxu0 %v134
    %142 = vmatprep.subr.bf16.mxu0 0
    %143 = vmatpush1.bf16.msra.mxu0 0
    %144 = vmatprep.subr.bf16.mxu0 0
    %145 = vmatpush1.bf16.msra.mxu0 0
    %146 = vmatprep.subr.bf16.mxu0 0
    %147 = vmatpush1.bf16.msra.mxu0 0
    %148 = vmatprep.subr.bf16.mxu0 0
    %149 = vmatpush1.bf16.msra.mxu0 0
    %150 = vmatprep.subr.bf16.mxu0 0
    %151 = vmatpush1.bf16.msra.mxu0 0
    %152 = vmatprep.subr.bf16.mxu0 0
    %153 = vmatpush1.bf16.msra.mxu0 0
    %154 = vmatprep.subr.bf16.mxu0 0
    %155 = vmatpush1.bf16.msra.mxu0 0
    %156 = vmatprep.subr.bf16.mxu0 0
    %157 = vmatpush1.bf16.msra.mxu0 0
    %158 = vmatprep.subr.bf16.mxu0 0
    %159 = vmatpush1.bf16.msra.mxu0 0
    %160 = vmatprep.subr.bf16.mxu0 0
    %161 = vmatpush1.bf16.msra.mxu0 0
    %162 = vmatprep.subr.bf16.mxu0 0
    %163 = vmatpush1.bf16.msra.mxu0 0
    %164 = vmatprep.subr.bf16.mxu0 0
    %165 = vmatpush1.bf16.msra.mxu0 0
    %166 = vmatprep.subr.bf16.mxu0 0
    %167 = vmatpush1.bf16.msra.mxu0 0
    %168 = vmatprep.subr.bf16.mxu0 0
    %169 = vmatpush1.bf16.msra.mxu0 0
    %170 = vmatprep.subr.bf16.mxu0 0
    %171 = vmatpush1.bf16.msra.mxu0 0
    %172 = vmatprep.mubr.bf16.mxu0 0
    %173 = vmatmul.mubr.bf16.gmra.mrb[0].mxu0 %v138
    %v174 = vpop.f32.mrb[0].mxu0
    %v175 = vadd.f32 %v128, %v174
    %v176 = vpop.f32.mrb[0].mxu0
    %v177 = vpop.f32.mrb[0].mxu0
    %v178 = vadd.f32 %v128, %v177
    %v179 = vpop.f32.mrb[0].mxu0
    %180 = vdwg.mxu0
    %vm181 = vcmp.ge.f32.partialorder %v175, 0.0
    %vm182 = vcmp.ge.f32.partialorder %v178, 0.0
    %v183 = vmul.f32 %v175, 0.1
    %v184 = vmul.f32 %v178, 0.1
    %v185 = vsel %vm181, %v175, %v183
    %v186 = vsel %vm182, %v178, %v184
    %v187 = vld [vmem:[%s3] sm:$0xf]
    %v188 = vld [vmem:[%s3 + $0x4] sm:$0xf]
    %v189 = vld [vmem:[%s3 + $0x8] sm:$0xf]
    %v190 = vld [vmem:[%s3 + $0xc] sm:$0xf]
    %v191 = vld [vmem:[%s4] sm:$0x1]
    %v192 = vld [vmem:[%s5] sm:$0xf]
    %v193 = vld [vmem:[%s5 + $0x4] sm:$0xf]
    %v194 = vld [vmem:[%s5 + $0x8] sm:$0xf]
    %v195 = vld [vmem:[%s5 + $0xc] sm:$0xf]
    %v196 = vld [vmem:[#allocation8] sm:$0x1]
    %v197 = vld [vmem:[%s7] sm:$0xf]
    %v198 = vld [vmem:[%s7 + $0x4] sm:$0xf]
    %v199 = vld [vmem:[%s7 + $0x8] sm:$0xf]
    %v200 = vld [vmem:[%s7 + $0xc] sm:$0xf]
    %v201 = vld [vmem:[#allocation10] sm:$0x1]
    %v202 = vld [vmem:[%s9] sm:$0xf]
    %v203 = vld [vmem:[%s9 + $0x4] sm:$0xf]
    %v204 = vld [vmem:[%s9 + $0x8] sm:$0xf]
    %v205 = vld [vmem:[%s9 + $0xc] sm:$0xf]
    %v206 = vld [vmem:[%s9 + $0x10] sm:$0xf]
    %v207 = vld [vmem:[%s9 + $0x14] sm:$0xf]
    %v208 = vld [vmem:[%s9 + $0x18] sm:$0xf]
    %v209 = vld [vmem:[%s9 + $0x1c] sm:$0xf]
    %v210 = vld [vmem:[%s10] sm:$0x1]
    %v211 = vld [vmem:[%s11] sm:$0x1]
    %v212 = vld [vmem:[%s12] sm:$0x1]
    %v213 = vld [vmem:[%s13] sm:$0x1]
    %v214 = vld [vmem:[%s14] sm:$0x1]
    %v215 = vpack.c.bf16 %v186, %v185
    %v217 = vlaneseq
    %v218 = vshrl.u32 %v217, 7
    %v219 = vsub.s32 0, %v218
    %v220 = vrot.slane %v191, %v219
    %v226 = vunpack.c.l.b16 %v187
    %v227 = vunpack.c.l.b16 %v188
    %v228 = vunpack.c.l.b16 %v189
    %v229 = vunpack.c.l.b16 %v190
    %v230 = vpack.c.b16 %v227, %v226
    %v231 = vpack.c.b16 %v229, %v228
    %vm234 = vcmask 261120
    %v236 = vsel %vm234, %v215, 0
    %238 = vmatprep.subr.bf16.mxu0 0
    %239 = vmatpush1.bf16.msra.mxu0 %v230
    %240 = vmatprep.subr.bf16.mxu0 0
    %241 = vmatpush1.bf16.msra.mxu0 %v231
    %242 = vmatprep.subr.bf16.mxu0 0
    %243 = vmatpush1.bf16.msra.mxu0 0
    %244 = vmatprep.subr.bf16.mxu0 0
    %245 = vmatpush1.bf16.msra.mxu0 0
    %246 = vmatprep.subr.bf16.mxu0 0
    %247 = vmatpush1.bf16.msra.mxu0 0
    %248 = vmatprep.subr.bf16.mxu0 0
    %249 = vmatpush1.bf16.msra.mxu0 0
    %250 = vmatprep.subr.bf16.mxu0 0
    %251 = vmatpush1.bf16.msra.mxu0 0
    %252 = vmatprep.subr.bf16.mxu0 0
    %253 = vmatpush1.bf16.msra.mxu0 0
    %254 = vmatprep.subr.bf16.mxu0 0
    %255 = vmatpush1.bf16.msra.mxu0 0
    %256 = vmatprep.subr.bf16.mxu0 0
    %257 = vmatpush1.bf16.msra.mxu0 0
    %258 = vmatprep.subr.bf16.mxu0 0
    %259 = vmatpush1.bf16.msra.mxu0 0
    %260 = vmatprep.subr.bf16.mxu0 0
    %261 = vmatpush1.bf16.msra.mxu0 0
    %262 = vmatprep.subr.bf16.mxu0 0
    %263 = vmatpush1.bf16.msra.mxu0 0
    %264 = vmatprep.subr.bf16.mxu0 0
    %265 = vmatpush1.bf16.msra.mxu0 0
    %266 = vmatprep.subr.bf16.mxu0 0
    %267 = vmatpush1.bf16.msra.mxu0 0
    %268 = vmatprep.subr.bf16.mxu0 0
    %269 = vmatpush1.bf16.msra.mxu0 0
    %270 = vmatprep.mubr.bf16.mxu0 0
    %271 = vmatmul.mubr.bf16.gmra.mrb[0].mxu0 %v236
    %v272 = vpop.f32.mrb[0].mxu0
    %v273 = vadd.f32 %v220, %v272
    %v274 = vpop.f32.mrb[0].mxu0
    %v275 = vpop.f32.mrb[0].mxu0
    %v276 = vadd.f32 %v220, %v275
    %v277 = vpop.f32.mrb[0].mxu0
    %278 = vdwg.mxu0
    %v279 = vmul.f32 %v273, 0.35355338
    %v280 = vmul.f32 %v276, 0.35355338
    %v281 = vpack.c.bf16 %v279, %v279
    %v282 = vpack.c.bf16 %v280, %v280
    %v283 = vpack.c.bf16 %v273, %v273
    %v284 = vpack.c.bf16 %v276, %v276
    %286 = vrot.lane.b32.xlu0 %v283, 96
    %v287 = vpop.permute.xlu0 %286
    %vm288 = vcmask 64512
    %v290 = vsel %vm288, %v281, 0
    %v293 = vsel %vm288, %v287, 0
    %295 = vmatprep.subr.bf16.mxu0 0
    %296 = vmatpush1.bf16.xpose.msra.mxu0 %v293
    %297 = vmatprep.subr.bf16.mxu0 0
    %298 = vmatpush1.bf16.xpose.msra.mxu0 0
    %299 = vmatprep.subr.bf16.mxu0 0
    %300 = vmatpush1.bf16.xpose.msra.mxu0 0
    %301 = vmatprep.subr.bf16.mxu0 0
    %302 = vmatpush1.bf16.xpose.msra.mxu0 0
    %303 = vmatprep.subr.bf16.mxu0 0
    %304 = vmatpush1.bf16.xpose.msra.mxu0 0
    %305 = vmatprep.subr.bf16.mxu0 0
    %306 = vmatpush1.bf16.xpose.msra.mxu0 0
    %307 = vmatprep.subr.bf16.mxu0 0
    %308 = vmatpush1.bf16.xpose.msra.mxu0 0
    %309 = vmatprep.subr.bf16.mxu0 0
    %310 = vmatpush1.bf16.xpose.msra.mxu0 0
    %311 = vmatprep.subr.bf16.mxu0 0
    %312 = vmatpush1.bf16.xpose.msra.mxu0 0
    %313 = vmatprep.subr.bf16.mxu0 0
    %314 = vmatpush1.bf16.xpose.msra.mxu0 0
    %315 = vmatprep.subr.bf16.mxu0 0
    %316 = vmatpush1.bf16.xpose.msra.mxu0 0
    %317 = vmatprep.subr.bf16.mxu0 0
    %318 = vmatpush1.bf16.xpose.msra.mxu0 0
    %319 = vmatprep.subr.bf16.mxu0 0
    %320 = vmatpush1.bf16.xpose.msra.mxu0 0
    %321 = vmatprep.subr.bf16.mxu0 0
    %322 = vmatpush1.bf16.xpose.msra.mxu0 0
    %323 = vmatprep.subr.bf16.mxu0 0
    %324 = vmatpush1.bf16.xpose.msra.mxu0 0
    %325 = vmatprep.subr.bf16.mxu0 0
    %326 = vmatpush1.bf16.xpose.msra.mxu0 0
    %327 = vmatprep.mubr.bf16.mxu0 0
    %328 = vmatmul.mubr.bf16.gmra.mrb[0].mxu0 %v290
    %v329 = vpop.f32.mrb[0].mxu0
    %v330 = vadd.f32 0.0, %v329
    %v331 = vpop.f32.mrb[0].mxu0
    %v332 = vpop.f32.mrb[0].mxu0
    %v333 = vpop.f32.mrb[0].mxu0
    %334 = vdwg.mxu0
    %336 = vrot.lane.b32.xlu0 %v284, 96
    %v337 = vpop.permute.xlu0 %336
    %v339 = vsel %vm288, %v282, 0
    %v342 = vsel %vm288, %v337, 0
    %344 = vmatprep.subr.bf16.mxu0 0
    %345 = vmatpush1.bf16.xpose.msra.mxu0 %v342
    %346 = vmatprep.subr.bf16.mxu0 0
    %347 = vmatpush1.bf16.xpose.msra.mxu0 0
    %348 = vmatprep.subr.bf16.mxu0 0
    %349 = vmatpush1.bf16.xpose.msra.mxu0 0
    %350 = vmatprep.subr.bf16.mxu0 0
    %351 = vmatpush1.bf16.xpose.msra.mxu0 0
    %352 = vmatprep.subr.bf16.mxu0 0
    %353 = vmatpush1.bf16.xpose.msra.mxu0 0
    %354 = vmatprep.subr.bf16.mxu0 0
    %355 = vmatpush1.bf16.xpose.msra.mxu0 0
    %356 = vmatprep.subr.bf16.mxu0 0
    %357 = vmatpush1.bf16.xpose.msra.mxu0 0
    %358 = vmatprep.subr.bf16.mxu0 0
    %359 = vmatpush1.bf16.xpose.msra.mxu0 0
    %360 = vmatprep.subr.bf16.mxu0 0
    %361 = vmatpush1.bf16.xpose.msra.mxu0 0
    %362 = vmatprep.subr.bf16.mxu0 0
    %363 = vmatpush1.bf16.xpose.msra.mxu0 0
    %364 = vmatprep.subr.bf16.mxu0 0
    %365 = vmatpush1.bf16.xpose.msra.mxu0 0
    %366 = vmatprep.subr.bf16.mxu0 0
    %367 = vmatpush1.bf16.xpose.msra.mxu0 0
    %368 = vmatprep.subr.bf16.mxu0 0
    %369 = vmatpush1.bf16.xpose.msra.mxu0 0
    %370 = vmatprep.subr.bf16.mxu0 0
    %371 = vmatpush1.bf16.xpose.msra.mxu0 0
    %372 = vmatprep.subr.bf16.mxu0 0
    %373 = vmatpush1.bf16.xpose.msra.mxu0 0
    %374 = vmatprep.subr.bf16.mxu0 0
    %375 = vmatpush1.bf16.xpose.msra.mxu0 0
    %376 = vmatprep.mubr.bf16.mxu0 0
    %377 = vmatmul.mubr.bf16.gmra.mrb[0].mxu0 %v339
    %v378 = vpop.f32.mrb[0].mxu0
    %v379 = vadd.f32 0.0, %v378
    %v380 = vpop.f32.mrb[0].mxu0
    %v381 = vpop.f32.mrb[0].mxu0
    %v382 = vpop.f32.mrb[0].mxu0
    %383 = vdwg.mxu0
    %v384 = vsel %vm288, %v330, -inf
    %385 = vmax.xlane.f32.xlu0 %v384
    %v386 = vpop.xlane.xlu0 %385
    %v387 = vsel %vm288, %v379, -inf
    %388 = vmax.xlane.f32.xlu0 %v387
    %v389 = vpop.xlane.xlu0 %388
    %v390 = vsub.f32 %v330, %v386
    %v391 = vsub.f32 %v379, %v389
    %v392 = vmul.f32 %v390, 1.442695
    %v393 = vpow.pop %v392
    %v394 = vmul.f32 %v391, 1.442695
    %v395 = vpow.pop %v394
    %v396 = vsel %vm288, %v393, 0.0
    %397 = vadd.xlane.f32.xlu0 %v396
    %v398 = vpop.xlane.xlu0 %397
    %v399 = vsel %vm288, %v395, 0.0
    %400 = vadd.xlane.f32.xlu0 %v399
    %v401 = vpop.xlane.xlu0 %400
    %v402 = vrcp.pop %v398
    %v403 = vmul.f32 %v393, %v402
    %v404 = vrcp.pop %v401
    %v405 = vmul.f32 %v395, %v404
    %v406 = vpack.c.bf16 %v403, %v403
    %v407 = vpack.c.bf16 %v405, %v405
    %408 = vrot.lane.b32.xlu0 %v283, 64
    %v409 = vpop.permute.xlu0 %408
    %v411 = vsel %vm288, %v406, 0
    %vm413 = vcmask 1043456
    %v415 = vsel %vm413, %v409, 0
    %417 = vmatprep.subr.bf16.mxu0 0
    %418 = vmatpush1.bf16.msra.mxu0 %v415
    %419 = vmatprep.subr.bf16.mxu0 0
    %420 = vmatpush1.bf16.msra.mxu0 0
    %421 = vmatprep.subr.bf16.mxu0 0
    %422 = vmatpush1.bf16.msra.mxu0 0
    %423 = vmatprep.subr.bf16.mxu0 0
    %424 = vmatpush1.bf16.msra.mxu0 0
    %425 = vmatprep.subr.bf16.mxu0 0
    %426 = vmatpush1.bf16.msra.mxu0 0
    %427 = vmatprep.subr.bf16.mxu0 0
    %428 = vmatpush1.bf16.msra.mxu0 0
    %429 = vmatprep.subr.bf16.mxu0 0
    %430 = vmatpush1.bf16.msra.mxu0 0
    %431 = vmatprep.subr.bf16.mxu0 0
    %432 = vmatpush1.bf16.msra.mxu0 0
    %433 = vmatprep.subr.bf16.mxu0 0
    %434 = vmatpush1.bf16.msra.mxu0 0
    %435 = vmatprep.subr.bf16.mxu0 0
    %436 = vmatpush1.bf16.msra.mxu0 0
    %437 = vmatprep.subr.bf16.mxu0 0
    %438 = vmatpush1.bf16.msra.mxu0 0
    %439 = vmatprep.subr.bf16.mxu0 0
    %440 = vmatpush1.bf16.msra.mxu0 0
    %441 = vmatprep.subr.bf16.mxu0 0
    %442 = vmatpush1.bf16.msra.mxu0 0
    %443 = vmatprep.subr.bf16.mxu0 0
    %444 = vmatpush1.bf16.msra.mxu0 0
    %445 = vmatprep.subr.bf16.mxu0 0
    %446 = vmatpush1.bf16.msra.mxu0 0
    %447 = vmatprep.subr.bf16.mxu0 0
    %448 = vmatpush1.bf16.msra.mxu0 0
    %449 = vmatprep.mubr.bf16.mxu0 0
    %450 = vmatmul.mubr.bf16.gmra.mrb[0].mxu0 %v411
    %v451 = vpop.f32.mrb[0].mxu0
    %v452 = vadd.f32 0.0, %v451
    %v453 = vpop.f32.mrb[0].mxu0
    %v454 = vpop.f32.mrb[0].mxu0
    %v455 = vpop.f32.mrb[0].mxu0
    %456 = vdwg.mxu0
    %457 = vrot.lane.b32.xlu0 %v284, 64
    %v458 = vpop.permute.xlu0 %457
    %v460 = vsel %vm288, %v407, 0
    %v463 = vsel %vm413, %v458, 0
    %465 = vmatprep.subr.bf16.mxu0 0
    %466 = vmatpush1.bf16.msra.mxu0 %v463
    %467 = vmatprep.subr.bf16.mxu0 0
    %468 = vmatpush1.bf16.msra.mxu0 0
    %469 = vmatprep.subr.bf16.mxu0 0
    %470 = vmatpush1.bf16.msra.mxu0 0
    %471 = vmatprep.subr.bf16.mxu0 0
    %472 = vmatpush1.bf16.msra.mxu0 0
    %473 = vmatprep.subr.bf16.mxu0 0
    %474 = vmatpush1.bf16.msra.mxu0 0
    %475 = vmatprep.subr.bf16.mxu0 0
    %476 = vmatpush1.bf16.msra.mxu0 0
    %477 = vmatprep.subr.bf16.mxu0 0
    %478 = vmatpush1.bf16.msra.mxu0 0
    %479 = vmatprep.subr.bf16.mxu0 0
    %480 = vmatpush1.bf16.msra.mxu0 0
    %481 = vmatprep.subr.bf16.mxu0 0
    %482 = vmatpush1.bf16.msra.mxu0 0
    %483 = vmatprep.subr.bf16.mxu0 0
    %484 = vmatpush1.bf16.msra.mxu0 0
    %485 = vmatprep.subr.bf16.mxu0 0
    %486 = vmatpush1.bf16.msra.mxu0 0
    %487 = vmatprep.subr.bf16.mxu0 0
    %488 = vmatpush1.bf16.msra.mxu0 0
    %489 = vmatprep.subr.bf16.mxu0 0
    %490 = vmatpush1.bf16.msra.mxu0 0
    %491 = vmatprep.subr.bf16.mxu0 0
    %492 = vmatpush1.bf16.msra.mxu0 0
    %493 = vmatprep.subr.bf16.mxu0 0
    %494 = vmatpush1.bf16.msra.mxu0 0
    %495 = vmatprep.subr.bf16.mxu0 0
    %496 = vmatpush1.bf16.msra.mxu0 0
    %497 = vmatprep.mubr.bf16.mxu0 0
    %498 = vmatmul.mubr.bf16.gmra.mrb[0].mxu0 %v460
    %v499 = vpop.f32.mrb[0].mxu0
    %v500 = vadd.f32 0.0, %v499
    %v501 = vpop.f32.mrb[0].mxu0
    %v502 = vpop.f32.mrb[0].mxu0
    %v503 = vpop.f32.mrb[0].mxu0
    %504 = vdwg.mxu0
    %506 = vrot.lane.b32.xlu0 %v281, 120
    %v507 = vpop.permute.xlu0 %506
    %508 = vrot.lane.b32.xlu0 %v283, 88
    %v509 = vpop.permute.xlu0 %508
    %v511 = vsel %vm288, %v507, 0
    %v514 = vsel %vm288, %v509, 0
    %516 = vmatprep.subr.bf16.mxu0 0
    %517 = vmatpush1.bf16.xpose.msra.mxu0 %v514
    %518 = vmatprep.subr.bf16.mxu0 0
    %519 = vmatpush1.bf16.xpose.msra.mxu0 0
    %520 = vmatprep.subr.bf16.mxu0 0
    %521 = vmatpush1.bf16.xpose.msra.mxu0 0
    %522 = vmatprep.subr.bf16.mxu0 0
    %523 = vmatpush1.bf16.xpose.msra.mxu0 0
    %524 = vmatprep.subr.bf16.mxu0 0
    %525 = vmatpush1.bf16.xpose.msra.mxu0 0
    %526 = vmatprep.subr.bf16.mxu0 0
    %527 = vmatpush1.bf16.xpose.msra.mxu0 0
    %528 = vmatprep.subr.bf16.mxu0 0
    %529 = vmatpush1.bf16.xpose.msra.mxu0 0
    %530 = vmatprep.subr.bf16.mxu0 0
    %531 = vmatpush1.bf16.xpose.msra.mxu0 0
    %532 = vmatprep.subr.bf16.mxu0 0
    %533 = vmatpush1.bf16.xpose.msra.mxu0 0
    %534 = vmatprep.subr.bf16.mxu0 0
    %535 = vmatpush1.bf16.xpose.msra.mxu0 0
    %536 = vmatprep.subr.bf16.mxu0 0
    %537 = vmatpush1.bf16.xpose.msra.mxu0 0
    %538 = vmatprep.subr.bf16.mxu0 0
    %539 = vmatpush1.bf16.xpose.msra.mxu0 0
    %540 = vmatprep.subr.bf16.mxu0 0
    %541 = vmatpush1.bf16.xpose.msra.mxu0 0
    %542 = vmatprep.subr.bf16.mxu0 0
    %543 = vmatpush1.bf16.xpose.msra.mxu0 0
    %544 = vmatprep.subr.bf16.mxu0 0
    %545 = vmatpush1.bf16.xpose.msra.mxu0 0
    %546 = vmatprep.subr.bf16.mxu0 0
    %547 = vmatpush1.bf16.xpose.msra.mxu0 0
    %548 = vmatprep.mubr.bf16.mxu0 0
    %549 = vmatmul.mubr.bf16.gmra.mrb[0].mxu0 %v511
    %v550 = vpop.f32.mrb[0].mxu0
    %v551 = vadd.f32 0.0, %v550
    %v552 = vpop.f32.mrb[0].mxu0
    %v553 = vpop.f32.mrb[0].mxu0
    %v554 = vpop.f32.mrb[0].mxu0
    %555 = vdwg.mxu0
    %557 = vrot.lane.b32.xlu0 %v282, 120
    %v558 = vpop.permute.xlu0 %557
    %559 = vrot.lane.b32.xlu0 %v284, 88
    %v560 = vpop.permute.xlu0 %559
    %v562 = vsel %vm288, %v558, 0
    %v565 = vsel %vm288, %v560, 0
    %567 = vmatprep.subr.bf16.mxu0 0
    %568 = vmatpush1.bf16.xpose.msra.mxu0 %v565
    %569 = vmatprep.subr.bf16.mxu0 0
    %570 = vmatpush1.bf16.xpose.msra.mxu0 0
    %571 = vmatprep.subr.bf16.mxu0 0
    %572 = vmatpush1.bf16.xpose.msra.mxu0 0
    %573 = vmatprep.subr.bf16.mxu0 0
    %574 = vmatpush1.bf16.xpose.msra.mxu0 0
    %575 = vmatprep.subr.bf16.mxu0 0
    %576 = vmatpush1.bf16.xpose.msra.mxu0 0
    %577 = vmatprep.subr.bf16.mxu0 0
    %578 = vmatpush1.bf16.xpose.msra.mxu0 0
    %579 = vmatprep.subr.bf16.mxu0 0
    %580 = vmatpush1.bf16.xpose.msra.mxu0 0
    %581 = vmatprep.subr.bf16.mxu0 0
    %582 = vmatpush1.bf16.xpose.msra.mxu0 0
    %583 = vmatprep.subr.bf16.mxu0 0
    %584 = vmatpush1.bf16.xpose.msra.mxu0 0
    %585 = vmatprep.subr.bf16.mxu0 0
    %586 = vmatpush1.bf16.xpose.msra.mxu0 0
    %587 = vmatprep.subr.bf16.mxu0 0
    %588 = vmatpush1.bf16.xpose.msra.mxu0 0
    %589 = vmatprep.subr.bf16.mxu0 0
    %590 = vmatpush1.bf16.xpose.msra.mxu0 0
    %591 = vmatprep.subr.bf16.mxu0 0
    %592 = vmatpush1.bf16.xpose.msra.mxu0 0
    %593 = vmatprep.subr.bf16.mxu0 0
    %594 = vmatpush1.bf16.xpose.msra.mxu0 0
    %595 = vmatprep.subr.bf16.mxu0 0
    %596 = vmatpush1.bf16.xpose.msra.mxu0 0
    %597 = vmatprep.subr.bf16.mxu0 0
    %598 = vmatpush1.bf16.xpose.msra.mxu0 0
    %599 = vmatprep.mubr.bf16.mxu0 0
    %600 = vmatmul.mubr.bf16.gmra.mrb[0].mxu0 %v562
    %v601 = vpop.f32.mrb[0].mxu0
    %v602 = vadd.f32 0.0, %v601
    %v603 = vpop.f32.mrb[0].mxu0
    %v604 = vpop.f32.mrb[0].mxu0
    %v605 = vpop.f32.mrb[0].mxu0
    %606 = vdwg.mxu0
    %v607 = vsel %vm288, %v551, -inf
    %608 = vmax.xlane.f32.xlu0 %v607
    %v609 = vpop.xlane.xlu0 %608
    %v610 = vsel %vm288, %v602, -inf
    %611 = vmax.xlane.f32.xlu0 %v610
    %v612 = vpop.xlane.xlu0 %611
    %v613 = vsub.f32 %v551, %v609
    %v614 = vsub.f32 %v602, %v612
    %v615 = vmul.f32 %v613, 1.442695
    %v616 = vpow.pop %v615
    %v617 = vmul.f32 %v614, 1.442695
    %v618 = vpow.pop %v617
    %v619 = vsel %vm288, %v616, 0.0
    %620 = vadd.xlane.f32.xlu0 %v619
    %v621 = vpop.xlane.xlu0 %620
    %v622 = vsel %vm288, %v618, 0.0
    %623 = vadd.xlane.f32.xlu0 %v622
    %v624 = vpop.xlane.xlu0 %623
    %v625 = vrcp.pop %v621
    %v626 = vmul.f32 %v616, %v625
    %v627 = vrcp.pop %v624
    %v628 = vmul.f32 %v618, %v627
    %v629 = vpack.c.bf16 %v626, %v626
    %v630 = vpack.c.bf16 %v628, %v628
    %631 = vrot.lane.b32.xlu0 %v283, 56
    %v632 = vpop.permute.xlu0 %631
    %v634 = vsel %vm288, %v629, 0
    %v637 = vsel %vm413, %v632, 0
    %639 = vmatprep.subr.bf16.mxu0 0
    %640 = vmatpush1.bf16.msra.mxu0 %v637
    %641 = vmatprep.subr.bf16.mxu0 0
    %642 = vmatpush1.bf16.msra.mxu0 0
    %643 = vmatprep.subr.bf16.mxu0 0
    %644 = vmatpush1.bf16.msra.mxu0 0
    %645 = vmatprep.subr.bf16.mxu0 0
    %646 = vmatpush1.bf16.msra.mxu0 0
    %647 = vmatprep.subr.bf16.mxu0 0
    %648 = vmatpush1.bf16.msra.mxu0 0
    %649 = vmatprep.subr.bf16.mxu0 0
    %650 = vmatpush1.bf16.msra.mxu0 0
    %651 = vmatprep.subr.bf16.mxu0 0
    %652 = vmatpush1.bf16.msra.mxu0 0
    %653 = vmatprep.subr.bf16.mxu0 0
    %654 = vmatpush1.bf16.msra.mxu0 0
    %655 = vmatprep.subr.bf16.mxu0 0
    %656 = vmatpush1.bf16.msra.mxu0 0
    %657 = vmatprep.subr.bf16.mxu0 0
    %658 = vmatpush1.bf16.msra.mxu0 0
    %659 = vmatprep.subr.bf16.mxu0 0
    %660 = vmatpush1.bf16.msra.mxu0 0
    %661 = vmatprep.subr.bf16.mxu0 0
    %662 = vmatpush1.bf16.msra.mxu0 0
    %663 = vmatprep.subr.bf16.mxu0 0
    %664 = vmatpush1.bf16.msra.mxu0 0
    %665 = vmatprep.subr.bf16.mxu0 0
    %666 = vmatpush1.bf16.msra.mxu0 0
    %667 = vmatprep.subr.bf16.mxu0 0
    %668 = vmatpush1.bf16.msra.mxu0 0
    %669 = vmatprep.subr.bf16.mxu0 0
    %670 = vmatpush1.bf16.msra.mxu0 0
    %671 = vmatprep.mubr.bf16.mxu0 0
    %672 = vmatmul.mubr.bf16.gmra.mrb[0].mxu0 %v634
    %v673 = vpop.f32.mrb[0].mxu0
    %v674 = vadd.f32 0.0, %v673
    %v675 = vpop.f32.mrb[0].mxu0
    %v676 = vpop.f32.mrb[0].mxu0
    %v677 = vpop.f32.mrb[0].mxu0
    %678 = vdwg.mxu0
    %679 = vrot.lane.b32.xlu0 %v284, 56
    %v680 = vpop.permute.xlu0 %679
    %v682 = vsel %vm288, %v630, 0
    %v685 = vsel %vm413, %v680, 0
    %687 = vmatprep.subr.bf16.mxu0 0
    %688 = vmatpush1.bf16.msra.mxu0 %v685
    %689 = vmatprep.subr.bf16.mxu0 0
    %690 = vmatpush1.bf16.msra.mxu0 0
    %691 = vmatprep.subr.bf16.mxu0 0
    %692 = vmatpush1.bf16.msra.mxu0 0
    %693 = vmatprep.subr.bf16.mxu0 0
    %694 = vmatpush1.bf16.msra.mxu0 0
    %695 = vmatprep.subr.bf16.mxu0 0
    %696 = vmatpush1.bf16.msra.mxu0 0
    %697 = vmatprep.subr.bf16.mxu0 0
    %698 = vmatpush1.bf16.msra.mxu0 0
    %699 = vmatprep.subr.bf16.mxu0 0
    %700 = vmatpush1.bf16.msra.mxu0 0
    %701 = vmatprep.subr.bf16.mxu0 0
    %702 = vmatpush1.bf16.msra.mxu0 0
    %703 = vmatprep.subr.bf16.mxu0 0
    %704 = vmatpush1.bf16.msra.mxu0 0
    %705 = vmatprep.subr.bf16.mxu0 0
    %706 = vmatpush1.bf16.msra.mxu0 0
    %707 = vmatprep.subr.bf16.mxu0 0
    %708 = vmatpush1.bf16.msra.mxu0 0
    %709 = vmatprep.subr.bf16.mxu0 0
    %710 = vmatpush1.bf16.msra.mxu0 0
    %711 = vmatprep.subr.bf16.mxu0 0
    %712 = vmatpush1.bf16.msra.mxu0 0
    %713 = vmatprep.subr.bf16.mxu0 0
    %714 = vmatpush1.bf16.msra.mxu0 0
    %715 = vmatprep.subr.bf16.mxu0 0
    %716 = vmatpush1.bf16.msra.mxu0 0
    %717 = vmatprep.subr.bf16.mxu0 0
    %718 = vmatpush1.bf16.msra.mxu0 0
    %719 = vmatprep.mubr.bf16.mxu0 0
    %720 = vmatmul.mubr.bf16.gmra.mrb[0].mxu0 %v682
    %v721 = vpop.f32.mrb[0].mxu0
    %v722 = vadd.f32 0.0, %v721
    %v723 = vpop.f32.mrb[0].mxu0
    %v724 = vpop.f32.mrb[0].mxu0
    %v725 = vpop.f32.mrb[0].mxu0
    %726 = vdwg.mxu0
    %727 = vrot.lane.b32.xlu0 %v281, 112
    %v728 = vpop.permute.xlu0 %727
    %729 = vrot.lane.b32.xlu0 %v283, 80
    %v730 = vpop.permute.xlu0 %729
    %v732 = vsel %vm288, %v728, 0
    %v735 = vsel %vm288, %v730, 0
    %737 = vmatprep.subr.bf16.mxu0 0
    %738 = vmatpush1.bf16.xpose.msra.mxu0 %v735
    %739 = vmatprep.subr.bf16.mxu0 0
    %740 = vmatpush1.bf16.xpose.msra.mxu0 0
    %741 = vmatprep.subr.bf16.mxu0 0
    %742 = vmatpush1.bf16.xpose.msra.mxu0 0
    %743 = vmatprep.subr.bf16.mxu0 0
    %744 = vmatpush1.bf16.xpose.msra.mxu0 0
    %745 = vmatprep.subr.bf16.mxu0 0
    %746 = vmatpush1.bf16.xpose.msra.mxu0 0
    %747 = vmatprep.subr.bf16.mxu0 0
    %748 = vmatpush1.bf16.xpose.msra.mxu0 0
    %749 = vmatprep.subr.bf16.mxu0 0
    %750 = vmatpush1.bf16.xpose.msra.mxu0 0
    %751 = vmatprep.subr.bf16.mxu0 0
    %752 = vmatpush1.bf16.xpose.msra.mxu0 0
    %753 = vmatprep.subr.bf16.mxu0 0
    %754 = vmatpush1.bf16.xpose.msra.mxu0 0
    %755 = vmatprep.subr.bf16.mxu0 0
    %756 = vmatpush1.bf16.xpose.msra.mxu0 0
    %757 = vmatprep.subr.bf16.mxu0 0
    %758 = vmatpush1.bf16.xpose.msra.mxu0 0
    %759 = vmatprep.subr.bf16.mxu0 0
    %760 = vmatpush1.bf16.xpose.msra.mxu0 0
    %761 = vmatprep.subr.bf16.mxu0 0
    %762 = vmatpush1.bf16.xpose.msra.mxu0 0
    %763 = vmatprep.subr.bf16.mxu0 0
    %764 = vmatpush1.bf16.xpose.msra.mxu0 0
    %765 = vmatprep.subr.bf16.mxu0 0
    %766 = vmatpush1.bf16.xpose.msra.mxu0 0
    %767 = vmatprep.subr.bf16.mxu0 0
    %768 = vmatpush1.bf16.xpose.msra.mxu0 0
    %769 = vmatprep.mubr.bf16.mxu0 0
    %770 = vmatmul.mubr.bf16.gmra.mrb[0].mxu0 %v732
    %v771 = vpop.f32.mrb[0].mxu0
    %v772 = vadd.f32 0.0, %v771
    %v773 = vpop.f32.mrb[0].mxu0
    %v774 = vpop.f32.mrb[0].mxu0
    %v775 = vpop.f32.mrb[0].mxu0
    %776 = vdwg.mxu0
    %777 = vrot.lane.b32.xlu0 %v282, 112
    %v778 = vpop.permute.xlu0 %777
    %779 = vrot.lane.b32.xlu0 %v284, 80
    %v780 = vpop.permute.xlu0 %779
    %v782 = vsel %vm288, %v778, 0
    %v785 = vsel %vm288, %v780, 0
    %787 = vmatprep.subr.bf16.mxu0 0
    %788 = vmatpush1.bf16.xpose.msra.mxu0 %v785
    %789 = vmatprep.subr.bf16.mxu0 0
    %790 = vmatpush1.bf16.xpose.msra.mxu0 0
    %791 = vmatprep.subr.bf16.mxu0 0
    %792 = vmatpush1.bf16.xpose.msra.mxu0 0
    %793 = vmatprep.subr.bf16.mxu0 0
    %794 = vmatpush1.bf16.xpose.msra.mxu0 0
    %795 = vmatprep.subr.bf16.mxu0 0
    %796 = vmatpush1.bf16.xpose.msra.mxu0 0
    %797 = vmatprep.subr.bf16.mxu0 0
    %798 = vmatpush1.bf16.xpose.msra.mxu0 0
    %799 = vmatprep.subr.bf16.mxu0 0
    %800 = vmatpush1.bf16.xpose.msra.mxu0 0
    %801 = vmatprep.subr.bf16.mxu0 0
    %802 = vmatpush1.bf16.xpose.msra.mxu0 0
    %803 = vmatprep.subr.bf16.mxu0 0
    %804 = vmatpush1.bf16.xpose.msra.mxu0 0
    %805 = vmatprep.subr.bf16.mxu0 0
    %806 = vmatpush1.bf16.xpose.msra.mxu0 0
    %807 = vmatprep.subr.bf16.mxu0 0
    %808 = vmatpush1.bf16.xpose.msra.mxu0 0
    %809 = vmatprep.subr.bf16.mxu0 0
    %810 = vmatpush1.bf16.xpose.msra.mxu0 0
    %811 = vmatprep.subr.bf16.mxu0 0
    %812 = vmatpush1.bf16.xpose.msra.mxu0 0
    %813 = vmatprep.subr.bf16.mxu0 0
    %814 = vmatpush1.bf16.xpose.msra.mxu0 0
    %815 = vmatprep.subr.bf16.mxu0 0
    %816 = vmatpush1.bf16.xpose.msra.mxu0 0
    %817 = vmatprep.subr.bf16.mxu0 0
    %818 = vmatpush1.bf16.xpose.msra.mxu0 0
    %819 = vmatprep.mubr.bf16.mxu0 0
    %820 = vmatmul.mubr.bf16.gmra.mrb[0].mxu0 %v782
    %v821 = vpop.f32.mrb[0].mxu0
    %v822 = vadd.f32 0.0, %v821
    %v823 = vpop.f32.mrb[0].mxu0
    %v824 = vpop.f32.mrb[0].mxu0
    %v825 = vpop.f32.mrb[0].mxu0
    %826 = vdwg.mxu0
    %v827 = vsel %vm288, %v772, -inf
    %828 = vmax.xlane.f32.xlu0 %v827
    %v829 = vpop.xlane.xlu0 %828
    %v830 = vsel %vm288, %v822, -inf
    %831 = vmax.xlane.f32.xlu0 %v830
    %v832 = vpop.xlane.xlu0 %831
    %v833 = vsub.f32 %v772, %v829
    %v834 = vsub.f32 %v822, %v832
    %v835 = vmul.f32 %v833, 1.442695
    %v836 = vpow.pop %v835
    %v837 = vmul.f32 %v834, 1.442695
    %v838 = vpow.pop %v837
    %v839 = vsel %vm288, %v836, 0.0
    %840 = vadd.xlane.f32.xlu0 %v839
    %v841 = vpop.xlane.xlu0 %840
    %v842 = vsel %vm288, %v838, 0.0
    %843 = vadd.xlane.f32.xlu0 %v842
    %v844 = vpop.xlane.xlu0 %843
    %v845 = vrcp.pop %v841
    %v846 = vmul.f32 %v836, %v845
    %v847 = vrcp.pop %v844
    %v848 = vmul.f32 %v838, %v847
    %v849 = vpack.c.bf16 %v846, %v846
    %v850 = vpack.c.bf16 %v848, %v848
    %851 = vrot.lane.b32.xlu0 %v283, 48
    %v852 = vpop.permute.xlu0 %851
    %v854 = vsel %vm288, %v849, 0
    %v857 = vsel %vm413, %v852, 0
    %859 = vmatprep.subr.bf16.mxu0 0
    %860 = vmatpush1.bf16.msra.mxu0 %v857
    %861 = vmatprep.subr.bf16.mxu0 0
    %862 = vmatpush1.bf16.msra.mxu0 0
    %863 = vmatprep.subr.bf16.mxu0 0
    %864 = vmatpush1.bf16.msra.mxu0 0
    %865 = vmatprep.subr.bf16.mxu0 0
    %866 = vmatpush1.bf16.msra.mxu0 0
    %867 = vmatprep.subr.bf16.mxu0 0
    %868 = vmatpush1.bf16.msra.mxu0 0
    %869 = vmatprep.subr.bf16.mxu0 0
    %870 = vmatpush1.bf16.msra.mxu0 0
    %871 = vmatprep.subr.bf16.mxu0 0
    %872 = vmatpush1.bf16.msra.mxu0 0
    %873 = vmatprep.subr.bf16.mxu0 0
    %874 = vmatpush1.bf16.msra.mxu0 0
    %875 = vmatprep.subr.bf16.mxu0 0
    %876 = vmatpush1.bf16.msra.mxu0 0
    %877 = vmatprep.subr.bf16.mxu0 0
    %878 = vmatpush1.bf16.msra.mxu0 0
    %879 = vmatprep.subr.bf16.mxu0 0
    %880 = vmatpush1.bf16.msra.mxu0 0
    %881 = vmatprep.subr.bf16.mxu0 0
    %882 = vmatpush1.bf16.msra.mxu0 0
    %883 = vmatprep.subr.bf16.mxu0 0
    %884 = vmatpush1.bf16.msra.mxu0 0
    %885 = vmatprep.subr.bf16.mxu0 0
    %886 = vmatpush1.bf16.msra.mxu0 0
    %887 = vmatprep.subr.bf16.mxu0 0
    %888 = vmatpush1.bf16.msra.mxu0 0
    %889 = vmatprep.subr.bf16.mxu0 0
    %890 = vmatpush1.bf16.msra.mxu0 0
    %891 = vmatprep.mubr.bf16.mxu0 0
    %892 = vmatmul.mubr.bf16.gmra.mrb[0].mxu0 %v854
    %v893 = vpop.f32.mrb[0].mxu0
    %v894 = vadd.f32 0.0, %v893
    %v895 = vpop.f32.mrb[0].mxu0
    %v896 = vpop.f32.mrb[0].mxu0
    %v897 = vpop.f32.mrb[0].mxu0
    %898 = vdwg.mxu0
    %899 = vrot.lane.b32.xlu0 %v284, 48
    %v900 = vpop.permute.xlu0 %899
    %v902 = vsel %vm288, %v850, 0
    %v905 = vsel %vm413, %v900, 0
    %907 = vmatprep.subr.bf16.mxu0 0
    %908 = vmatpush1.bf16.msra.mxu0 %v905
    %909 = vmatprep.subr.bf16.mxu0 0
    %910 = vmatpush1.bf16.msra.mxu0 0
    %911 = vmatprep.subr.bf16.mxu0 0
    %912 = vmatpush1.bf16.msra.mxu0 0
    %913 = vmatprep.subr.bf16.mxu0 0
    %914 = vmatpush1.bf16.msra.mxu0 0
    %915 = vmatprep.subr.bf16.mxu0 0
    %916 = vmatpush1.bf16.msra.mxu0 0
    %917 = vmatprep.subr.bf16.mxu0 0
    %918 = vmatpush1.bf16.msra.mxu0 0
    %919 = vmatprep.subr.bf16.mxu0 0
    %920 = vmatpush1.bf16.msra.mxu0 0
    %921 = vmatprep.subr.bf16.mxu0 0
    %922 = vmatpush1.bf16.msra.mxu0 0
    %923 = vmatprep.subr.bf16.mxu0 0
    %924 = vmatpush1.bf16.msra.mxu0 0
    %925 = vmatprep.subr.bf16.mxu0 0
    %926 = vmatpush1.bf16.msra.mxu0 0
    %927 = vmatprep.subr.bf16.mxu0 0
    %928 = vmatpush1.bf16.msra.mxu0 0
    %929 = vmatprep.subr.bf16.mxu0 0
    %930 = vmatpush1.bf16.msra.mxu0 0
    %931 = vmatprep.subr.bf16.mxu0 0
    %932 = vmatpush1.bf16.msra.mxu0 0
    %933 = vmatprep.subr.bf16.mxu0 0
    %934 = vmatpush1.bf16.msra.mxu0 0
    %935 = vmatprep.subr.bf16.mxu0 0
    %936 = vmatpush1.bf16.msra.mxu0 0
    %937 = vmatprep.subr.bf16.mxu0 0
    %938 = vmatpush1.bf16.msra.mxu0 0
    %939 = vmatprep.mubr.bf16.mxu0 0
    %940 = vmatmul.mubr.bf16.gmra.mrb[0].mxu0 %v902
    %v941 = vpop.f32.mrb[0].mxu0
    %v942 = vadd.f32 0.0, %v941
    %v943 = vpop.f32.mrb[0].mxu0
    %v944 = vpop.f32.mrb[0].mxu0
    %v945 = vpop.f32.mrb[0].mxu0
    %946 = vdwg.mxu0
    %947 = vrot.lane.b32.xlu0 %v281, 104
    %v948 = vpop.permute.xlu0 %947
    %949 = vrot.lane.b32.xlu0 %v283, 72
    %v950 = vpop.permute.xlu0 %949
    %v952 = vsel %vm288, %v948, 0
    %v955 = vsel %vm288, %v950, 0
    %957 = vmatprep.subr.bf16.mxu0 0
    %958 = vmatpush1.bf16.xpose.msra.mxu0 %v955
    %959 = vmatprep.subr.bf16.mxu0 0
    %960 = vmatpush1.bf16.xpose.msra.mxu0 0
    %961 = vmatprep.subr.bf16.mxu0 0
    %962 = vmatpush1.bf16.xpose.msra.mxu0 0
    %963 = vmatprep.subr.bf16.mxu0 0
    %964 = vmatpush1.bf16.xpose.msra.mxu0 0
    %965 = vmatprep.subr.bf16.mxu0 0
    %966 = vmatpush1.bf16.xpose.msra.mxu0 0
    %967 = vmatprep.subr.bf16.mxu0 0
    %968 = vmatpush1.bf16.xpose.msra.mxu0 0
    %969 = vmatprep.subr.bf16.mxu0 0
    %970 = vmatpush1.bf16.xpose.msra.mxu0 0
    %971 = vmatprep.subr.bf16.mxu0 0
    %972 = vmatpush1.bf16.xpose.msra.mxu0 0
    %973 = vmatprep.subr.bf16.mxu0 0
    %974 = vmatpush1.bf16.xpose.msra.mxu0 0
    %975 = vmatprep.subr.bf16.mxu0 0
    %976 = vmatpush1.bf16.xpose.msra.mxu0 0
    %977 = vmatprep.subr.bf16.mxu0 0
    %978 = vmatpush1.bf16.xpose.msra.mxu0 0
    %979 = vmatprep.subr.bf16.mxu0 0
    %980 = vmatpush1.bf16.xpose.msra.mxu0 0
    %981 = vmatprep.subr.bf16.mxu0 0
    %982 = vmatpush1.bf16.xpose.msra.mxu0 0
    %983 = vmatprep.subr.bf16.mxu0 0
    %984 = vmatpush1.bf16.xpose.msra.mxu0 0
    %985 = vmatprep.subr.bf16.mxu0 0
    %986 = vmatpush1.bf16.xpose.msra.mxu0 0
    %987 = vmatprep.subr.bf16.mxu0 0
    %988 = vmatpush1.bf16.xpose.msra.mxu0 0
    %989 = vmatprep.mubr.bf16.mxu0 0
    %990 = vmatmul.mubr.bf16.gmra.mrb[0].mxu0 %v952
    %v991 = vpop.f32.mrb[0].mxu0
    %v992 = vadd.f32 0.0, %v991
    %v993 = vpop.f32.mrb[0].mxu0
    %v994 = vpop.f32.mrb[0].mxu0
    %v995 = vpop.f32.mrb[0].mxu0
    %996 = vdwg.mxu0
    %997 = vrot.lane.b32.xlu0 %v282, 104
    %v998 = vpop.permute.xlu0 %997
    %999 = vrot.lane.b32.xlu0 %v284, 72
    %v1000 = vpop.permute.xlu0 %999
    %v1002 = vsel %vm288, %v998, 0
    %v1005 = vsel %vm288, %v1000, 0
    %1007 = vmatprep.subr.bf16.mxu0 0
    %1008 = vmatpush1.bf16.xpose.msra.mxu0 %v1005
    %1009 = vmatprep.subr.bf16.mxu0 0
    %1010 = vmatpush1.bf16.xpose.msra.mxu0 0
    %1011 = vmatprep.subr.bf16.mxu0 0
    %1012 = vmatpush1.bf16.xpose.msra.mxu0 0
    %1013 = vmatprep.subr.bf16.mxu0 0
    %1014 = vmatpush1.bf16.xpose.msra.mxu0 0
    %1015 = vmatprep.subr.bf16.mxu0 0
    %1016 = vmatpush1.bf16.xpose.msra.mxu0 0
    %1017 = vmatprep.subr.bf16.mxu0 0
    %1018 = vmatpush1.bf16.xpose.msra.mxu0 0
    %1019 = vmatprep.subr.bf16.mxu0 0
    %1020 = vmatpush1.bf16.xpose.msra.mxu0 0
    %1021 = vmatprep.subr.bf16.mxu0 0
    %1022 = vmatpush1.bf16.xpose.msra.mxu0 0
    %1023 = vmatprep.subr.bf16.mxu0 0
    %1024 = vmatpush1.bf16.xpose.msra.mxu0 0
    %1025 = vmatprep.subr.bf16.mxu0 0
    %1026 = vmatpush1.bf16.xpose.msra.mxu0 0
    %1027 = vmatprep.subr.bf16.mxu0 0
    %1028 = vmatpush1.bf16.xpose.msra.mxu0 0
    %1029 = vmatprep.subr.bf16.mxu0 0
    %1030 = vmatpush1.bf16.xpose.msra.mxu0 0
    %1031 = vmatprep.subr.bf16.mxu0 0
    %1032 = vmatpush1.bf16.xpose.msra.mxu0 0
    %1033 = vmatprep.subr.bf16.mxu0 0
    %1034 = vmatpush1.bf16.xpose.msra.mxu0 0
    %1035 = vmatprep.subr.bf16.mxu0 0
    %1036 = vmatpush1.bf16.xpose.msra.mxu0 0
    %1037 = vmatprep.subr.bf16.mxu0 0
    %1038 = vmatpush1.bf16.xpose.msra.mxu0 0
    %1039 = vmatprep.mubr.bf16.mxu0 0
    %1040 = vmatmul.mubr.bf16.gmra.mrb[0].mxu0 %v1002
    %v1041 = vpop.f32.mrb[0].mxu0
    %v1042 = vadd.f32 0.0, %v1041
    %v1043 = vpop.f32.mrb[0].mxu0
    %v1044 = vpop.f32.mrb[0].mxu0
    %v1045 = vpop.f32.mrb[0].mxu0
    %1046 = vdwg.mxu0
    %v1047 = vsel %vm288, %v992, -inf
    %1048 = vmax.xlane.f32.xlu0 %v1047
    %v1049 = vpop.xlane.xlu0 %1048
    %v1050 = vsel %vm288, %v1042, -inf
    %1051 = vmax.xlane.f32.xlu0 %v1050
    %v1052 = vpop.xlane.xlu0 %1051
    %v1053 = vsub.f32 %v992, %v1049
    %v1054 = vsub.f32 %v1042, %v1052
    %v1055 = vmul.f32 %v1053, 1.442695
    %v1056 = vpow.pop %v1055
    %v1057 = vmul.f32 %v1054, 1.442695
    %v1058 = vpow.pop %v1057
    %v1059 = vsel %vm288, %v1056, 0.0
    %1060 = vadd.xlane.f32.xlu0 %v1059
    %v1061 = vpop.xlane.xlu0 %1060
    %v1062 = vsel %vm288, %v1058, 0.0
    %1063 = vadd.xlane.f32.xlu0 %v1062
    %v1064 = vpop.xlane.xlu0 %1063
    %v1065 = vrcp.pop %v1061
    %v1066 = vmul.f32 %v1056, %v1065
    %v1067 = vrcp.pop %v1064
    %v1068 = vmul.f32 %v1058, %v1067
    %v1069 = vpack.c.bf16 %v1066, %v1066
    %v1070 = vpack.c.bf16 %v1068, %v1068
    %1071 = vrot.lane.b32.xlu0 %v283, 40
    %v1072 = vpop.permute.xlu0 %1071
    %v1074 = vsel %vm288, %v1069, 0
    %v1077 = vsel %vm413, %v1072, 0
    %1079 = vmatprep.subr.bf16.mxu0 0
    %1080 = vmatpush1.bf16.msra.mxu0 %v1077
    %1081 = vmatprep.subr.bf16.mxu0 0
    %1082 = vmatpush1.bf16.msra.mxu0 0
    %1083 = vmatprep.subr.bf16.mxu0 0
    %1084 = vmatpush1.bf16.msra.mxu0 0
    %1085 = vmatprep.subr.bf16.mxu0 0
    %1086 = vmatpush1.bf16.msra.mxu0 0
    %1087 = vmatprep.subr.bf16.mxu0 0
    %1088 = vmatpush1.bf16.msra.mxu0 0
    %1089 = vmatprep.subr.bf16.mxu0 0
    %1090 = vmatpush1.bf16.msra.mxu0 0
    %1091 = vmatprep.subr.bf16.mxu0 0
    %1092 = vmatpush1.bf16.msra.mxu0 0
    %1093 = vmatprep.subr.bf16.mxu0 0
    %1094 = vmatpush1.bf16.msra.mxu0 0
    %1095 = vmatprep.subr.bf16.mxu0 0
    %1096 = vmatpush1.bf16.msra.mxu0 0
    %1097 = vmatprep.subr.bf16.mxu0 0
    %1098 = vmatpush1.bf16.msra.mxu0 0
    %1099 = vmatprep.subr.bf16.mxu0 0
    %1100 = vmatpush1.bf16.msra.mxu0 0
    %1101 = vmatprep.subr.bf16.mxu0 0
    %1102 = vmatpush1.bf16.msra.mxu0 0
    %1103 = vmatprep.subr.bf16.mxu0 0
    %1104 = vmatpush1.bf16.msra.mxu0 0
    %1105 = vmatprep.subr.bf16.mxu0 0
    %1106 = vmatpush1.bf16.msra.mxu0 0
    %1107 = vmatprep.subr.bf16.mxu0 0
    %1108 = vmatpush1.bf16.msra.mxu0 0
    %1109 = vmatprep.subr.bf16.mxu0 0
    %1110 = vmatpush1.bf16.msra.mxu0 0
    %1111 = vmatprep.mubr.bf16.mxu0 0
    %1112 = vmatmul.mubr.bf16.gmra.mrb[0].mxu0 %v1074
    %v1113 = vpop.f32.mrb[0].mxu0
    %v1114 = vadd.f32 0.0, %v1113
    %v1115 = vpop.f32.mrb[0].mxu0
    %v1116 = vpop.f32.mrb[0].mxu0
    %v1117 = vpop.f32.mrb[0].mxu0
    %1118 = vdwg.mxu0
    %1119 = vrot.lane.b32.xlu0 %v284, 40
    %v1120 = vpop.permute.xlu0 %1119
    %v1122 = vsel %vm288, %v1070, 0
    %v1125 = vsel %vm413, %v1120, 0
    %1127 = vmatprep.subr.bf16.mxu0 0
    %1128 = vmatpush1.bf16.msra.mxu0 %v1125
    %1129 = vmatprep.subr.bf16.mxu0 0
    %1130 = vmatpush1.bf16.msra.mxu0 0
    %1131 = vmatprep.subr.bf16.mxu0 0
    %1132 = vmatpush1.bf16.msra.mxu0 0
    %1133 = vmatprep.subr.bf16.mxu0 0
    %1134 = vmatpush1.bf16.msra.mxu0 0
    %1135 = vmatprep.subr.bf16.mxu0 0
    %1136 = vmatpush1.bf16.msra.mxu0 0
    %1137 = vmatprep.subr.bf16.mxu0 0
    %1138 = vmatpush1.bf16.msra.mxu0 0
    %1139 = vmatprep.subr.bf16.mxu0 0
    %1140 = vmatpush1.bf16.msra.mxu0 0
    %1141 = vmatprep.subr.bf16.mxu0 0
    %1142 = vmatpush1.bf16.msra.mxu0 0
    %1143 = vmatprep.subr.bf16.mxu0 0
    %1144 = vmatpush1.bf16.msra.mxu0 0
    %1145 = vmatprep.subr.bf16.mxu0 0
    %1146 = vmatpush1.bf16.msra.mxu0 0
    %1147 = vmatprep.subr.bf16.mxu0 0
    %1148 = vmatpush1.bf16.msra.mxu0 0
    %1149 = vmatprep.subr.bf16.mxu0 0
    %1150 = vmatpush1.bf16.msra.mxu0 0
    %1151 = vmatprep.subr.bf16.mxu0 0
    %1152 = vmatpush1.bf16.msra.mxu0 0
    %1153 = vmatprep.subr.bf16.mxu0 0
    %1154 = vmatpush1.bf16.msra.mxu0 0
    %1155 = vmatprep.subr.bf16.mxu0 0
    %1156 = vmatpush1.bf16.msra.mxu0 0
    %1157 = vmatprep.subr.bf16.mxu0 0
    %1158 = vmatpush1.bf16.msra.mxu0 0
    %1159 = vmatprep.mubr.bf16.mxu0 0
    %1160 = vmatmul.mubr.bf16.gmra.mrb[0].mxu0 %v1122
    %v1161 = vpop.f32.mrb[0].mxu0
    %v1162 = vadd.f32 0.0, %v1161
    %v1163 = vpop.f32.mrb[0].mxu0
    %v1164 = vpop.f32.mrb[0].mxu0
    %v1165 = vpop.f32.mrb[0].mxu0
    %1166 = vdwg.mxu0
    %1169 = vrot.lane.b32.xlu0 %v674, 8
    %v1170 = vpop.permute.xlu0 %1169
    %1171 = vrot.lane.b32.xlu0 %v722, 8
    %v1172 = vpop.permute.xlu0 %1171
    %1177 = vrot.lane.b32.xlu0 %v894, 16
    %v1178 = vpop.permute.xlu0 %1177
    %1179 = vrot.lane.b32.xlu0 %v942, 16
    %v1180 = vpop.permute.xlu0 %1179
    %1185 = vrot.lane.b32.xlu0 %v1114, 24
    %v1186 = vpop.permute.xlu0 %1185
    %1187 = vrot.lane.b32.xlu0 %v1162, 24
    %v1188 = vpop.permute.xlu0 %1187
    %v1191 = vsel %vm288, %v452, %v1170
    %v1192 = vsel %vm288, %v500, %v1172
    %v1193 = vsel %vm136, %v1191, %v1178
    %v1194 = vsel %vm136, %v1192, %v1180
    %vm1195 = vcmask 195584
    %v1196 = vsel %vm1195, %v1193, %v1186
    %v1197 = vsel %vm1195, %v1194, %v1188
    %v1198 = vpack.c.bf16 %v1197, %v1196
    %v1200 = vlaneseq
    %v1201 = vshrl.u32 %v1200, 7
    %v1202 = vsub.s32 0, %v1201
    %v1203 = vrot.slane %v196, %v1202
    %v1209 = vunpack.c.l.b16 %v192
    %v1210 = vunpack.c.l.b16 %v193
    %v1211 = vunpack.c.l.b16 %v194
    %v1212 = vunpack.c.l.b16 %v195
    %v1213 = vpack.c.b16 %v1210, %v1209
    %v1214 = vpack.c.b16 %v1212, %v1211
    %v1218 = vsel %vm234, %v1198, 0
    %1220 = vmatprep.subr.bf16.mxu0 0
    %1221 = vmatpush1.bf16.msra.mxu0 %v1213
    %1222 = vmatprep.subr.bf16.mxu0 0
    %1223 = vmatpush1.bf16.msra.mxu0 %v1214
    %1224 = vmatprep.subr.bf16.mxu0 0
    %1225 = vmatpush1.bf16.msra.mxu0 0
    %1226 = vmatprep.subr.bf16.mxu0 0
    %1227 = vmatpush1.bf16.msra.mxu0 0
    %1228 = vmatprep.subr.bf16.mxu0 0
    %1229 = vmatpush1.bf16.msra.mxu0 0
    %1230 = vmatprep.subr.bf16.mxu0 0
    %1231 = vmatpush1.bf16.msra.mxu0 0
    %1232 = vmatprep.subr.bf16.mxu0 0
    %1233 = vmatpush1.bf16.msra.mxu0 0
    %1234 = vmatprep.subr.bf16.mxu0 0
    %1235 = vmatpush1.bf16.msra.mxu0 0
    %1236 = vmatprep.subr.bf16.mxu0 0
    %1237 = vmatpush1.bf16.msra.mxu0 0
    %1238 = vmatprep.subr.bf16.mxu0 0
    %1239 = vmatpush1.bf16.msra.mxu0 0
    %1240 = vmatprep.subr.bf16.mxu0 0
    %1241 = vmatpush1.bf16.msra.mxu0 0
    %1242 = vmatprep.subr.bf16.mxu0 0
    %1243 = vmatpush1.bf16.msra.mxu0 0
    %1244 = vmatprep.subr.bf16.mxu0 0
    %1245 = vmatpush1.bf16.msra.mxu0 0
    %1246 = vmatprep.subr.bf16.mxu0 0
    %1247 = vmatpush1.bf16.msra.mxu0 0
    %1248 = vmatprep.subr.bf16.mxu0 0
    %1249 = vmatpush1.bf16.msra.mxu0 0
    %1250 = vmatprep.subr.bf16.mxu0 0
    %1251 = vmatpush1.bf16.msra.mxu0 0
    %1252 = vmatprep.mubr.bf16.mxu0 0
    %1253 = vmatmul.mubr.bf16.gmra.mrb[0].mxu0 %v1218
    %v1254 = vpop.f32.mrb[0].mxu0
    %v1255 = vadd.f32 %v1203, %v1254
    %v1256 = vpop.f32.mrb[0].mxu0
    %v1257 = vpop.f32.mrb[0].mxu0
    %v1258 = vadd.f32 %v1203, %v1257
    %v1259 = vpop.f32.mrb[0].mxu0
    %1260 = vdwg.mxu0
    %v1261 = vadd.f32 %v185, %v1255
    %v1262 = vadd.f32 %v186, %v1258
    %v1263 = vsel %vm234, %v1261, 0.0
    %1264 = vadd.xlane.f32.xlu0 %v1263
    %v1265 = vpop.xlane.xlu0 %1264
    %v1266 = vsel %vm234, %v1262, 0.0
    %1267 = vadd.xlane.f32.xlu0 %v1266
    %v1268 = vpop.xlane.xlu0 %1267
    %v1269 = vrcp.pop 32.0
    %v1270 = vmul.f32 %v1265, %v1269
    %v1271 = vmul.f32 %v1268, %v1269
    %v1272 = vsub.f32 %v1261, %v1270
    %v1273 = vsub.f32 %v1262, %v1271
    %v1274 = vmul.f32 %v1272, %v1272
    %v1275 = vmul.f32 %v1273, %v1273
    %v1276 = vsel %vm234, %v1274, 0.0
    %1277 = vadd.xlane.f32.xlu0 %v1276
    %v1278 = vpop.xlane.xlu0 %1277
    %v1279 = vsel %vm234, %v1275, 0.0
    %1280 = vadd.xlane.f32.xlu0 %v1279
    %v1281 = vpop.xlane.xlu0 %1280
    %v1282 = vmul.f32 %v1278, %v1269
    %v1283 = vmul.f32 %v1281, %v1269
    %v1284 = vadd.f32 %v1282, 1e-05
    %v1285 = vadd.f32 %v1283, 1e-05
    %v1286 = vrsqrt.pop %v1284
    %v1287 = vrsqrt.pop %v1285
    %v1288 = vmul.f32 %v1272, %v1286
    %v1289 = vmul.f32 %v1273, %v1287
    %v1291 = vlaneseq
    %v1292 = vshrl.u32 %v1291, 7
    %v1293 = vsub.s32 0, %v1292
    %v1294 = vrot.slane %v211, %v1293
    %v1296 = vmul.f32 %v1288, %v1294
    %v1297 = vmul.f32 %v1289, %v1294
    %v1299 = vlaneseq
    %v1300 = vshrl.u32 %v1299, 7
    %v1301 = vsub.s32 0, %v1300
    %v1302 = vrot.slane %v212, %v1301
    %v1304 = vadd.f32 %v1296, %v1302
    %v1305 = vadd.f32 %v1297, %v1302
    %v1306 = vpack.c.bf16 %v1305, %v1304
    %v1308 = vlaneseq
    %v1309 = vshrl.u32 %v1308, 7
    %v1310 = vsub.s32 0, %v1309
    %v1311 = vrot.slane %v201, %v1310
    %v1317 = vunpack.c.l.b16 %v197
    %v1318 = vunpack.c.l.b16 %v198
    %v1319 = vunpack.c.l.b16 %v199
    %v1320 = vunpack.c.l.b16 %v200
    %v1321 = vpack.c.b16 %v1318, %v1317
    %v1322 = vpack.c.b16 %v1320, %v1319
    %v1326 = vsel %vm234, %v1306, 0
    %1328 = vmatprep.subr.bf16.mxu0 0
    %1329 = vmatpush1.bf16.msra.mxu0 %v1321
    %1330 = vmatprep.subr.bf16.mxu0 0
    %1331 = vmatpush1.bf16.msra.mxu0 %v1322
    %1332 = vmatprep.subr.bf16.mxu0 0
    %1333 = vmatpush1.bf16.msra.mxu0 0
    %1334 = vmatprep.subr.bf16.mxu0 0
    %1335 = vmatpush1.bf16.msra.mxu0 0
    %1336 = vmatprep.subr.bf16.mxu0 0
    %1337 = vmatpush1.bf16.msra.mxu0 0
    %1338 = vmatprep.subr.bf16.mxu0 0
    %1339 = vmatpush1.bf16.msra.mxu0 0
    %1340 = vmatprep.subr.bf16.mxu0 0
    %1341 = vmatpush1.bf16.msra.mxu0 0
    %1342 = vmatprep.subr.bf16.mxu0 0
    %1343 = vmatpush1.bf16.msra.mxu0 0
    %1344 = vmatprep.subr.bf16.mxu0 0
    %1345 = vmatpush1.bf16.msra.mxu0 0
    %1346 = vmatprep.subr.bf16.mxu0 0
    %1347 = vmatpush1.bf16.msra.mxu0 0
    %1348 = vmatprep.subr.bf16.mxu0 0
    %1349 = vmatpush1.bf16.msra.mxu0 0
    %1350 = vmatprep.subr.bf16.mxu0 0
    %1351 = vmatpush1.bf16.msra.mxu0 0
    %1352 = vmatprep.subr.bf16.mxu0 0
    %1353 = vmatpush1.bf16.msra.mxu0 0
    %1354 = vmatprep.subr.bf16.mxu0 0
    %1355 = vmatpush1.bf16.msra.mxu0 0
    %1356 = vmatprep.subr.bf16.mxu0 0
    %1357 = vmatpush1.bf16.msra.mxu0 0
    %1358 = vmatprep.subr.bf16.mxu0 0
    %1359 = vmatpush1.bf16.msra.mxu0 0
    %1360 = vmatprep.mubr.bf16.mxu0 0
    %1361 = vmatmul.mubr.bf16.gmra.mrb[0].mxu0 %v1326
    %v1362 = vpop.f32.mrb[0].mxu0
    %v1363 = vadd.f32 %v1311, %v1362
    %v1364 = vpop.f32.mrb[0].mxu0
    %v1365 = vpop.f32.mrb[0].mxu0
    %v1366 = vadd.f32 %v1311, %v1365
    %v1367 = vpop.f32.mrb[0].mxu0
    %1368 = vdwg.mxu0
    %v1369 = vmax.f32 %v1363, 0.0
    %v1370 = vmax.f32 %v1366, 0.0
    %v1371 = vpack.c.bf16 %v1370, %v1369
    %v1373 = vlaneseq
    %v1374 = vshrl.u32 %v1373, 7
    %v1375 = vsub.s32 0, %v1374
    %v1376 = vrot.slane %v210, %v1375
    %v1386 = vunpack.c.l.b16 %v202
    %v1387 = vunpack.c.l.b16 %v203
    %v1388 = vunpack.c.l.b16 %v204
    %v1389 = vunpack.c.l.b16 %v205
    %v1390 = vunpack.c.l.b16 %v206
    %v1391 = vunpack.c.l.b16 %v207
    %v1392 = vunpack.c.l.b16 %v208
    %v1393 = vunpack.c.l.b16 %v209
    %v1394 = vpack.c.b16 %v1387, %v1386
    %v1395 = vpack.c.b16 %v1389, %v1388
    %v1396 = vpack.c.b16 %v1391, %v1390
    %v1397 = vpack.c.b16 %v1393, %v1392
    %vm1402 = vcmask 523264
    %v1404 = vsel %vm1402, %v1371, 0
    %1406 = vmatprep.subr.bf16.mxu0 0
    %1407 = vmatpush1.bf16.msra.mxu0 %v1394
    %1408 = vmatprep.subr.bf16.mxu0 0
    %1409 = vmatpush1.bf16.msra.mxu0 %v1395
    %1410 = vmatprep.subr.bf16.mxu0 0
    %1411 = vmatpush1.bf16.msra.mxu0 %v1396
    %1412 = vmatprep.subr.bf16.mxu0 0
    %1413 = vmatpush1.bf16.msra.mxu0 %v1397
    %1414 = vmatprep.subr.bf16.mxu0 0
    %1415 = vmatpush1.bf16.msra.mxu0 0
    %1416 = vmatprep.subr.bf16.mxu0 0
    %1417 = vmatpush1.bf16.msra.mxu0 0
    %1418 = vmatprep.subr.bf16.mxu0 0
    %1419 = vmatpush1.bf16.msra.mxu0 0
    %1420 = vmatprep.subr.bf16.mxu0 0
    %1421 = vmatpush1.bf16.msra.mxu0 0
    %1422 = vmatprep.subr.bf16.mxu0 0
    %1423 = vmatpush1.bf16.msra.mxu0 0
    %1424 = vmatprep.subr.bf16.mxu0 0
    %1425 = vmatpush1.bf16.msra.mxu0 0
    %1426 = vmatprep.subr.bf16.mxu0 0
    %1427 = vmatpush1.bf16.msra.mxu0 0
    %1428 = vmatprep.subr.bf16.mxu0 0
    %1429 = vmatpush1.bf16.msra.mxu0 0
    %1430 = vmatprep.subr.bf16.mxu0 0
    %1431 = vmatpush1.bf16.msra.mxu0 0
    %1432 = vmatprep.subr.bf16.mxu0 0
    %1433 = vmatpush1.bf16.msra.mxu0 0
    %1434 = vmatprep.subr.bf16.mxu0 0
    %1435 = vmatpush1.bf16.msra.mxu0 0
    %1436 = vmatprep.subr.bf16.mxu0 0
    %1437 = vmatpush1.bf16.msra.mxu0 0
    %1438 = vmatprep.mubr.bf16.mxu0 0
    %1439 = vmatmul.mubr.bf16.gmra.mrb[0].mxu0 %v1404
    %v1440 = vpop.f32.mrb[0].mxu0
    %v1441 = vadd.f32 %v1376, %v1440
    %v1442 = vpop.f32.mrb[0].mxu0
    %v1443 = vpop.f32.mrb[0].mxu0
    %v1444 = vadd.f32 %v1376, %v1443
    %v1445 = vpop.f32.mrb[0].mxu0
    %1446 = vdwg.mxu0
    %v1447 = vadd.f32 %v1304, %v1441
    %v1448 = vadd.f32 %v1305, %v1444
    %v1449 = vsel %vm234, %v1447, 0.0
    %1450 = vadd.xlane.f32.xlu0 %v1449
    %v1451 = vpop.xlane.xlu0 %1450
    %v1452 = vsel %vm234, %v1448, 0.0
    %1453 = vadd.xlane.f32.xlu0 %v1452
    %v1454 = vpop.xlane.xlu0 %1453
    %v1455 = vmul.f32 %v1451, %v1269
    %v1456 = vmul.f32 %v1454, %v1269
    %v1457 = vsub.f32 %v1447, %v1455
    %v1458 = vsub.f32 %v1448, %v1456
    %v1459 = vmul.f32 %v1457, %v1457
    %v1460 = vmul.f32 %v1458, %v1458
    %v1461 = vsel %vm234, %v1459, 0.0
    %1462 = vadd.xlane.f32.xlu0 %v1461
    %v1463 = vpop.xlane.xlu0 %1462
    %v1464 = vsel %vm234, %v1460, 0.0
    %1465 = vadd.xlane.f32.xlu0 %v1464
    %v1466 = vpop.xlane.xlu0 %1465
    %v1467 = vmul.f32 %v1463, %v1269
    %v1468 = vmul.f32 %v1466, %v1269
    %v1469 = vadd.f32 %v1467, 1e-05
    %v1470 = vadd.f32 %v1468, 1e-05
    %v1471 = vrsqrt.pop %v1469
    %v1472 = vrsqrt.pop %v1470
    %v1473 = vmul.f32 %v1457, %v1471
    %v1474 = vmul.f32 %v1458, %v1472
    %v1476 = vlaneseq
    %v1477 = vshrl.u32 %v1476, 7
    %v1478 = vsub.s32 0, %v1477
    %v1479 = vrot.slane %v213, %v1478
    %v1481 = vmul.f32 %v1473, %v1479
    %v1482 = vmul.f32 %v1474, %v1479
    %v1484 = vlaneseq
    %v1485 = vshrl.u32 %v1484, 7
    %v1486 = vsub.s32 0, %v1485
    %v1487 = vrot.slane %v214, %v1486
    %v1489 = vadd.f32 %v1481, %v1487
    %v1490 = vadd.f32 %v1482, %v1487
    %s1491 = scalar_lea.vmem %s3, 16
    %v1492 = vld [vmem:[%s1491] sm:$0xf]
    %v1493 = vld [vmem:[%s1491 + $0x4] sm:$0xf]
    %v1494 = vld [vmem:[%s1491 + $0x8] sm:$0xf]
    %v1495 = vld [vmem:[%s1491 + $0xc] sm:$0xf]
    %s1496 = scalar_lea.vmem %s4, 1
    %v1497 = vld [vmem:[%s1496] sm:$0x1]
    %s1498 = scalar_lea.vmem %s5, 16
    %v1499 = vld [vmem:[%s1498] sm:$0xf]
    %v1500 = vld [vmem:[%s1498 + $0x4] sm:$0xf]
    %v1501 = vld [vmem:[%s1498 + $0x8] sm:$0xf]
    %v1502 = vld [vmem:[%s1498 + $0xc] sm:$0xf]
    %s1503 = scalar_lea.vmem [#allocation8], 1
    %v1504 = vld [vmem:[%s1503] sm:$0x1]
    %s1505 = scalar_lea.vmem %s7, 16
    %v1506 = vld [vmem:[%s1505] sm:$0xf]
    %v1507 = vld [vmem:[%s1505 + $0x4] sm:$0xf]
    %v1508 = vld [vmem:[%s1505 + $0x8] sm:$0xf]
    %v1509 = vld [vmem:[%s1505 + $0xc] sm:$0xf]
    %s1510 = scalar_lea.vmem [#allocation10], 1
    %v1511 = vld [vmem:[%s1510] sm:$0x1]
    %s1512 = scalar_lea.vmem %s9, 32
    %v1513 = vld [vmem:[%s1512] sm:$0xf]
    %v1514 = vld [vmem:[%s1512 + $0x4] sm:$0xf]
    %v1515 = vld [vmem:[%s1512 + $0x8] sm:$0xf]
    %v1516 = vld [vmem:[%s1512 + $0xc] sm:$0xf]
    %v1517 = vld [vmem:[%s1512 + $0x10] sm:$0xf]
    %v1518 = vld [vmem:[%s1512 + $0x14] sm:$0xf]
    %v1519 = vld [vmem:[%s1512 + $0x18] sm:$0xf]
    %v1520 = vld [vmem:[%s1512 + $0x1c] sm:$0xf]
    %s1521 = scalar_lea.vmem %s10, 1
    %v1522 = vld [vmem:[%s1521] sm:$0x1]
    %s1523 = scalar_lea.vmem %s11, 1
    %v1524 = vld [vmem:[%s1523] sm:$0x1]
    %s1525 = scalar_lea.vmem %s12, 1
    %v1526 = vld [vmem:[%s1525] sm:$0x1]
    %s1527 = scalar_lea.vmem %s13, 1
    %v1528 = vld [vmem:[%s1527] sm:$0x1]
    %s1529 = scalar_lea.vmem %s14, 1
    %v1530 = vld [vmem:[%s1529] sm:$0x1]
    %v1531 = vpack.c.bf16 %v1490, %v1489
    %v1533 = vlaneseq
    %v1534 = vshrl.u32 %v1533, 7
    %v1535 = vsub.s32 0, %v1534
    %v1536 = vrot.slane %v1497, %v1535
    %v1542 = vunpack.c.l.b16 %v1492
    %v1543 = vunpack.c.l.b16 %v1493
    %v1544 = vunpack.c.l.b16 %v1494
    %v1545 = vunpack.c.l.b16 %v1495
    %v1546 = vpack.c.b16 %v1543, %v1542
    %v1547 = vpack.c.b16 %v1545, %v1544
    %v1551 = vsel %vm234, %v1531, 0
    %1553 = vmatprep.subr.bf16.mxu0 0
    %1554 = vmatpush1.bf16.msra.mxu0 %v1546
    %1555 = vmatprep.subr.bf16.mxu0 0
    %1556 = vmatpush1.bf16.msra.mxu0 %v1547
    %1557 = vmatprep.subr.bf16.mxu0 0
    %1558 = vmatpush1.bf16.msra.mxu0 0
    %1559 = vmatprep.subr.bf16.mxu0 0
    %1560 = vmatpush1.bf16.msra.mxu0 0
    %1561 = vmatprep.subr.bf16.mxu0 0
    %1562 = vmatpush1.bf16.msra.mxu0 0
    %1563 = vmatprep.subr.bf16.mxu0 0
    %1564 = vmatpush1.bf16.msra.mxu0 0
    %1565 = vmatprep.subr.bf16.mxu0 0
    %1566 = vmatpush1.bf16.msra.mxu0 0
    %1567 = vmatprep.subr.bf16.mxu0 0
    %1568 = vmatpush1.bf16.msra.mxu0 0
    %1569 = vmatprep.subr.bf16.mxu0 0
    %1570 = vmatpush1.bf16.msra.mxu0 0
    %1571 = vmatprep.subr.bf16.mxu0 0
    %1572 = vmatpush1.bf16.msra.mxu0 0
    %1573 = vmatprep.subr.bf16.mxu0 0
    %1574 = vmatpush1.bf16.msra.mxu0 0
    %1575 = vmatprep.subr.bf16.mxu0 0
    %1576 = vmatpush1.bf16.msra.mxu0 0
    %1577 = vmatprep.subr.bf16.mxu0 0
    %1578 = vmatpush1.bf16.msra.mxu0 0
    %1579 = vmatprep.subr.bf16.mxu0 0
    %1580 = vmatpush1.bf16.msra.mxu0 0
    %1581 = vmatprep.subr.bf16.mxu0 0
    %1582 = vmatpush1.bf16.msra.mxu0 0
    %1583 = vmatprep.subr.bf16.mxu0 0
    %1584 = vmatpush1.bf16.msra.mxu0 0
    %1585 = vmatprep.mubr.bf16.mxu0 0
    %1586 = vmatmul.mubr.bf16.gmra.mrb[0].mxu0 %v1551
    %v1587 = vpop.f32.mrb[0].mxu0
    %v1588 = vadd.f32 %v1536, %v1587
    %v1589 = vpop.f32.mrb[0].mxu0
    %v1590 = vpop.f32.mrb[0].mxu0
    %v1591 = vadd.f32 %v1536, %v1590
    %v1592 = vpop.f32.mrb[0].mxu0
    %1593 = vdwg.mxu0
    %v1594 = vmul.f32 %v1588, 0.35355338
    %v1595 = vmul.f32 %v1591, 0.35355338
    %v1596 = vpack.c.bf16 %v1594, %v1594
    %v1597 = vpack.c.bf16 %v1595, %v1595
    %v1598 = vpack.c.bf16 %v1588, %v1588
    %v1599 = vpack.c.bf16 %v1591, %v1591
    %1601 = vrot.lane.b32.xlu0 %v1598, 96
    %v1602 = vpop.permute.xlu0 %1601
    %v1604 = vsel %vm288, %v1596, 0
    %v1607 = vsel %vm288, %v1602, 0
    %1609 = vmatprep.subr.bf16.mxu0 0
    %1610 = vmatpush1.bf16.xpose.msra.mxu0 %v1607
    %1611 = vmatprep.subr.bf16.mxu0 0
    %1612 = vmatpush1.bf16.xpose.msra.mxu0 0
    %1613 = vmatprep.subr.bf16.mxu0 0
    %1614 = vmatpush1.bf16.xpose.msra.mxu0 0
    %1615 = vmatprep.subr.bf16.mxu0 0
    %1616 = vmatpush1.bf16.xpose.msra.mxu0 0
    %1617 = vmatprep.subr.bf16.mxu0 0
    %1618 = vmatpush1.bf16.xpose.msra.mxu0 0
    %1619 = vmatprep.subr.bf16.mxu0 0
    %1620 = vmatpush1.bf16.xpose.msra.mxu0 0
    %1621 = vmatprep.subr.bf16.mxu0 0
    %1622 = vmatpush1.bf16.xpose.msra.mxu0 0
    %1623 = vmatprep.subr.bf16.mxu0 0
    %1624 = vmatpush1.bf16.xpose.msra.mxu0 0
    %1625 = vmatprep.subr.bf16.mxu0 0
    %1626 = vmatpush1.bf16.xpose.msra.mxu0 0
    %1627 = vmatprep.subr.bf16.mxu0 0
    %1628 = vmatpush1.bf16.xpose.msra.mxu0 0
    %1629 = vmatprep.subr.bf16.mxu0 0
    %1630 = vmatpush1.bf16.xpose.msra.mxu0 0
    %1631 = vmatprep.subr.bf16.mxu0 0
    %1632 = vmatpush1.bf16.xpose.msra.mxu0 0
    %1633 = vmatprep.subr.bf16.mxu0 0
    %1634 = vmatpush1.bf16.xpose.msra.mxu0 0
    %1635 = vmatprep.subr.bf16.mxu0 0
    %1636 = vmatpush1.bf16.xpose.msra.mxu0 0
    %1637 = vmatprep.subr.bf16.mxu0 0
    %1638 = vmatpush1.bf16.xpose.msra.mxu0 0
    %1639 = vmatprep.subr.bf16.mxu0 0
    %1640 = vmatpush1.bf16.xpose.msra.mxu0 0
    %1641 = vmatprep.mubr.bf16.mxu0 0
    %1642 = vmatmul.mubr.bf16.gmra.mrb[0].mxu0 %v1604
    %v1643 = vpop.f32.mrb[0].mxu0
    %v1644 = vadd.f32 0.0, %v1643
    %v1645 = vpop.f32.mrb[0].mxu0
    %v1646 = vpop.f32.mrb[0].mxu0
    %v1647 = vpop.f32.mrb[0].mxu0
    %1648 = vdwg.mxu0
    %1650 = vrot.lane.b32.xlu0 %v1599, 96
    %v1651 = vpop.permute.xlu0 %1650
    %v1653 = vsel %vm288, %v1597, 0
    %v1656 = vsel %vm288, %v1651, 0
    %1658 = vmatprep.subr.bf16.mxu0 0
    %1659 = vmatpush1.bf16.xpose.msra.mxu0 %v1656
    %1660 = vmatprep.subr.bf16.mxu0 0
    %1661 = vmatpush1.bf16.xpose.msra.mxu0 0
    %1662 = vmatprep.subr.bf16.mxu0 0
    %1663 = vmatpush1.bf16.xpose.msra.mxu0 0
    %1664 = vmatprep.subr.bf16.mxu0 0
    %1665 = vmatpush1.bf16.xpose.msra.mxu0 0
    %1666 = vmatprep.subr.bf16.mxu0 0
    %1667 = vmatpush1.bf16.xpose.msra.mxu0 0
    %1668 = vmatprep.subr.bf16.mxu0 0
    %1669 = vmatpush1.bf16.xpose.msra.mxu0 0
    %1670 = vmatprep.subr.bf16.mxu0 0
    %1671 = vmatpush1.bf16.xpose.msra.mxu0 0
    %1672 = vmatprep.subr.bf16.mxu0 0
    %1673 = vmatpush1.bf16.xpose.msra.mxu0 0
    %1674 = vmatprep.subr.bf16.mxu0 0
    %1675 = vmatpush1.bf16.xpose.msra.mxu0 0
    %1676 = vmatprep.subr.bf16.mxu0 0
    %1677 = vmatpush1.bf16.xpose.msra.mxu0 0
    %1678 = vmatprep.subr.bf16.mxu0 0
    %1679 = vmatpush1.bf16.xpose.msra.mxu0 0
    %1680 = vmatprep.subr.bf16.mxu0 0
    %1681 = vmatpush1.bf16.xpose.msra.mxu0 0
    %1682 = vmatprep.subr.bf16.mxu0 0
    %1683 = vmatpush1.bf16.xpose.msra.mxu0 0
    %1684 = vmatprep.subr.bf16.mxu0 0
    %1685 = vmatpush1.bf16.xpose.msra.mxu0 0
    %1686 = vmatprep.subr.bf16.mxu0 0
    %1687 = vmatpush1.bf16.xpose.msra.mxu0 0
    %1688 = vmatprep.subr.bf16.mxu0 0
    %1689 = vmatpush1.bf16.xpose.msra.mxu0 0
    %1690 = vmatprep.mubr.bf16.mxu0 0
    %1691 = vmatmul.mubr.bf16.gmra.mrb[0].mxu0 %v1653
    %v1692 = vpop.f32.mrb[0].mxu0
    %v1693 = vadd.f32 0.0, %v1692
    %v1694 = vpop.f32.mrb[0].mxu0
    %v1695 = vpop.f32.mrb[0].mxu0
    %v1696 = vpop.f32.mrb[0].mxu0
    %1697 = vdwg.mxu0
    %v1698 = vsel %vm288, %v1644, -inf
    %1699 = vmax.xlane.f32.xlu0 %v1698
    %v1700 = vpop.xlane.xlu0 %1699
    %v1701 = vsel %vm288, %v1693, -inf
    %1702 = vmax.xlane.f32.xlu0 %v1701
    %v1703 = vpop.xlane.xlu0 %1702
    %v1704 = vsub.f32 %v1644, %v1700
    %v1705 = vsub.f32 %v1693, %v1703
    %v1706 = vmul.f32 %v1704, 1.442695
    %v1707 = vpow.pop %v1706
    %v1708 = vmul.f32 %v1705, 1.442695
    %v1709 = vpow.pop %v1708
    %v1710 = vsel %vm288, %v1707, 0.0
    %1711 = vadd.xlane.f32.xlu0 %v1710
    %v1712 = vpop.xlane.xlu0 %1711
    %v1713 = vsel %vm288, %v1709, 0.0
    %1714 = vadd.xlane.f32.xlu0 %v1713
    %v1715 = vpop.xlane.xlu0 %1714
    %v1716 = vrcp.pop %v1712
    %v1717 = vmul.f32 %v1707, %v1716
    %v1718 = vrcp.pop %v1715
    %v1719 = vmul.f32 %v1709, %v1718
    %v1720 = vpack.c.bf16 %v1717, %v1717
    %v1721 = vpack.c.bf16 %v1719, %v1719
    %1722 = vrot.lane.b32.xlu0 %v1598, 64
    %v1723 = vpop.permute.xlu0 %1722
    %v1725 = vsel %vm288, %v1720, 0
    %v1728 = vsel %vm413, %v1723, 0
    %1730 = vmatprep.subr.bf16.mxu0 0
    %1731 = vmatpush1.bf16.msra.mxu0 %v1728
    %1732 = vmatprep.subr.bf16.mxu0 0
    %1733 = vmatpush1.bf16.msra.mxu0 0
    %1734 = vmatprep.subr.bf16.mxu0 0
    %1735 = vmatpush1.bf16.msra.mxu0 0
    %1736 = vmatprep.subr.bf16.mxu0 0
    %1737 = vmatpush1.bf16.msra.mxu0 0
    %1738 = vmatprep.subr.bf16.mxu0 0
    %1739 = vmatpush1.bf16.msra.mxu0 0
    %1740 = vmatprep.subr.bf16.mxu0 0
    %1741 = vmatpush1.bf16.msra.mxu0 0
    %1742 = vmatprep.subr.bf16.mxu0 0
    %1743 = vmatpush1.bf16.msra.mxu0 0
    %1744 = vmatprep.subr.bf16.mxu0 0
    %1745 = vmatpush1.bf16.msra.mxu0 0
    %1746 = vmatprep.subr.bf16.mxu0 0
    %1747 = vmatpush1.bf16.msra.mxu0 0
    %1748 = vmatprep.subr.bf16.mxu0 0
    %1749 = vmatpush1.bf16.msra.mxu0 0
    %1750 = vmatprep.subr.bf16.mxu0 0
    %1751 = vmatpush1.bf16.msra.mxu0 0
    %1752 = vmatprep.subr.bf16.mxu0 0
    %1753 = vmatpush1.bf16.msra.mxu0 0
    %1754 = vmatprep.subr.bf16.mxu0 0
    %1755 = vmatpush1.bf16.msra.mxu0 0
    %1756 = vmatprep.subr.bf16.mxu0 0
    %1757 = vmatpush1.bf16.msra.mxu0 0
    %1758 = vmatprep.subr.bf16.mxu0 0
    %1759 = vmatpush1.bf16.msra.mxu0 0
    %1760 = vmatprep.subr.bf16.mxu0 0
    %1761 = vmatpush1.bf16.msra.mxu0 0
    %1762 = vmatprep.mubr.bf16.mxu0 0
    %1763 = vmatmul.mubr.bf16.gmra.mrb[0].mxu0 %v1725
    %v1764 = vpop.f32.mrb[0].mxu0
    %v1765 = vadd.f32 0.0, %v1764
    %v1766 = vpop.f32.mrb[0].mxu0
    %v1767 = vpop.f32.mrb[0].mxu0
    %v1768 = vpop.f32.mrb[0].mxu0
    %1769 = vdwg.mxu0
    %1770 = vrot.lane.b32.xlu0 %v1599, 64
    %v1771 = vpop.permute.xlu0 %1770
    %v1773 = vsel %vm288, %v1721, 0
    %v1776 = vsel %vm413, %v1771, 0
    %1778 = vmatprep.subr.bf16.mxu0 0
    %1779 = vmatpush1.bf16.msra.mxu0 %v1776
    %1780 = vmatprep.subr.bf16.mxu0 0
    %1781 = vmatpush1.bf16.msra.mxu0 0
    %1782 = vmatprep.subr.bf16.mxu0 0
    %1783 = vmatpush1.bf16.msra.mxu0 0
    %1784 = vmatprep.subr.bf16.mxu0 0
    %1785 = vmatpush1.bf16.msra.mxu0 0
    %1786 = vmatprep.subr.bf16.mxu0 0
    %1787 = vmatpush1.bf16.msra.mxu0 0
    %1788 = vmatprep.subr.bf16.mxu0 0
    %1789 = vmatpush1.bf16.msra.mxu0 0
    %1790 = vmatprep.subr.bf16.mxu0 0
    %1791 = vmatpush1.bf16.msra.mxu0 0
    %1792 = vmatprep.subr.bf16.mxu0 0
    %1793 = vmatpush1.bf16.msra.mxu0 0
    %1794 = vmatprep.subr.bf16.mxu0 0
    %1795 = vmatpush1.bf16.msra.mxu0 0
    %1796 = vmatprep.subr.bf16.mxu0 0
    %1797 = vmatpush1.bf16.msra.mxu0 0
    %1798 = vmatprep.subr.bf16.mxu0 0
    %1799 = vmatpush1.bf16.msra.mxu0 0
    %1800 = vmatprep.subr.bf16.mxu0 0
    %1801 = vmatpush1.bf16.msra.mxu0 0
    %1802 = vmatprep.subr.bf16.mxu0 0
    %1803 = vmatpush1.bf16.msra.mxu0 0
    %1804 = vmatprep.subr.bf16.mxu0 0
    %1805 = vmatpush1.bf16.msra.mxu0 0
    %1806 = vmatprep.subr.bf16.mxu0 0
    %1807 = vmatpush1.bf16.msra.mxu0 0
    %1808 = vmatprep.subr.bf16.mxu0 0
    %1809 = vmatpush1.bf16.msra.mxu0 0
    %1810 = vmatprep.mubr.bf16.mxu0 0
    %1811 = vmatmul.mubr.bf16.gmra.mrb[0].mxu0 %v1773
    %v1812 = vpop.f32.mrb[0].mxu0
    %v1813 = vadd.f32 0.0, %v1812
    %v1814 = vpop.f32.mrb[0].mxu0
    %v1815 = vpop.f32.mrb[0].mxu0
    %v1816 = vpop.f32.mrb[0].mxu0
    %1817 = vdwg.mxu0
    %1819 = vrot.lane.b32.xlu0 %v1596, 120
    %v1820 = vpop.permute.xlu0 %1819
    %1821 = vrot.lane.b32.xlu0 %v1598, 88
    %v1822 = vpop.permute.xlu0 %1821
    %v1824 = vsel %vm288, %v1820, 0
    %v1827 = vsel %vm288, %v1822, 0
    %1829 = vmatprep.subr.bf16.mxu0 0
    %1830 = vmatpush1.bf16.xpose.msra.mxu0 %v1827
    %1831 = vmatprep.subr.bf16.mxu0 0
    %1832 = vmatpush1.bf16.xpose.msra.mxu0 0
    %1833 = vmatprep.subr.bf16.mxu0 0
    %1834 = vmatpush1.bf16.xpose.msra.mxu0 0
    %1835 = vmatprep.subr.bf16.mxu0 0
    %1836 = vmatpush1.bf16.xpose.msra.mxu0 0
    %1837 = vmatprep.subr.bf16.mxu0 0
    %1838 = vmatpush1.bf16.xpose.msra.mxu0 0
    %1839 = vmatprep.subr.bf16.mxu0 0
    %1840 = vmatpush1.bf16.xpose.msra.mxu0 0
    %1841 = vmatprep.subr.bf16.mxu0 0
    %1842 = vmatpush1.bf16.xpose.msra.mxu0 0
    %1843 = vmatprep.subr.bf16.mxu0 0
    %1844 = vmatpush1.bf16.xpose.msra.mxu0 0
    %1845 = vmatprep.subr.bf16.mxu0 0
    %1846 = vmatpush1.bf16.xpose.msra.mxu0 0
    %1847 = vmatprep.subr.bf16.mxu0 0
    %1848 = vmatpush1.bf16.xpose.msra.mxu0 0
    %1849 = vmatprep.subr.bf16.mxu0 0
    %1850 = vmatpush1.bf16.xpose.msra.mxu0 0
    %1851 = vmatprep.subr.bf16.mxu0 0
    %1852 = vmatpush1.bf16.xpose.msra.mxu0 0
    %1853 = vmatprep.subr.bf16.mxu0 0
    %1854 = vmatpush1.bf16.xpose.msra.mxu0 0
    %1855 = vmatprep.subr.bf16.mxu0 0
    %1856 = vmatpush1.bf16.xpose.msra.mxu0 0
    %1857 = vmatprep.subr.bf16.mxu0 0
    %1858 = vmatpush1.bf16.xpose.msra.mxu0 0
    %1859 = vmatprep.subr.bf16.mxu0 0
    %1860 = vmatpush1.bf16.xpose.msra.mxu0 0
    %1861 = vmatprep.mubr.bf16.mxu0 0
    %1862 = vmatmul.mubr.bf16.gmra.mrb[0].mxu0 %v1824
    %v1863 = vpop.f32.mrb[0].mxu0
    %v1864 = vadd.f32 0.0, %v1863
    %v1865 = vpop.f32.mrb[0].mxu0
    %v1866 = vpop.f32.mrb[0].mxu0
    %v1867 = vpop.f32.mrb[0].mxu0
    %1868 = vdwg.mxu0
    %1870 = vrot.lane.b32.xlu0 %v1597, 120
    %v1871 = vpop.permute.xlu0 %1870
    %1872 = vrot.lane.b32.xlu0 %v1599, 88
    %v1873 = vpop.permute.xlu0 %1872
    %v1875 = vsel %vm288, %v1871, 0
    %v1878 = vsel %vm288, %v1873, 0
    %1880 = vmatprep.subr.bf16.mxu0 0
    %1881 = vmatpush1.bf16.xpose.msra.mxu0 %v1878
    %1882 = vmatprep.subr.bf16.mxu0 0
    %1883 = vmatpush1.bf16.xpose.msra.mxu0 0
    %1884 = vmatprep.subr.bf16.mxu0 0
    %1885 = vmatpush1.bf16.xpose.msra.mxu0 0
    %1886 = vmatprep.subr.bf16.mxu0 0
    %1887 = vmatpush1.bf16.xpose.msra.mxu0 0
    %1888 = vmatprep.subr.bf16.mxu0 0
    %1889 = vmatpush1.bf16.xpose.msra.mxu0 0
    %1890 = vmatprep.subr.bf16.mxu0 0
    %1891 = vmatpush1.bf16.xpose.msra.mxu0 0
    %1892 = vmatprep.subr.bf16.mxu0 0
    %1893 = vmatpush1.bf16.xpose.msra.mxu0 0
    %1894 = vmatprep.subr.bf16.mxu0 0
    %1895 = vmatpush1.bf16.xpose.msra.mxu0 0
    %1896 = vmatprep.subr.bf16.mxu0 0
    %1897 = vmatpush1.bf16.xpose.msra.mxu0 0
    %1898 = vmatprep.subr.bf16.mxu0 0
    %1899 = vmatpush1.bf16.xpose.msra.mxu0 0
    %1900 = vmatprep.subr.bf16.mxu0 0
    %1901 = vmatpush1.bf16.xpose.msra.mxu0 0
    %1902 = vmatprep.subr.bf16.mxu0 0
    %1903 = vmatpush1.bf16.xpose.msra.mxu0 0
    %1904 = vmatprep.subr.bf16.mxu0 0
    %1905 = vmatpush1.bf16.xpose.msra.mxu0 0
    %1906 = vmatprep.subr.bf16.mxu0 0
    %1907 = vmatpush1.bf16.xpose.msra.mxu0 0
    %1908 = vmatprep.subr.bf16.mxu0 0
    %1909 = vmatpush1.bf16.xpose.msra.mxu0 0
    %1910 = vmatprep.subr.bf16.mxu0 0
    %1911 = vmatpush1.bf16.xpose.msra.mxu0 0
    %1912 = vmatprep.mubr.bf16.mxu0 0
    %1913 = vmatmul.mubr.bf16.gmra.mrb[0].mxu0 %v1875
    %v1914 = vpop.f32.mrb[0].mxu0
    %v1915 = vadd.f32 0.0, %v1914
    %v1916 = vpop.f32.mrb[0].mxu0
    %v1917 = vpop.f32.mrb[0].mxu0
    %v1918 = vpop.f32.mrb[0].mxu0
    %1919 = vdwg.mxu0
    %v1920 = vsel %vm288, %v1864, -inf
    %1921 = vmax.xlane.f32.xlu0 %v1920
    %v1922 = vpop.xlane.xlu0 %1921
    %v1923 = vsel %vm288, %v1915, -inf
    %1924 = vmax.xlane.f32.xlu0 %v1923
    %v1925 = vpop.xlane.xlu0 %1924
    %v1926 = vsub.f32 %v1864, %v1922
    %v1927 = vsub.f32 %v1915, %v1925
    %v1928 = vmul.f32 %v1926, 1.442695
    %v1929 = vpow.pop %v1928
    %v1930 = vmul.f32 %v1927, 1.442695
    %v1931 = vpow.pop %v1930
    %v1932 = vsel %vm288, %v1929, 0.0
    %1933 = vadd.xlane.f32.xlu0 %v1932
    %v1934 = vpop.xlane.xlu0 %1933
    %v1935 = vsel %vm288, %v1931, 0.0
    %1936 = vadd.xlane.f32.xlu0 %v1935
    %v1937 = vpop.xlane.xlu0 %1936
    %v1938 = vrcp.pop %v1934
    %v1939 = vmul.f32 %v1929, %v1938
    %v1940 = vrcp.pop %v1937
    %v1941 = vmul.f32 %v1931, %v1940
    %v1942 = vpack.c.bf16 %v1939, %v1939
    %v1943 = vpack.c.bf16 %v1941, %v1941
    %1944 = vrot.lane.b32.xlu0 %v1598, 56
    %v1945 = vpop.permute.xlu0 %1944
    %v1947 = vsel %vm288, %v1942, 0
    %v1950 = vsel %vm413, %v1945, 0
    %1952 = vmatprep.subr.bf16.mxu0 0
    %1953 = vmatpush1.bf16.msra.mxu0 %v1950
    %1954 = vmatprep.subr.bf16.mxu0 0
    %1955 = vmatpush1.bf16.msra.mxu0 0
    %1956 = vmatprep.subr.bf16.mxu0 0
    %1957 = vmatpush1.bf16.msra.mxu0 0
    %1958 = vmatprep.subr.bf16.mxu0 0
    %1959 = vmatpush1.bf16.msra.mxu0 0
    %1960 = vmatprep.subr.bf16.mxu0 0
    %1961 = vmatpush1.bf16.msra.mxu0 0
    %1962 = vmatprep.subr.bf16.mxu0 0
    %1963 = vmatpush1.bf16.msra.mxu0 0
    %1964 = vmatprep.subr.bf16.mxu0 0
    %1965 = vmatpush1.bf16.msra.mxu0 0
    %1966 = vmatprep.subr.bf16.mxu0 0
    %1967 = vmatpush1.bf16.msra.mxu0 0
    %1968 = vmatprep.subr.bf16.mxu0 0
    %1969 = vmatpush1.bf16.msra.mxu0 0
    %1970 = vmatprep.subr.bf16.mxu0 0
    %1971 = vmatpush1.bf16.msra.mxu0 0
    %1972 = vmatprep.subr.bf16.mxu0 0
    %1973 = vmatpush1.bf16.msra.mxu0 0
    %1974 = vmatprep.subr.bf16.mxu0 0
    %1975 = vmatpush1.bf16.msra.mxu0 0
    %1976 = vmatprep.subr.bf16.mxu0 0
    %1977 = vmatpush1.bf16.msra.mxu0 0
    %1978 = vmatprep.subr.bf16.mxu0 0
    %1979 = vmatpush1.bf16.msra.mxu0 0
    %1980 = vmatprep.subr.bf16.mxu0 0
    %1981 = vmatpush1.bf16.msra.mxu0 0
    %1982 = vmatprep.subr.bf16.mxu0 0
    %1983 = vmatpush1.bf16.msra.mxu0 0
    %1984 = vmatprep.mubr.bf16.mxu0 0
    %1985 = vmatmul.mubr.bf16.gmra.mrb[0].mxu0 %v1947
    %v1986 = vpop.f32.mrb[0].mxu0
    %v1987 = vadd.f32 0.0, %v1986
    %v1988 = vpop.f32.mrb[0].mxu0
    %v1989 = vpop.f32.mrb[0].mxu0
    %v1990 = vpop.f32.mrb[0].mxu0
    %1991 = vdwg.mxu0
    %1992 = vrot.lane.b32.xlu0 %v1599, 56
    %v1993 = vpop.permute.xlu0 %1992
    %v1995 = vsel %vm288, %v1943, 0
    %v1998 = vsel %vm413, %v1993, 0
    %2000 = vmatprep.subr.bf16.mxu0 0
    %2001 = vmatpush1.bf16.msra.mxu0 %v1998
    %2002 = vmatprep.subr.bf16.mxu0 0
    %2003 = vmatpush1.bf16.msra.mxu0 0
    %2004 = vmatprep.subr.bf16.mxu0 0
    %2005 = vmatpush1.bf16.msra.mxu0 0
    %2006 = vmatprep.subr.bf16.mxu0 0
    %2007 = vmatpush1.bf16.msra.mxu0 0
    %2008 = vmatprep.subr.bf16.mxu0 0
    %2009 = vmatpush1.bf16.msra.mxu0 0
    %2010 = vmatprep.subr.bf16.mxu0 0
    %2011 = vmatpush1.bf16.msra.mxu0 0
    %2012 = vmatprep.subr.bf16.mxu0 0
    %2013 = vmatpush1.bf16.msra.mxu0 0
    %2014 = vmatprep.subr.bf16.mxu0 0
    %2015 = vmatpush1.bf16.msra.mxu0 0
    %2016 = vmatprep.subr.bf16.mxu0 0
    %2017 = vmatpush1.bf16.msra.mxu0 0
    %2018 = vmatprep.subr.bf16.mxu0 0
    %2019 = vmatpush1.bf16.msra.mxu0 0
    %2020 = vmatprep.subr.bf16.mxu0 0
    %2021 = vmatpush1.bf16.msra.mxu0 0
    %2022 = vmatprep.subr.bf16.mxu0 0
    %2023 = vmatpush1.bf16.msra.mxu0 0
    %2024 = vmatprep.subr.bf16.mxu0 0
    %2025 = vmatpush1.bf16.msra.mxu0 0
    %2026 = vmatprep.subr.bf16.mxu0 0
    %2027 = vmatpush1.bf16.msra.mxu0 0
    %2028 = vmatprep.subr.bf16.mxu0 0
    %2029 = vmatpush1.bf16.msra.mxu0 0
    %2030 = vmatprep.subr.bf16.mxu0 0
    %2031 = vmatpush1.bf16.msra.mxu0 0
    %2032 = vmatprep.mubr.bf16.mxu0 0
    %2033 = vmatmul.mubr.bf16.gmra.mrb[0].mxu0 %v1995
    %v2034 = vpop.f32.mrb[0].mxu0
    %v2035 = vadd.f32 0.0, %v2034
    %v2036 = vpop.f32.mrb[0].mxu0
    %v2037 = vpop.f32.mrb[0].mxu0
    %v2038 = vpop.f32.mrb[0].mxu0
    %2039 = vdwg.mxu0
    %2040 = vrot.lane.b32.xlu0 %v1596, 112
    %v2041 = vpop.permute.xlu0 %2040
    %2042 = vrot.lane.b32.xlu0 %v1598, 80
    %v2043 = vpop.permute.xlu0 %2042
    %v2045 = vsel %vm288, %v2041, 0
    %v2048 = vsel %vm288, %v2043, 0
    %2050 = vmatprep.subr.bf16.mxu0 0
    %2051 = vmatpush1.bf16.xpose.msra.mxu0 %v2048
    %2052 = vmatprep.subr.bf16.mxu0 0
    %2053 = vmatpush1.bf16.xpose.msra.mxu0 0
    %2054 = vmatprep.subr.bf16.mxu0 0
    %2055 = vmatpush1.bf16.xpose.msra.mxu0 0
    %2056 = vmatprep.subr.bf16.mxu0 0
    %2057 = vmatpush1.bf16.xpose.msra.mxu0 0
    %2058 = vmatprep.subr.bf16.mxu0 0
    %2059 = vmatpush1.bf16.xpose.msra.mxu0 0
    %2060 = vmatprep.subr.bf16.mxu0 0
    %2061 = vmatpush1.bf16.xpose.msra.mxu0 0
    %2062 = vmatprep.subr.bf16.mxu0 0
    %2063 = vmatpush1.bf16.xpose.msra.mxu0 0
    %2064 = vmatprep.subr.bf16.mxu0 0
    %2065 = vmatpush1.bf16.xpose.msra.mxu0 0
    %2066 = vmatprep.subr.bf16.mxu0 0
    %2067 = vmatpush1.bf16.xpose.msra.mxu0 0
    %2068 = vmatprep.subr.bf16.mxu0 0
    %2069 = vmatpush1.bf16.xpose.msra.mxu0 0
    %2070 = vmatprep.subr.bf16.mxu0 0
    %2071 = vmatpush1.bf16.xpose.msra.mxu0 0
    %2072 = vmatprep.subr.bf16.mxu0 0
    %2073 = vmatpush1.bf16.xpose.msra.mxu0 0
    %2074 = vmatprep.subr.bf16.mxu0 0
    %2075 = vmatpush1.bf16.xpose.msra.mxu0 0
    %2076 = vmatprep.subr.bf16.mxu0 0
    %2077 = vmatpush1.bf16.xpose.msra.mxu0 0
    %2078 = vmatprep.subr.bf16.mxu0 0
    %2079 = vmatpush1.bf16.xpose.msra.mxu0 0
    %2080 = vmatprep.subr.bf16.mxu0 0
    %2081 = vmatpush1.bf16.xpose.msra.mxu0 0
    %2082 = vmatprep.mubr.bf16.mxu0 0
    %2083 = vmatmul.mubr.bf16.gmra.mrb[0].mxu0 %v2045
    %v2084 = vpop.f32.mrb[0].mxu0
    %v2085 = vadd.f32 0.0, %v2084
    %v2086 = vpop.f32.mrb[0].mxu0
    %v2087 = vpop.f32.mrb[0].mxu0
    %v2088 = vpop.f32.mrb[0].mxu0
    %2089 = vdwg.mxu0
    %2090 = vrot.lane.b32.xlu0 %v1597, 112
    %v2091 = vpop.permute.xlu0 %2090
    %2092 = vrot.lane.b32.xlu0 %v1599, 80
    %v2093 = vpop.permute.xlu0 %2092
    %v2095 = vsel %vm288, %v2091, 0
    %v2098 = vsel %vm288, %v2093, 0
    %2100 = vmatprep.subr.bf16.mxu0 0
    %2101 = vmatpush1.bf16.xpose.msra.mxu0 %v2098
    %2102 = vmatprep.subr.bf16.mxu0 0
    %2103 = vmatpush1.bf16.xpose.msra.mxu0 0
    %2104 = vmatprep.subr.bf16.mxu0 0
    %2105 = vmatpush1.bf16.xpose.msra.mxu0 0
    %2106 = vmatprep.subr.bf16.mxu0 0
    %2107 = vmatpush1.bf16.xpose.msra.mxu0 0
    %2108 = vmatprep.subr.bf16.mxu0 0
    %2109 = vmatpush1.bf16.xpose.msra.mxu0 0
    %2110 = vmatprep.subr.bf16.mxu0 0
    %2111 = vmatpush1.bf16.xpose.msra.mxu0 0
    %2112 = vmatprep.subr.bf16.mxu0 0
    %2113 = vmatpush1.bf16.xpose.msra.mxu0 0
    %2114 = vmatprep.subr.bf16.mxu0 0
    %2115 = vmatpush1.bf16.xpose.msra.mxu0 0
    %2116 = vmatprep.subr.bf16.mxu0 0
    %2117 = vmatpush1.bf16.xpose.msra.mxu0 0
    %2118 = vmatprep.subr.bf16.mxu0 0
    %2119 = vmatpush1.bf16.xpose.msra.mxu0 0
    %2120 = vmatprep.subr.bf16.mxu0 0
    %2121 = vmatpush1.bf16.xpose.msra.mxu0 0
    %2122 = vmatprep.subr.bf16.mxu0 0
    %2123 = vmatpush1.bf16.xpose.msra.mxu0 0
    %2124 = vmatprep.subr.bf16.mxu0 0
    %2125 = vmatpush1.bf16.xpose.msra.mxu0 0
    %2126 = vmatprep.subr.bf16.mxu0 0
    %2127 = vmatpush1.bf16.xpose.msra.mxu0 0
    %2128 = vmatprep.subr.bf16.mxu0 0
    %2129 = vmatpush1.bf16.xpose.msra.mxu0 0
    %2130 = vmatprep.subr.bf16.mxu0 0
    %2131 = vmatpush1.bf16.xpose.msra.mxu0 0
    %2132 = vmatprep.mubr.bf16.mxu0 0
    %2133 = vmatmul.mubr.bf16.gmra.mrb[0].mxu0 %v2095
    %v2134 = vpop.f32.mrb[0].mxu0
    %v2135 = vadd.f32 0.0, %v2134
    %v2136 = vpop.f32.mrb[0].mxu0
    %v2137 = vpop.f32.mrb[0].mxu0
    %v2138 = vpop.f32.mrb[0].mxu0
    %2139 = vdwg.mxu0
    %v2140 = vsel %vm288, %v2085, -inf
    %2141 = vmax.xlane.f32.xlu0 %v2140
    %v2142 = vpop.xlane.xlu0 %2141
    %v2143 = vsel %vm288, %v2135, -inf
    %2144 = vmax.xlane.f32.xlu0 %v2143
    %v2145 = vpop.xlane.xlu0 %2144
    %v2146 = vsub.f32 %v2085, %v2142
    %v2147 = vsub.f32 %v2135, %v2145
    %v2148 = vmul.f32 %v2146, 1.442695
    %v2149 = vpow.pop %v2148
    %v2150 = vmul.f32 %v2147, 1.442695
    %v2151 = vpow.pop %v2150
    %v2152 = vsel %vm288, %v2149, 0.0
    %2153 = vadd.xlane.f32.xlu0 %v2152
    %v2154 = vpop.xlane.xlu0 %2153
    %v2155 = vsel %vm288, %v2151, 0.0
    %2156 = vadd.xlane.f32.xlu0 %v2155
    %v2157 = vpop.xlane.xlu0 %2156
    %v2158 = vrcp.pop %v2154
    %v2159 = vmul.f32 %v2149, %v2158
    %v2160 = vrcp.pop %v2157
    %v2161 = vmul.f32 %v2151, %v2160
    %v2162 = vpack.c.bf16 %v2159, %v2159
    %v2163 = vpack.c.bf16 %v2161, %v2161
    %2164 = vrot.lane.b32.xlu0 %v1598, 48
    %v2165 = vpop.permute.xlu0 %2164
    %v2167 = vsel %vm288, %v2162, 0
    %v2170 = vsel %vm413, %v2165, 0
    %2172 = vmatprep.subr.bf16.mxu0 0
    %2173 = vmatpush1.bf16.msra.mxu0 %v2170
    %2174 = vmatprep.subr.bf16.mxu0 0
    %2175 = vmatpush1.bf16.msra.mxu0 0
    %2176 = vmatprep.subr.bf16.mxu0 0
    %2177 = vmatpush1.bf16.msra.mxu0 0
    %2178 = vmatprep.subr.bf16.mxu0 0
    %2179 = vmatpush1.bf16.msra.mxu0 0
    %2180 = vmatprep.subr.bf16.mxu0 0
    %2181 = vmatpush1.bf16.msra.mxu0 0
    %2182 = vmatprep.subr.bf16.mxu0 0
    %2183 = vmatpush1.bf16.msra.mxu0 0
    %2184 = vmatprep.subr.bf16.mxu0 0
    %2185 = vmatpush1.bf16.msra.mxu0 0
    %2186 = vmatprep.subr.bf16.mxu0 0
    %2187 = vmatpush1.bf16.msra.mxu0 0
    %2188 = vmatprep.subr.bf16.mxu0 0
    %2189 = vmatpush1.bf16.msra.mxu0 0
    %2190 = vmatprep.subr.bf16.mxu0 0
    %2191 = vmatpush1.bf16.msra.mxu0 0
    %2192 = vmatprep.subr.bf16.mxu0 0
    %2193 = vmatpush1.bf16.msra.mxu0 0
    %2194 = vmatprep.subr.bf16.mxu0 0
    %2195 = vmatpush1.bf16.msra.mxu0 0
    %2196 = vmatprep.subr.bf16.mxu0 0
    %2197 = vmatpush1.bf16.msra.mxu0 0
    %2198 = vmatprep.subr.bf16.mxu0 0
    %2199 = vmatpush1.bf16.msra.mxu0 0
    %2200 = vmatprep.subr.bf16.mxu0 0
    %2201 = vmatpush1.bf16.msra.mxu0 0
    %2202 = vmatprep.subr.bf16.mxu0 0
    %2203 = vmatpush1.bf16.msra.mxu0 0
    %2204 = vmatprep.mubr.bf16.mxu0 0
    %2205 = vmatmul.mubr.bf16.gmra.mrb[0].mxu0 %v2167
    %v2206 = vpop.f32.mrb[0].mxu0
    %v2207 = vadd.f32 0.0, %v2206
    %v2208 = vpop.f32.mrb[0].mxu0
    %v2209 = vpop.f32.mrb[0].mxu0
    %v2210 = vpop.f32.mrb[0].mxu0
    %2211 = vdwg.mxu0
    %2212 = vrot.lane.b32.xlu0 %v1599, 48
    %v2213 = vpop.permute.xlu0 %2212
    %v2215 = vsel %vm288, %v2163, 0
    %v2218 = vsel %vm413, %v2213, 0
    %2220 = vmatprep.subr.bf16.mxu0 0
    %2221 = vmatpush1.bf16.msra.mxu0 %v2218
    %2222 = vmatprep.subr.bf16.mxu0 0
    %2223 = vmatpush1.bf16.msra.mxu0 0
    %2224 = vmatprep.subr.bf16.mxu0 0
    %2225 = vmatpush1.bf16.msra.mxu0 0
    %2226 = vmatprep.subr.bf16.mxu0 0
    %2227 = vmatpush1.bf16.msra.mxu0 0
    %2228 = vmatprep.subr.bf16.mxu0 0
    %2229 = vmatpush1.bf16.msra.mxu0 0
    %2230 = vmatprep.subr.bf16.mxu0 0
    %2231 = vmatpush1.bf16.msra.mxu0 0
    %2232 = vmatprep.subr.bf16.mxu0 0
    %2233 = vmatpush1.bf16.msra.mxu0 0
    %2234 = vmatprep.subr.bf16.mxu0 0
    %2235 = vmatpush1.bf16.msra.mxu0 0
    %2236 = vmatprep.subr.bf16.mxu0 0
    %2237 = vmatpush1.bf16.msra.mxu0 0
    %2238 = vmatprep.subr.bf16.mxu0 0
    %2239 = vmatpush1.bf16.msra.mxu0 0
    %2240 = vmatprep.subr.bf16.mxu0 0
    %2241 = vmatpush1.bf16.msra.mxu0 0
    %2242 = vmatprep.subr.bf16.mxu0 0
    %2243 = vmatpush1.bf16.msra.mxu0 0
    %2244 = vmatprep.subr.bf16.mxu0 0
    %2245 = vmatpush1.bf16.msra.mxu0 0
    %2246 = vmatprep.subr.bf16.mxu0 0
    %2247 = vmatpush1.bf16.msra.mxu0 0
    %2248 = vmatprep.subr.bf16.mxu0 0
    %2249 = vmatpush1.bf16.msra.mxu0 0
    %2250 = vmatprep.subr.bf16.mxu0 0
    %2251 = vmatpush1.bf16.msra.mxu0 0
    %2252 = vmatprep.mubr.bf16.mxu0 0
    %2253 = vmatmul.mubr.bf16.gmra.mrb[0].mxu0 %v2215
    %v2254 = vpop.f32.mrb[0].mxu0
    %v2255 = vadd.f32 0.0, %v2254
    %v2256 = vpop.f32.mrb[0].mxu0
    %v2257 = vpop.f32.mrb[0].mxu0
    %v2258 = vpop.f32.mrb[0].mxu0
    %2259 = vdwg.mxu0
    %2260 = vrot.lane.b32.xlu0 %v1596, 104
    %v2261 = vpop.permute.xlu0 %2260
    %2262 = vrot.lane.b32.xlu0 %v1598, 72
    %v2263 = vpop.permute.xlu0 %2262
    %v2265 = vsel %vm288, %v2261, 0
    %v2268 = vsel %vm288, %v2263, 0
    %2270 = vmatprep.subr.bf16.mxu0 0
    %2271 = vmatpush1.bf16.xpose.msra.mxu0 %v2268
    %2272 = vmatprep.subr.bf16.mxu0 0
    %2273 = vmatpush1.bf16.xpose.msra.mxu0 0
    %2274 = vmatprep.subr.bf16.mxu0 0
    %2275 = vmatpush1.bf16.xpose.msra.mxu0 0
    %2276 = vmatprep.subr.bf16.mxu0 0
    %2277 = vmatpush1.bf16.xpose.msra.mxu0 0
    %2278 = vmatprep.subr.bf16.mxu0 0
    %2279 = vmatpush1.bf16.xpose.msra.mxu0 0
    %2280 = vmatprep.subr.bf16.mxu0 0
    %2281 = vmatpush1.bf16.xpose.msra.mxu0 0
    %2282 = vmatprep.subr.bf16.mxu0 0
    %2283 = vmatpush1.bf16.xpose.msra.mxu0 0
    %2284 = vmatprep.subr.bf16.mxu0 0
    %2285 = vmatpush1.bf16.xpose.msra.mxu0 0
    %2286 = vmatprep.subr.bf16.mxu0 0
    %2287 = vmatpush1.bf16.xpose.msra.mxu0 0
    %2288 = vmatprep.subr.bf16.mxu0 0
    %2289 = vmatpush1.bf16.xpose.msra.mxu0 0
    %2290 = vmatprep.subr.bf16.mxu0 0
    %2291 = vmatpush1.bf16.xpose.msra.mxu0 0
    %2292 = vmatprep.subr.bf16.mxu0 0
    %2293 = vmatpush1.bf16.xpose.msra.mxu0 0
    %2294 = vmatprep.subr.bf16.mxu0 0
    %2295 = vmatpush1.bf16.xpose.msra.mxu0 0
    %2296 = vmatprep.subr.bf16.mxu0 0
    %2297 = vmatpush1.bf16.xpose.msra.mxu0 0
    %2298 = vmatprep.subr.bf16.mxu0 0
    %2299 = vmatpush1.bf16.xpose.msra.mxu0 0
    %2300 = vmatprep.subr.bf16.mxu0 0
    %2301 = vmatpush1.bf16.xpose.msra.mxu0 0
    %2302 = vmatprep.mubr.bf16.mxu0 0
    %2303 = vmatmul.mubr.bf16.gmra.mrb[0].mxu0 %v2265
    %v2304 = vpop.f32.mrb[0].mxu0
    %v2305 = vadd.f32 0.0, %v2304
    %v2306 = vpop.f32.mrb[0].mxu0
    %v2307 = vpop.f32.mrb[0].mxu0
    %v2308 = vpop.f32.mrb[0].mxu0
    %2309 = vdwg.mxu0
    %2310 = vrot.lane.b32.xlu0 %v1597, 104
    %v2311 = vpop.permute.xlu0 %2310
    %2312 = vrot.lane.b32.xlu0 %v1599, 72
    %v2313 = vpop.permute.xlu0 %2312
    %v2315 = vsel %vm288, %v2311, 0
    %v2318 = vsel %vm288, %v2313, 0
    %2320 = vmatprep.subr.bf16.mxu0 0
    %2321 = vmatpush1.bf16.xpose.msra.mxu0 %v2318
    %2322 = vmatprep.subr.bf16.mxu0 0
    %2323 = vmatpush1.bf16.xpose.msra.mxu0 0
    %2324 = vmatprep.subr.bf16.mxu0 0
    %2325 = vmatpush1.bf16.xpose.msra.mxu0 0
    %2326 = vmatprep.subr.bf16.mxu0 0
    %2327 = vmatpush1.bf16.xpose.msra.mxu0 0
    %2328 = vmatprep.subr.bf16.mxu0 0
    %2329 = vmatpush1.bf16.xpose.msra.mxu0 0
    %2330 = vmatprep.subr.bf16.mxu0 0
    %2331 = vmatpush1.bf16.xpose.msra.mxu0 0
    %2332 = vmatprep.subr.bf16.mxu0 0
    %2333 = vmatpush1.bf16.xpose.msra.mxu0 0
    %2334 = vmatprep.subr.bf16.mxu0 0
    %2335 = vmatpush1.bf16.xpose.msra.mxu0 0
    %2336 = vmatprep.subr.bf16.mxu0 0
    %2337 = vmatpush1.bf16.xpose.msra.mxu0 0
    %2338 = vmatprep.subr.bf16.mxu0 0
    %2339 = vmatpush1.bf16.xpose.msra.mxu0 0
    %2340 = vmatprep.subr.bf16.mxu0 0
    %2341 = vmatpush1.bf16.xpose.msra.mxu0 0
    %2342 = vmatprep.subr.bf16.mxu0 0
    %2343 = vmatpush1.bf16.xpose.msra.mxu0 0
    %2344 = vmatprep.subr.bf16.mxu0 0
    %2345 = vmatpush1.bf16.xpose.msra.mxu0 0
    %2346 = vmatprep.subr.bf16.mxu0 0
    %2347 = vmatpush1.bf16.xpose.msra.mxu0 0
    %2348 = vmatprep.subr.bf16.mxu0 0
    %2349 = vmatpush1.bf16.xpose.msra.mxu0 0
    %2350 = vmatprep.subr.bf16.mxu0 0
    %2351 = vmatpush1.bf16.xpose.msra.mxu0 0
    %2352 = vmatprep.mubr.bf16.mxu0 0
    %2353 = vmatmul.mubr.bf16.gmra.mrb[0].mxu0 %v2315
    %v2354 = vpop.f32.mrb[0].mxu0
    %v2355 = vadd.f32 0.0, %v2354
    %v2356 = vpop.f32.mrb[0].mxu0
    %v2357 = vpop.f32.mrb[0].mxu0
    %v2358 = vpop.f32.mrb[0].mxu0
    %2359 = vdwg.mxu0
    %v2360 = vsel %vm288, %v2305, -inf
    %2361 = vmax.xlane.f32.xlu0 %v2360
    %v2362 = vpop.xlane.xlu0 %2361
    %v2363 = vsel %vm288, %v2355, -inf
    %2364 = vmax.xlane.f32.xlu0 %v2363
    %v2365 = vpop.xlane.xlu0 %2364
    %v2366 = vsub.f32 %v2305, %v2362
    %v2367 = vsub.f32 %v2355, %v2365
    %v2368 = vmul.f32 %v2366, 1.442695
    %v2369 = vpow.pop %v2368
    %v2370 = vmul.f32 %v2367, 1.442695
    %v2371 = vpow.pop %v2370
    %v2372 = vsel %vm288, %v2369, 0.0
    %2373 = vadd.xlane.f32.xlu0 %v2372
    %v2374 = vpop.xlane.xlu0 %2373
    %v2375 = vsel %vm288, %v2371, 0.0
    %2376 = vadd.xlane.f32.xlu0 %v2375
    %v2377 = vpop.xlane.xlu0 %2376
    %v2378 = vrcp.pop %v2374
    %v2379 = vmul.f32 %v2369, %v2378
    %v2380 = vrcp.pop %v2377
    %v2381 = vmul.f32 %v2371, %v2380
    %v2382 = vpack.c.bf16 %v2379, %v2379
    %v2383 = vpack.c.bf16 %v2381, %v2381
    %2384 = vrot.lane.b32.xlu0 %v1598, 40
    %v2385 = vpop.permute.xlu0 %2384
    %v2387 = vsel %vm288, %v2382, 0
    %v2390 = vsel %vm413, %v2385, 0
    %2392 = vmatprep.subr.bf16.mxu0 0
    %2393 = vmatpush1.bf16.msra.mxu0 %v2390
    %2394 = vmatprep.subr.bf16.mxu0 0
    %2395 = vmatpush1.bf16.msra.mxu0 0
    %2396 = vmatprep.subr.bf16.mxu0 0
    %2397 = vmatpush1.bf16.msra.mxu0 0
    %2398 = vmatprep.subr.bf16.mxu0 0
    %2399 = vmatpush1.bf16.msra.mxu0 0
    %2400 = vmatprep.subr.bf16.mxu0 0
    %2401 = vmatpush1.bf16.msra.mxu0 0
    %2402 = vmatprep.subr.bf16.mxu0 0
    %2403 = vmatpush1.bf16.msra.mxu0 0
    %2404 = vmatprep.subr.bf16.mxu0 0
    %2405 = vmatpush1.bf16.msra.mxu0 0
    %2406 = vmatprep.subr.bf16.mxu0 0
    %2407 = vmatpush1.bf16.msra.mxu0 0
    %2408 = vmatprep.subr.bf16.mxu0 0
    %2409 = vmatpush1.bf16.msra.mxu0 0
    %2410 = vmatprep.subr.bf16.mxu0 0
    %2411 = vmatpush1.bf16.msra.mxu0 0
    %2412 = vmatprep.subr.bf16.mxu0 0
    %2413 = vmatpush1.bf16.msra.mxu0 0
    %2414 = vmatprep.subr.bf16.mxu0 0
    %2415 = vmatpush1.bf16.msra.mxu0 0
    %2416 = vmatprep.subr.bf16.mxu0 0
    %2417 = vmatpush1.bf16.msra.mxu0 0
    %2418 = vmatprep.subr.bf16.mxu0 0
    %2419 = vmatpush1.bf16.msra.mxu0 0
    %2420 = vmatprep.subr.bf16.mxu0 0
    %2421 = vmatpush1.bf16.msra.mxu0 0
    %2422 = vmatprep.subr.bf16.mxu0 0
    %2423 = vmatpush1.bf16.msra.mxu0 0
    %2424 = vmatprep.mubr.bf16.mxu0 0
    %2425 = vmatmul.mubr.bf16.gmra.mrb[0].mxu0 %v2387
    %v2426 = vpop.f32.mrb[0].mxu0
    %v2427 = vadd.f32 0.0, %v2426
    %v2428 = vpop.f32.mrb[0].mxu0
    %v2429 = vpop.f32.mrb[0].mxu0
    %v2430 = vpop.f32.mrb[0].mxu0
    %2431 = vdwg.mxu0
    %2432 = vrot.lane.b32.xlu0 %v1599, 40
    %v2433 = vpop.permute.xlu0 %2432
    %v2435 = vsel %vm288, %v2383, 0
    %v2438 = vsel %vm413, %v2433, 0
    %2440 = vmatprep.subr.bf16.mxu0 0
    %2441 = vmatpush1.bf16.msra.mxu0 %v2438
    %2442 = vmatprep.subr.bf16.mxu0 0
    %2443 = vmatpush1.bf16.msra.mxu0 0
    %2444 = vmatprep.subr.bf16.mxu0 0
    %2445 = vmatpush1.bf16.msra.mxu0 0
    %2446 = vmatprep.subr.bf16.mxu0 0
    %2447 = vmatpush1.bf16.msra.mxu0 0
    %2448 = vmatprep.subr.bf16.mxu0 0
    %2449 = vmatpush1.bf16.msra.mxu0 0
    %2450 = vmatprep.subr.bf16.mxu0 0
    %2451 = vmatpush1.bf16.msra.mxu0 0
    %2452 = vmatprep.subr.bf16.mxu0 0
    %2453 = vmatpush1.bf16.msra.mxu0 0
    %2454 = vmatprep.subr.bf16.mxu0 0
    %2455 = vmatpush1.bf16.msra.mxu0 0
    %2456 = vmatprep.subr.bf16.mxu0 0
    %2457 = vmatpush1.bf16.msra.mxu0 0
    %2458 = vmatprep.subr.bf16.mxu0 0
    %2459 = vmatpush1.bf16.msra.mxu0 0
    %2460 = vmatprep.subr.bf16.mxu0 0
    %2461 = vmatpush1.bf16.msra.mxu0 0
    %2462 = vmatprep.subr.bf16.mxu0 0
    %2463 = vmatpush1.bf16.msra.mxu0 0
    %2464 = vmatprep.subr.bf16.mxu0 0
    %2465 = vmatpush1.bf16.msra.mxu0 0
    %2466 = vmatprep.subr.bf16.mxu0 0
    %2467 = vmatpush1.bf16.msra.mxu0 0
    %2468 = vmatprep.subr.bf16.mxu0 0
    %2469 = vmatpush1.bf16.msra.mxu0 0
    %2470 = vmatprep.subr.bf16.mxu0 0
    %2471 = vmatpush1.bf16.msra.mxu0 0
    %2472 = vmatprep.mubr.bf16.mxu0 0
    %2473 = vmatmul.mubr.bf16.gmra.mrb[0].mxu0 %v2435
    %v2474 = vpop.f32.mrb[0].mxu0
    %v2475 = vadd.f32 0.0, %v2474
    %v2476 = vpop.f32.mrb[0].mxu0
    %v2477 = vpop.f32.mrb[0].mxu0
    %v2478 = vpop.f32.mrb[0].mxu0
    %2479 = vdwg.mxu0
    %2482 = vrot.lane.b32.xlu0 %v1987, 8
    %v2483 = vpop.permute.xlu0 %2482
    %2484 = vrot.lane.b32.xlu0 %v2035, 8
    %v2485 = vpop.permute.xlu0 %2484
    %2490 = vrot.lane.b32.xlu0 %v2207, 16
    %v2491 = vpop.permute.xlu0 %2490
    %2492 = vrot.lane.b32.xlu0 %v2255, 16
    %v2493 = vpop.permute.xlu0 %2492
    %2498 = vrot.lane.b32.xlu0 %v2427, 24
    %v2499 = vpop.permute.xlu0 %2498
    %2500 = vrot.lane.b32.xlu0 %v2475, 24
    %v2501 = vpop.permute.xlu0 %2500
    %v2504 = vsel %vm288, %v1765, %v2483
    %v2505 = vsel %vm288, %v1813, %v2485
    %v2506 = vsel %vm136, %v2504, %v2491
    %v2507 = vsel %vm136, %v2505, %v2493
    %v2508 = vsel %vm1195, %v2506, %v2499
    %v2509 = vsel %vm1195, %v2507, %v2501
    %v2510 = vpack.c.bf16 %v2509, %v2508
    %v2512 = vlaneseq
    %v2513 = vshrl.u32 %v2512, 7
    %v2514 = vsub.s32 0, %v2513
    %v2515 = vrot.slane %v1504, %v2514
    %v2521 = vunpack.c.l.b16 %v1499
    %v2522 = vunpack.c.l.b16 %v1500
    %v2523 = vunpack.c.l.b16 %v1501
    %v2524 = vunpack.c.l.b16 %v1502
    %v2525 = vpack.c.b16 %v2522, %v2521
    %v2526 = vpack.c.b16 %v2524, %v2523
    %v2530 = vsel %vm234, %v2510, 0
    %2532 = vmatprep.subr.bf16.mxu0 0
    %2533 = vmatpush1.bf16.msra.mxu0 %v2525
    %2534 = vmatprep.subr.bf16.mxu0 0
    %2535 = vmatpush1.bf16.msra.mxu0 %v2526
    %2536 = vmatprep.subr.bf16.mxu0 0
    %2537 = vmatpush1.bf16.msra.mxu0 0
    %2538 = vmatprep.subr.bf16.mxu0 0
    %2539 = vmatpush1.bf16.msra.mxu0 0
    %2540 = vmatprep.subr.bf16.mxu0 0
    %2541 = vmatpush1.bf16.msra.mxu0 0
    %2542 = vmatprep.subr.bf16.mxu0 0
    %2543 = vmatpush1.bf16.msra.mxu0 0
    %2544 = vmatprep.subr.bf16.mxu0 0
    %2545 = vmatpush1.bf16.msra.mxu0 0
    %2546 = vmatprep.subr.bf16.mxu0 0
    %2547 = vmatpush1.bf16.msra.mxu0 0
    %2548 = vmatprep.subr.bf16.mxu0 0
    %2549 = vmatpush1.bf16.msra.mxu0 0
    %2550 = vmatprep.subr.bf16.mxu0 0
    %2551 = vmatpush1.bf16.msra.mxu0 0
    %2552 = vmatprep.subr.bf16.mxu0 0
    %2553 = vmatpush1.bf16.msra.mxu0 0
    %2554 = vmatprep.subr.bf16.mxu0 0
    %2555 = vmatpush1.bf16.msra.mxu0 0
    %2556 = vmatprep.subr.bf16.mxu0 0
    %2557 = vmatpush1.bf16.msra.mxu0 0
    %2558 = vmatprep.subr.bf16.mxu0 0
    %2559 = vmatpush1.bf16.msra.mxu0 0
    %2560 = vmatprep.subr.bf16.mxu0 0
    %2561 = vmatpush1.bf16.msra.mxu0 0
    %2562 = vmatprep.subr.bf16.mxu0 0
    %2563 = vmatpush1.bf16.msra.mxu0 0
    %2564 = vmatprep.mubr.bf16.mxu0 0
    %2565 = vmatmul.mubr.bf16.gmra.mrb[0].mxu0 %v2530
    %v2566 = vpop.f32.mrb[0].mxu0
    %v2567 = vadd.f32 %v2515, %v2566
    %v2568 = vpop.f32.mrb[0].mxu0
    %v2569 = vpop.f32.mrb[0].mxu0
    %v2570 = vadd.f32 %v2515, %v2569
    %v2571 = vpop.f32.mrb[0].mxu0
    %2572 = vdwg.mxu0
    %v2573 = vadd.f32 %v1489, %v2567
    %v2574 = vadd.f32 %v1490, %v2570
    %v2575 = vsel %vm234, %v2573, 0.0
    %2576 = vadd.xlane.f32.xlu0 %v2575
    %v2577 = vpop.xlane.xlu0 %2576
    %v2578 = vsel %vm234, %v2574, 0.0
    %2579 = vadd.xlane.f32.xlu0 %v2578
    %v2580 = vpop.xlane.xlu0 %2579
    %v2581 = vmul.f32 %v2577, %v1269
    %v2582 = vmul.f32 %v2580, %v1269
    %v2583 = vsub.f32 %v2573, %v2581
    %v2584 = vsub.f32 %v2574, %v2582
    %v2585 = vmul.f32 %v2583, %v2583
    %v2586 = vmul.f32 %v2584, %v2584
    %v2587 = vsel %vm234, %v2585, 0.0
    %2588 = vadd.xlane.f32.xlu0 %v2587
    %v2589 = vpop.xlane.xlu0 %2588
    %v2590 = vsel %vm234, %v2586, 0.0
    %2591 = vadd.xlane.f32.xlu0 %v2590
    %v2592 = vpop.xlane.xlu0 %2591
    %v2593 = vmul.f32 %v2589, %v1269
    %v2594 = vmul.f32 %v2592, %v1269
    %v2595 = vadd.f32 %v2593, 1e-05
    %v2596 = vadd.f32 %v2594, 1e-05
    %v2597 = vrsqrt.pop %v2595
    %v2598 = vrsqrt.pop %v2596
    %v2599 = vmul.f32 %v2583, %v2597
    %v2600 = vmul.f32 %v2584, %v2598
    %v2602 = vlaneseq
    %v2603 = vshrl.u32 %v2602, 7
    %v2604 = vsub.s32 0, %v2603
    %v2605 = vrot.slane %v1524, %v2604
    %v2607 = vmul.f32 %v2599, %v2605
    %v2608 = vmul.f32 %v2600, %v2605
    %v2610 = vlaneseq
    %v2611 = vshrl.u32 %v2610, 7
    %v2612 = vsub.s32 0, %v2611
    %v2613 = vrot.slane %v1526, %v2612
    %v2615 = vadd.f32 %v2607, %v2613
    %v2616 = vadd.f32 %v2608, %v2613
    %v2617 = vpack.c.bf16 %v2616, %v2615
    %v2619 = vlaneseq
    %v2620 = vshrl.u32 %v2619, 7
    %v2621 = vsub.s32 0, %v2620
    %v2622 = vrot.slane %v1511, %v2621
    %v2628 = vunpack.c.l.b16 %v1506
    %v2629 = vunpack.c.l.b16 %v1507
    %v2630 = vunpack.c.l.b16 %v1508
    %v2631 = vunpack.c.l.b16 %v1509
    %v2632 = vpack.c.b16 %v2629, %v2628
    %v2633 = vpack.c.b16 %v2631, %v2630
    %v2637 = vsel %vm234, %v2617, 0
    %2639 = vmatprep.subr.bf16.mxu0 0
    %2640 = vmatpush1.bf16.msra.mxu0 %v2632
    %2641 = vmatprep.subr.bf16.mxu0 0
    %2642 = vmatpush1.bf16.msra.mxu0 %v2633
    %2643 = vmatprep.subr.bf16.mxu0 0
    %2644 = vmatpush1.bf16.msra.mxu0 0
    %2645 = vmatprep.subr.bf16.mxu0 0
    %2646 = vmatpush1.bf16.msra.mxu0 0
    %2647 = vmatprep.subr.bf16.mxu0 0
    %2648 = vmatpush1.bf16.msra.mxu0 0
    %2649 = vmatprep.subr.bf16.mxu0 0
    %2650 = vmatpush1.bf16.msra.mxu0 0
    %2651 = vmatprep.subr.bf16.mxu0 0
    %2652 = vmatpush1.bf16.msra.mxu0 0
    %2653 = vmatprep.subr.bf16.mxu0 0
    %2654 = vmatpush1.bf16.msra.mxu0 0
    %2655 = vmatprep.subr.bf16.mxu0 0
    %2656 = vmatpush1.bf16.msra.mxu0 0
    %2657 = vmatprep.subr.bf16.mxu0 0
    %2658 = vmatpush1.bf16.msra.mxu0 0
    %2659 = vmatprep.subr.bf16.mxu0 0
    %2660 = vmatpush1.bf16.msra.mxu0 0
    %2661 = vmatprep.subr.bf16.mxu0 0
    %2662 = vmatpush1.bf16.msra.mxu0 0
    %2663 = vmatprep.subr.bf16.mxu0 0
    %2664 = vmatpush1.bf16.msra.mxu0 0
    %2665 = vmatprep.subr.bf16.mxu0 0
    %2666 = vmatpush1.bf16.msra.mxu0 0
    %2667 = vmatprep.subr.bf16.mxu0 0
    %2668 = vmatpush1.bf16.msra.mxu0 0
    %2669 = vmatprep.subr.bf16.mxu0 0
    %2670 = vmatpush1.bf16.msra.mxu0 0
    %2671 = vmatprep.mubr.bf16.mxu0 0
    %2672 = vmatmul.mubr.bf16.gmra.mrb[0].mxu0 %v2637
    %v2673 = vpop.f32.mrb[0].mxu0
    %v2674 = vadd.f32 %v2622, %v2673
    %v2675 = vpop.f32.mrb[0].mxu0
    %v2676 = vpop.f32.mrb[0].mxu0
    %v2677 = vadd.f32 %v2622, %v2676
    %v2678 = vpop.f32.mrb[0].mxu0
    %2679 = vdwg.mxu0
    %v2680 = vmax.f32 %v2674, 0.0
    %v2681 = vmax.f32 %v2677, 0.0
    %v2682 = vpack.c.bf16 %v2681, %v2680
    %v2684 = vlaneseq
    %v2685 = vshrl.u32 %v2684, 7
    %v2686 = vsub.s32 0, %v2685
    %v2687 = vrot.slane %v1522, %v2686
    %v2697 = vunpack.c.l.b16 %v1513
    %v2698 = vunpack.c.l.b16 %v1514
    %v2699 = vunpack.c.l.b16 %v1515
    %v2700 = vunpack.c.l.b16 %v1516
    %v2701 = vunpack.c.l.b16 %v1517
    %v2702 = vunpack.c.l.b16 %v1518
    %v2703 = vunpack.c.l.b16 %v1519
    %v2704 = vunpack.c.l.b16 %v1520
    %v2705 = vpack.c.b16 %v2698, %v2697
    %v2706 = vpack.c.b16 %v2700, %v2699
    %v2707 = vpack.c.b16 %v2702, %v2701
    %v2708 = vpack.c.b16 %v2704, %v2703
    %v2714 = vsel %vm1402, %v2682, 0
    %2716 = vmatprep.subr.bf16.mxu0 0
    %2717 = vmatpush1.bf16.msra.mxu0 %v2705
    %2718 = vmatprep.subr.bf16.mxu0 0
    %2719 = vmatpush1.bf16.msra.mxu0 %v2706
    %2720 = vmatprep.subr.bf16.mxu0 0
    %2721 = vmatpush1.bf16.msra.mxu0 %v2707
    %2722 = vmatprep.subr.bf16.mxu0 0
    %2723 = vmatpush1.bf16.msra.mxu0 %v2708
    %2724 = vmatprep.subr.bf16.mxu0 0
    %2725 = vmatpush1.bf16.msra.mxu0 0
    %2726 = vmatprep.subr.bf16.mxu0 0
    %2727 = vmatpush1.bf16.msra.mxu0 0
    %2728 = vmatprep.subr.bf16.mxu0 0
    %2729 = vmatpush1.bf16.msra.mxu0 0
    %2730 = vmatprep.subr.bf16.mxu0 0
    %2731 = vmatpush1.bf16.msra.mxu0 0
    %2732 = vmatprep.subr.bf16.mxu0 0
    %2733 = vmatpush1.bf16.msra.mxu0 0
    %2734 = vmatprep.subr.bf16.mxu0 0
    %2735 = vmatpush1.bf16.msra.mxu0 0
    %2736 = vmatprep.subr.bf16.mxu0 0
    %2737 = vmatpush1.bf16.msra.mxu0 0
    %2738 = vmatprep.subr.bf16.mxu0 0
    %2739 = vmatpush1.bf16.msra.mxu0 0
    %2740 = vmatprep.subr.bf16.mxu0 0
    %2741 = vmatpush1.bf16.msra.mxu0 0
    %2742 = vmatprep.subr.bf16.mxu0 0
    %2743 = vmatpush1.bf16.msra.mxu0 0
    %2744 = vmatprep.subr.bf16.mxu0 0
    %2745 = vmatpush1.bf16.msra.mxu0 0
    %2746 = vmatprep.subr.bf16.mxu0 0
    %2747 = vmatpush1.bf16.msra.mxu0 0
    %2748 = vmatprep.mubr.bf16.mxu0 0
    %2749 = vmatmul.mubr.bf16.gmra.mrb[0].mxu0 %v2714
    %v2750 = vpop.f32.mrb[0].mxu0
    %v2751 = vadd.f32 %v2687, %v2750
    %v2752 = vpop.f32.mrb[0].mxu0
    %v2753 = vpop.f32.mrb[0].mxu0
    %v2754 = vadd.f32 %v2687, %v2753
    %v2755 = vpop.f32.mrb[0].mxu0
    %2756 = vdwg.mxu0
    %v2757 = vadd.f32 %v2615, %v2751
    %v2758 = vadd.f32 %v2616, %v2754
    %v2759 = vsel %vm234, %v2757, 0.0
    %2760 = vadd.xlane.f32.xlu0 %v2759
    %v2761 = vpop.xlane.xlu0 %2760
    %v2762 = vsel %vm234, %v2758, 0.0
    %2763 = vadd.xlane.f32.xlu0 %v2762
    %v2764 = vpop.xlane.xlu0 %2763
    %v2765 = vmul.f32 %v2761, %v1269
    %v2766 = vmul.f32 %v2764, %v1269
    %v2767 = vsub.f32 %v2757, %v2765
    %v2768 = vsub.f32 %v2758, %v2766
    %v2769 = vmul.f32 %v2767, %v2767
    %v2770 = vmul.f32 %v2768, %v2768
    %v2771 = vsel %vm234, %v2769, 0.0
    %2772 = vadd.xlane.f32.xlu0 %v2771
    %v2773 = vpop.xlane.xlu0 %2772
    %v2774 = vsel %vm234, %v2770, 0.0
    %2775 = vadd.xlane.f32.xlu0 %v2774
    %v2776 = vpop.xlane.xlu0 %2775
    %v2777 = vmul.f32 %v2773, %v1269
    %v2778 = vmul.f32 %v2776, %v1269
    %v2779 = vadd.f32 %v2777, 1e-05
    %v2780 = vadd.f32 %v2778, 1e-05
    %v2781 = vrsqrt.pop %v2779
    %v2782 = vrsqrt.pop %v2780
    %v2783 = vmul.f32 %v2767, %v2781
    %v2784 = vmul.f32 %v2768, %v2782
    %v2786 = vlaneseq
    %v2787 = vshrl.u32 %v2786, 7
    %v2788 = vsub.s32 0, %v2787
    %v2789 = vrot.slane %v1528, %v2788
    %v2791 = vmul.f32 %v2783, %v2789
    %v2792 = vmul.f32 %v2784, %v2789
    %v2794 = vlaneseq
    %v2795 = vshrl.u32 %v2794, 7
    %v2796 = vsub.s32 0, %v2795
    %v2797 = vrot.slane %v1530, %v2796
    %v2799 = vadd.f32 %v2791, %v2797
    %v2800 = vadd.f32 %v2792, %v2797
    %2801 = vst.msk [vmem:[#allocation11] sm:$0xff] %vm234, %v2799
    %2802 = vst.msk [vmem:[#allocation11 + $0x8] sm:$0xff] %vm234, %v2800
    // Predicated region
    $region82: #{tpu_custom_call.1} parent=1 // pred_check
      _
    $region83: #{tpu_custom_call.1} parent=1 // pred_check_branch
      %2804 = sbr.rel (0) target = $region85
    $region84: #{tpu_custom_call.1} parent=1 // pred_region
      %s2806 = ssub.s32 256, 256
      %2807 = vsyncadd [#allocation4], %s2806
      %s2808 = sshll.u32 [#allocation11], 4
      %s2809 = int_to_ptr.vmem [resolvable:$true] %s2808
      %2814 = dma.vmem_to_hbm [thread:$0]  %s2809, 256, %s15, [#allocation4], 128, 128, 8
    $region85: #{tpu_custom_call.1} parent=1 // pred_fallthru
      _
    // Predicated region
    $region86: #{tpu_custom_call.1} parent=1 // pred_check
      _
    $region87: #{tpu_custom_call.1} parent=1 // pred_check_branch
      %2816 = sbr.rel (0) target = $region89
    $region88: #{tpu_custom_call.1} parent=1 // pred_region
      %2817 = dma.done [#allocation4], 256
    $region89: #{tpu_custom_call.1} parent=1 // pred_fallthru
      _
    %2818 = vsyncpa [#allocation3], 1
    %2819 = vsyncpa [#allocation6], 1
    %2820 = vsyncpa [#allocation9], 1
    %2821 = vsyncpa [#allocation4], 1

</llo_original>
